<compile_context>
chip_gen: v5e
topology: v5e:2x2
jax: 0.10.0
libtpu: 0.0.40
codegen_flags: <defaults>
</compile_context>

<pallas_src>
import jax
import jax.numpy as jnp
from jax.experimental import pallas as pl
from jax.experimental.pallas import tpu as pltpu


def mlp_kernel(x_ref, w1_ref, b1_ref, w2_ref, b2_ref, w3_ref, b3_ref, o_ref):
    # x: [tb, D_in] bf16, w*: bf16, b*: f32 (broadcast over rows).
    # Layer 1: Linear + ReLU (bf16 MXU, f32 accumulate, f32 elementwise).
    h1 = jnp.dot(x_ref[...], w1_ref[...], preferred_element_type=jnp.float32)
    h1 = jnp.maximum(h1 + b1_ref[...], 0.0).astype(jnp.bfloat16)
    # Layer 2: Linear + ReLU.
    h2 = jnp.dot(h1, w2_ref[...], preferred_element_type=jnp.float32)
    h2 = jnp.maximum(h2 + b2_ref[...], 0.0).astype(jnp.bfloat16)
    # Layer 3: Linear (logits, padded to 128 lanes, no activation).
    out = jnp.dot(h2, w3_ref[...], preferred_element_type=jnp.float32)
    o_ref[...] = (out + b3_ref[...]).astype(o_ref.dtype)


def _pick_block_b(B):
    if B <= 512:
        return B
    for cand in (512, 256, 128, 64, 32, 16, 8):
        if B % cand == 0:
            return cand
    return B  # fallback: single step with the whole batch resident


def mlp_classifier_forward(x_flat, params, *, block_b=None):
    """x_flat: [B, D_in] float32. params: dict of w1,b1,w2,b2,w3,b3 (f32).

    Weights are [in_features, out_features] (transposed vs torch nn.Linear),
    biases are [1, out_features]. Returns [B, num_classes] float32 logits.
    """
    B, D_in = x_flat.shape
    w1, b1 = params["w1"], params["b1"]   # [D_in, 512], [1, 512]
    w2, b2 = params["w2"], params["b2"]   # [512, 128],  [1, 128]
    w3, b3 = params["w3"], params["b3"]   # [128, C],    [1, C]
    num_classes = w3.shape[1]

    # Pad the classifier head to a lane-dense 128-multiple output width.
    c_pad = ((num_classes + 127) // 128) * 128
    if c_pad != num_classes:
        w3p = jnp.zeros((w3.shape[0], c_pad), jnp.float32).at[:, :num_classes].set(w3)
        b3p = jnp.zeros((1, c_pad), jnp.float32).at[:, :num_classes].set(b3)
    else:
        w3p, b3p = w3, b3

    # bf16 operands for the MXU; biases stay f32 (f32 bias+ReLU on the VPU).
    x_bf = x_flat.astype(jnp.bfloat16)
    w1_bf = w1.astype(jnp.bfloat16)
    w2_bf = w2.astype(jnp.bfloat16)
    w3_bf = w3p.astype(jnp.bfloat16)

    if block_b is None:
        block_b = _pick_block_b(B)
    assert B % block_b == 0, "batch must be a multiple of the batch tile"
    grid = (B // block_b,)

    out_padded = pl.pallas_call(
        mlp_kernel,
        out_shape=jax.ShapeDtypeStruct((B, c_pad), jnp.float32),
        grid_spec=pltpu.PrefetchScalarGridSpec(
            num_scalar_prefetch=0,
            grid=grid,
            in_specs=[
                pl.BlockSpec((block_b, D_in), lambda i: (i, 0)),   # x tile
                pl.BlockSpec(w1_bf.shape, lambda i: (0, 0)),       # w1 (resident)
                pl.BlockSpec(b1.shape, lambda i: (0, 0)),          # b1
                pl.BlockSpec(w2_bf.shape, lambda i: (0, 0)),       # w2
                pl.BlockSpec(b2.shape, lambda i: (0, 0)),          # b2
                pl.BlockSpec(w3_bf.shape, lambda i: (0, 0)),       # w3 (padded)
                pl.BlockSpec(b3p.shape, lambda i: (0, 0)),         # b3 (padded)
            ],
            out_specs=pl.BlockSpec((block_b, c_pad), lambda i: (i, 0)),
        ),
        compiler_params=pltpu.CompilerParams(
            dimension_semantics=("parallel",),
        ),
    )(x_bf, w1_bf, b1, w2_bf, b2, w3_bf, b3p)

    # Slice the real logits back out (cheap XLA slice, outside the kernel).
    return out_padded[:, :num_classes]


def init_params(key, d_in, num_classes=10):
    """Deterministic init mimicking torch.nn.Linear default (U(-1/sqrt(fan_in), +))."""
    def linear(key, fan_in, fan_out):
        kw, kb = jax.random.split(key)
        bound = 1.0 / jnp.sqrt(fan_in)
        w = jax.random.uniform(kw, (fan_in, fan_out), jnp.float32, -bound, bound)
        b = jax.random.uniform(kb, (1, fan_out), jnp.float32, -bound, bound)
        return w, b

    k1, k2, k3 = jax.random.split(key, 3)
    w1, b1 = linear(k1, d_in, 512)
    w2, b2 = linear(k2, 512, 128)
    w3, b3 = linear(k3, 128, num_classes)
    return {"w1": w1, "b1": b1, "w2": w2, "b2": b2, "w3": w3, "b3": b3}


if __name__ == "__main__":
    key = jax.random.PRNGKey(0)
    kx, kp = jax.random.split(key)

    # Images [B, C, H, W]; Flatten -> input_size = 3*16*16 = 768.
    # B=512 with block_b=256 gives a 2-step parallel grid (both v7x TCs busy)
    # while the whole problem still fits easily in VMEM.
    B, C, H, W = 512, 3, 16, 16
    num_classes = 10
    x = jax.random.normal(kx, (B, C, H, W), jnp.float32)

    d_in = C * H * W
    params = init_params(kp, d_in, num_classes)

    # Flatten in plain JAX (same row-major semantics as nn.Flatten on NCHW).
    x_flat = x.reshape(B, d_in)

    out = mlp_classifier_forward(x_flat, params, block_b=256)
    out = jax.block_until_ready(out)

    # Pure-JAX reference with the same bf16-operand / f32-accumulate recipe.
    xb = x_flat.astype(jnp.bfloat16)
    w1b = params["w1"].astype(jnp.bfloat16)
    w2b = params["w2"].astype(jnp.bfloat16)
    w3b = params["w3"].astype(jnp.bfloat16)
    h1 = jnp.maximum(
        jnp.dot(xb, w1b, preferred_element_type=jnp.float32) + params["b1"], 0.0
    ).astype(jnp.bfloat16)
    h2 = jnp.maximum(
        jnp.dot(h1, w2b, preferred_element_type=jnp.float32) + params["b2"], 0.0
    ).astype(jnp.bfloat16)
    ref = jnp.dot(h2, w3b, preferred_element_type=jnp.float32) + params["b3"]

    assert out.shape == (B, num_classes)
    assert jnp.allclose(out, ref, atol=1e-2, rtol=1e-2), "mismatch vs reference"

    # Also sanity-check against the full-f32 reference with a looser tolerance.
    h1f = jnp.maximum(x_flat @ params["w1"] + params["b1"], 0.0)
    h2f = jnp.maximum(h1f @ params["w2"] + params["b2"], 0.0)
    ref_f32 = h2f @ params["w3"] + params["b3"]
    assert jnp.allclose(out, ref_f32, atol=5e-2, rtol=5e-2), "mismatch vs f32 reference"

    print("KERNEL_OK")
</pallas_src>

<mosaic_0001>
module attributes {stable_mosaic.version = 11 : i64} {
  func.func @mlp_kernel(%arg0: i32, %arg1: memref<256x768xbf16, #tpu.memory_space<vmem>>, %arg2: memref<768x512xbf16, #tpu.memory_space<vmem>>, %arg3: memref<1x512xf32, #tpu.memory_space<vmem>>, %arg4: memref<512x128xbf16, #tpu.memory_space<vmem>>, %arg5: memref<1x128xf32, #tpu.memory_space<vmem>>, %arg6: memref<128x128xbf16, #tpu.memory_space<vmem>>, %arg7: memref<1x128xf32, #tpu.memory_space<vmem>>, %arg8: memref<256x128xf32, #tpu.memory_space<vmem>>) attributes {dimension_semantics = [#tpu.dimension_semantics<parallel>], iteration_bounds = array<i64: 2>, scalar_prefetch = 0 : i64, scratch_operands = 0 : i64, tpu.core_type = #tpu.core_type<tc>, window_params = [{transform_indices = @transform_0, window_bounds = array<i64: 256, 768>}, {pipeline_mode = #tpu.pipeline_mode<synchronous>, transform_indices = @transform_1, window_bounds = array<i64: 768, 512>}, {pipeline_mode = #tpu.pipeline_mode<synchronous>, transform_indices = @transform_2, window_bounds = array<i64: 1, 512>}, {pipeline_mode = #tpu.pipeline_mode<synchronous>, transform_indices = @transform_3, window_bounds = array<i64: 512, 128>}, {pipeline_mode = #tpu.pipeline_mode<synchronous>, transform_indices = @transform_4, window_bounds = array<i64: 1, 128>}, {pipeline_mode = #tpu.pipeline_mode<synchronous>, transform_indices = @transform_5, window_bounds = array<i64: 128, 128>}, {pipeline_mode = #tpu.pipeline_mode<synchronous>, transform_indices = @transform_6, window_bounds = array<i64: 1, 128>}, {transform_indices = @transform_7, window_bounds = array<i64: 256, 128>}]} {
    %c0 = arith.constant 0 : index
    %c0_0 = arith.constant 0 : index
    %0 = vector.load %arg1[%c0, %c0_0] : memref<256x768xbf16, #tpu.memory_space<vmem>>, vector<256x768xbf16>
    %c0_1 = arith.constant 0 : index
    %c0_2 = arith.constant 0 : index
    %1 = vector.load %arg2[%c0_1, %c0_2] : memref<768x512xbf16, #tpu.memory_space<vmem>>, vector<768x512xbf16>
    %cst = arith.constant dense<0.000000e+00> : vector<256x512xf32>
    %2 = tpu.matmul %0, %1, %cst {dimension_numbers = #tpu.dot_dimension_numbers<[1], [0], [0], [1], [0, 0, 1, 1], [], []>} : vector<256x768xbf16>, vector<768x512xbf16>, vector<256x512xf32> -> vector<256x512xf32>
    %c0_3 = arith.constant 0 : index
    %c0_4 = arith.constant 0 : index
    %3 = vector.load %arg3[%c0_3, %c0_4] : memref<1x512xf32, #tpu.memory_space<vmem>>, vector<1x512xf32>
    %4 = vector.broadcast %3 : vector<1x512xf32> to vector<256x512xf32>
    %5 = arith.addf %2, %4 : vector<256x512xf32>
    %cst_5 = arith.constant 0.000000e+00 : f32
    %6 = vector.broadcast %cst_5 : f32 to vector<256x512xf32>
    %7 = arith.maximumf %5, %6 : vector<256x512xf32>
    %8 = arith.truncf %7 : vector<256x512xf32> to vector<256x512xbf16>
    %c0_6 = arith.constant 0 : index
    %c0_7 = arith.constant 0 : index
    %9 = vector.load %arg4[%c0_6, %c0_7] : memref<512x128xbf16, #tpu.memory_space<vmem>>, vector<512x128xbf16>
    %cst_8 = arith.constant dense<0.000000e+00> : vector<256x128xf32>
    %10 = tpu.matmul %8, %9, %cst_8 {dimension_numbers = #tpu.dot_dimension_numbers<[1], [0], [0], [1], [0, 0, 1, 1], [], []>} : vector<256x512xbf16>, vector<512x128xbf16>, vector<256x128xf32> -> vector<256x128xf32>
    %c0_9 = arith.constant 0 : index
    %c0_10 = arith.constant 0 : index
    %11 = vector.load %arg5[%c0_9, %c0_10] : memref<1x128xf32, #tpu.memory_space<vmem>>, vector<1x128xf32>
    %12 = vector.broadcast %11 : vector<1x128xf32> to vector<256x128xf32>
    %13 = arith.addf %10, %12 : vector<256x128xf32>
    %cst_11 = arith.constant 0.000000e+00 : f32
    %14 = vector.broadcast %cst_11 : f32 to vector<256x128xf32>
    %15 = arith.maximumf %13, %14 : vector<256x128xf32>
    %16 = arith.truncf %15 : vector<256x128xf32> to vector<256x128xbf16>
    %c0_12 = arith.constant 0 : index
    %c0_13 = arith.constant 0 : index
    %17 = vector.load %arg6[%c0_12, %c0_13] : memref<128x128xbf16, #tpu.memory_space<vmem>>, vector<128x128xbf16>
    %cst_14 = arith.constant dense<0.000000e+00> : vector<256x128xf32>
    %18 = tpu.matmul %16, %17, %cst_14 {dimension_numbers = #tpu.dot_dimension_numbers<[1], [0], [0], [1], [0, 0, 1, 1], [], []>} : vector<256x128xbf16>, vector<128x128xbf16>, vector<256x128xf32> -> vector<256x128xf32>
    %c0_15 = arith.constant 0 : index
    %c0_16 = arith.constant 0 : index
    %19 = vector.load %arg7[%c0_15, %c0_16] : memref<1x128xf32, #tpu.memory_space<vmem>>, vector<1x128xf32>
    %20 = vector.broadcast %19 : vector<1x128xf32> to vector<256x128xf32>
    %21 = arith.addf %18, %20 : vector<256x128xf32>
    %c0_17 = arith.constant 0 : index
    %c0_18 = arith.constant 0 : index
    %22 = vector.load %arg8[%c0_17, %c0_18] : memref<256x128xf32, #tpu.memory_space<vmem>>, vector<256x128xf32>
    tpu.vector_store %arg8[%c0_17, %c0_18], %21 {strides = array<i32>} : memref<256x128xf32, #tpu.memory_space<vmem>>, vector<256x128xf32>,
    return
  }
  func.func @transform_0(%arg0: i32) -> (i32, i32) {
    %c0_i32 = arith.constant 0 : i32
    %c0_i32_0 = arith.constant 0 : i32
    return %arg0, %c0_i32 : i32, i32
  }
  func.func @transform_1(%arg0: i32) -> (i32, i32) {
    %c0_i32 = arith.constant 0 : i32
    %c0_i32_0 = arith.constant 0 : i32
    %c0_i32_1 = arith.constant 0 : i32
    return %c0_i32, %c0_i32_0 : i32, i32
  }
  func.func @transform_2(%arg0: i32) -> (i32, i32) {
    %c0_i32 = arith.constant 0 : i32
    %c0_i32_0 = arith.constant 0 : i32
    %c0_i32_1 = arith.constant 0 : i32
    return %c0_i32, %c0_i32_0 : i32, i32
  }
  func.func @transform_3(%arg0: i32) -> (i32, i32) {
    %c0_i32 = arith.constant 0 : i32
    %c0_i32_0 = arith.constant 0 : i32
    %c0_i32_1 = arith.constant 0 : i32
    return %c0_i32, %c0_i32_0 : i32, i32
  }
  func.func @transform_4(%arg0: i32) -> (i32, i32) {
    %c0_i32 = arith.constant 0 : i32
    %c0_i32_0 = arith.constant 0 : i32
    %c0_i32_1 = arith.constant 0 : i32
    return %c0_i32, %c0_i32_0 : i32, i32
  }
  func.func @transform_5(%arg0: i32) -> (i32, i32) {
    %c0_i32 = arith.constant 0 : i32
    %c0_i32_0 = arith.constant 0 : i32
    %c0_i32_1 = arith.constant 0 : i32
    return %c0_i32, %c0_i32_0 : i32, i32
  }
  func.func @transform_6(%arg0: i32) -> (i32, i32) {
    %c0_i32 = arith.constant 0 : i32
    %c0_i32_0 = arith.constant 0 : i32
    %c0_i32_1 = arith.constant 0 : i32
    return %c0_i32, %c0_i32_0 : i32, i32
  }
  func.func @transform_7(%arg0: i32) -> (i32, i32) {
    %c0_i32 = arith.constant 0 : i32
    %c0_i32_0 = arith.constant 0 : i32
    return %arg0, %c0_i32 : i32, i32
  }
}

</mosaic_0001>

<llo_original>
// kernel: tpu_custom_call.1
$region0: #{tpu_custom_call.1}
  #allocation0 [shape = 'u32[]', space=smem, size = 0x4, offset = 0x4, fixed_abs, tag = 'smem constant byte address 0x4 - core index']
  #allocation1 [shape = 'u32[72,128]{1,0:T(1,128)}', space=vmem, size = 0x9000, scoped, tag = 'internal scratch']
  %s0 = inlined_call_operand.hbm [shape: bf16[512,768], index: 0, kind: input, shape index: {}]
  %s1 = inlined_call_operand.hbm [shape: bf16[768,512], index: 1, kind: input, shape index: {}]
  %s2 = inlined_call_operand.hbm [shape: f32[1,512], index: 2, kind: input, shape index: {}]
  %s3 = inlined_call_operand.hbm [shape: bf16[512,128], index: 3, kind: input, shape index: {}]
  %s4 = inlined_call_operand.vmem [shape: f32[1,128], index: 4, kind: input, shape index: {}]
  %s5 = inlined_call_operand.hbm [shape: bf16[128,128], index: 5, kind: input, shape index: {}]
  %s6 = inlined_call_operand.vmem [shape: f32[1,128], index: 6, kind: input, shape index: {}]
  %s7 = inlined_call_operand.hbm [shape: f32[512,128], index: 7, kind: output, shape index: {}]
  %s8 = sld [smem:[#allocation0]]
  $region81: #{tpu_custom_call.1} parent=0
    _
  %s10 = ssub.s32 1, %s8
  %s11 = scalar_select 0, %s10, %s8
  $region1: #{tpu_custom_call.1} parent=0
    #allocation2 [shape = 'u8[786432]{0}', space=vmem, size = 0xc0000, scoped, tag = 'input window, operand 0']
    #allocation3 [shape = 's32[2]{0}', space=sflag, size = 0x8, scoped, tag = 'scoped memory for tpu_custom_call.1']
    #allocation4 [shape = 's32[2]{0}', space=sflag, size = 0x8, scoped, tag = 'scoped memory for tpu_custom_call.1']
    #allocation5 [shape = 'u8[786432]{0}', space=vmem, size = 0xc0000, scoped, tag = 'input window, operand 1, single buffered']
    #allocation6 [shape = 's32[1]{0}', space=sflag, size = 0x4, scoped, tag = 'scoped memory for tpu_custom_call.1']
    #allocation7 [shape = 'u8[2048]{0}', space=vmem, size = 0x800, scoped, tag = 'input window, operand 2, single buffered']
    #allocation8 [shape = 'u8[131072]{0}', space=vmem, size = 0x20000, scoped, tag = 'input window, operand 3, single buffered']
    #allocation9 [shape = 's32[1]{0}', space=sflag, size = 0x4, scoped, tag = 'scoped memory for tpu_custom_call.1']
    #allocation10 [shape = 'u8[32768]{0}', space=vmem, size = 0x8000, scoped, tag = 'input window, operand 5, single buffered']
    #allocation11 [shape = 'u8[262144]{0}', space=vmem, size = 0x40000, scoped, tag = 'output window, operand 0']
    %12 = vsyncpa [#allocation3], 0
    %s13 = scalar_lea.sflag [#allocation3], 1
    %14 = vsyncpa %s13, 0
    %15 = vsyncpa [#allocation6], 0
    %16 = vsyncpa [#allocation9], 0
    %17 = vsyncpa [#allocation4], 0
    %s18 = scalar_lea.sflag [#allocation4], 1
    %19 = vsyncpa %s18, 0
    loop: start=0, step=1, limit=4
    $region2: #{tpu_custom_call.1} parent=1 // loop_pre_header
      _
    $region3: #{tpu_custom_call.1} parent=1 // loop_header
      %s21 = sphi 0, %s25
      %p22 = scmp.ge.s32.totalorder %s21, 4
      %s31 = sphi 0, %s33
      %s34 = sphi 0, %s31
      %s35 = sphi 0, %s34
      %s51 = sphi 0, %s35
      %s55 = sphi 0, %s55
      %s57 = sphi 0, %s55
      %s58 = sphi 0, %s57
      %s72 = sphi 0, %s58
      %s76 = sphi 0, %s76
      %s78 = sphi 0, %s76
      %s79 = sphi 0, %s78
      %s93 = sphi 0, %s79
      %s97 = sphi 0, %s97
      %s99 = sphi 0, %s97
      %s100 = sphi 0, %s99
      %s114 = sphi 0, %s100
      %s118 = sphi 0, %s118
      %s120 = sphi 0, %s118
      %s121 = sphi 0, %s120
      %s135 = sphi 0, %s121
      %s139 = sphi 0, %s139
      %s141 = sphi 0, %s139
      %s142 = sphi 0, %s141
      %s156 = sphi 0, %s142
      %s160 = sphi 0, %s160
      %s162 = sphi 0, %s160
      %s163 = sphi 0, %s162
      %s177 = sphi 0, %s163
      %s183 = sphi 0, %s185
      %s186 = sphi 0, %s183
      %s187 = sphi 0, %s186
      %s203 = sphi 0, %s187
    $region4: #{tpu_custom_call.1} parent=1 // loop_header_branch
      %24 = sbr.rel (%p22) target = $region8
    $region5: #{tpu_custom_call.1} parent=1 // loop_body
      %s26 = ssub.s32 %s21, 1
      %s27 = ssub.s32 %s21, 2
      %s28 = sadd.s32 %s21, 1
      %s29 = ssub.s32 %s21, %s28
      %p30 = scmp.eq.s32.totalorder %s29, 0
      %s32 = sadd.s32 %s31, 1
      %s33 = scalar_select %p30, %s31, %s32
      %p36 = pneg %p30
      %p37 = scmp.eq.s32.totalorder %s21, 1
      %p38 = por %p36, %p37
      %p39 = scmp.ne.s32.totalorder %s31, %s34
      %p40 = scmp.eq.s32.totalorder %s21, 0
      %p41 = por %p39, %p40
      %p42 = scmp.ne.s32.totalorder %s31, %s34
      %p43 = scmp.eq.s32.totalorder %s26, 1
      %p44 = por %p42, %p43
      %p45 = scmp.ne.s32.totalorder %s34, %s35
      %p46 = scmp.eq.s32.totalorder %s26, 0
      %p47 = por %p45, %p46
      %p48 = scmp.ne.s32.totalorder %s34, %s35
      %p49 = scmp.eq.s32.totalorder %s27, 1
      %p50 = por %p48, %p49
      %p52 = scmp.ne.s32.totalorder %s35, %s51
      %p53 = scmp.eq.s32.totalorder %s27, 0
      %p54 = por %p52, %p53
      %s56 = sadd.s32 %s55, 1
      %p59 = scmp.eq.s32.totalorder %s21, 1
      %p60 = scmp.ne.s32.totalorder %s55, %s57
      %p61 = scmp.eq.s32.totalorder %s21, 0
      %p62 = por %p60, %p61
      %p63 = scmp.ne.s32.totalorder %s55, %s57
      %p64 = scmp.eq.s32.totalorder %s26, 1
      %p65 = por %p63, %p64
      %p66 = scmp.ne.s32.totalorder %s57, %s58
      %p67 = scmp.eq.s32.totalorder %s26, 0
      %p68 = por %p66, %p67
      %p69 = scmp.ne.s32.totalorder %s57, %s58
      %p70 = scmp.eq.s32.totalorder %s27, 1
      %p71 = por %p69, %p70
      %p73 = scmp.ne.s32.totalorder %s58, %s72
      %p74 = scmp.eq.s32.totalorder %s27, 0
      %p75 = por %p73, %p74
      %s77 = sadd.s32 %s76, 1
      %p80 = scmp.eq.s32.totalorder %s21, 1
      %p81 = scmp.ne.s32.totalorder %s76, %s78
      %p82 = scmp.eq.s32.totalorder %s21, 0
      %p83 = por %p81, %p82
      %p84 = scmp.ne.s32.totalorder %s76, %s78
      %p85 = scmp.eq.s32.totalorder %s26, 1
      %p86 = por %p84, %p85
      %p87 = scmp.ne.s32.totalorder %s78, %s79
      %p88 = scmp.eq.s32.totalorder %s26, 0
      %p89 = por %p87, %p88
      %p90 = scmp.ne.s32.totalorder %s78, %s79
      %p91 = scmp.eq.s32.totalorder %s27, 1
      %p92 = por %p90, %p91
      %p94 = scmp.ne.s32.totalorder %s79, %s93
      %p95 = scmp.eq.s32.totalorder %s27, 0
      %p96 = por %p94, %p95
      %s98 = sadd.s32 %s97, 1
      %p101 = scmp.eq.s32.totalorder %s21, 1
      %p102 = scmp.ne.s32.totalorder %s97, %s99
      %p103 = scmp.eq.s32.totalorder %s21, 0
      %p104 = por %p102, %p103
      %p105 = scmp.ne.s32.totalorder %s97, %s99
      %p106 = scmp.eq.s32.totalorder %s26, 1
      %p107 = por %p105, %p106
      %p108 = scmp.ne.s32.totalorder %s99, %s100
      %p109 = scmp.eq.s32.totalorder %s26, 0
      %p110 = por %p108, %p109
      %p111 = scmp.ne.s32.totalorder %s99, %s100
      %p112 = scmp.eq.s32.totalorder %s27, 1
      %p113 = por %p111, %p112
      %p115 = scmp.ne.s32.totalorder %s100, %s114
      %p116 = scmp.eq.s32.totalorder %s27, 0
      %p117 = por %p115, %p116
      %s119 = sadd.s32 %s118, 1
      %p122 = scmp.eq.s32.totalorder %s21, 1
      %p123 = scmp.ne.s32.totalorder %s118, %s120
      %p124 = scmp.eq.s32.totalorder %s21, 0
      %p125 = por %p123, %p124
      %p126 = scmp.ne.s32.totalorder %s118, %s120
      %p127 = scmp.eq.s32.totalorder %s26, 1
      %p128 = por %p126, %p127
      %p129 = scmp.ne.s32.totalorder %s120, %s121
      %p130 = scmp.eq.s32.totalorder %s26, 0
      %p131 = por %p129, %p130
      %p132 = scmp.ne.s32.totalorder %s120, %s121
      %p133 = scmp.eq.s32.totalorder %s27, 1
      %p134 = por %p132, %p133
      %p136 = scmp.ne.s32.totalorder %s121, %s135
      %p137 = scmp.eq.s32.totalorder %s27, 0
      %p138 = por %p136, %p137
      %s140 = sadd.s32 %s139, 1
      %p143 = scmp.eq.s32.totalorder %s21, 1
      %p144 = scmp.ne.s32.totalorder %s139, %s141
      %p145 = scmp.eq.s32.totalorder %s21, 0
      %p146 = por %p144, %p145
      %p147 = scmp.ne.s32.totalorder %s139, %s141
      %p148 = scmp.eq.s32.totalorder %s26, 1
      %p149 = por %p147, %p148
      %p150 = scmp.ne.s32.totalorder %s141, %s142
      %p151 = scmp.eq.s32.totalorder %s26, 0
      %p152 = por %p150, %p151
      %p153 = scmp.ne.s32.totalorder %s141, %s142
      %p154 = scmp.eq.s32.totalorder %s27, 1
      %p155 = por %p153, %p154
      %p157 = scmp.ne.s32.totalorder %s142, %s156
      %p158 = scmp.eq.s32.totalorder %s27, 0
      %p159 = por %p157, %p158
      %s161 = sadd.s32 %s160, 1
      %p164 = scmp.eq.s32.totalorder %s21, 1
      %p165 = scmp.ne.s32.totalorder %s160, %s162
      %p166 = scmp.eq.s32.totalorder %s21, 0
      %p167 = por %p165, %p166
      %p168 = scmp.ne.s32.totalorder %s160, %s162
      %p169 = scmp.eq.s32.totalorder %s26, 1
      %p170 = por %p168, %p169
      %p171 = scmp.ne.s32.totalorder %s162, %s163
      %p172 = scmp.eq.s32.totalorder %s26, 0
      %p173 = por %p171, %p172
      %p174 = scmp.ne.s32.totalorder %s162, %s163
      %p175 = scmp.eq.s32.totalorder %s27, 1
      %p176 = por %p174, %p175
      %p178 = scmp.ne.s32.totalorder %s163, %s177
      %p179 = scmp.eq.s32.totalorder %s27, 0
      %p180 = por %p178, %p179
      %s181 = ssub.s32 %s21, %s28
      %p182 = scmp.eq.s32.totalorder %s181, 0
      %s184 = sadd.s32 %s183, 1
      %s185 = scalar_select %p182, %s183, %s184
      %p188 = pneg %p182
      %p189 = scmp.eq.s32.totalorder %s21, 1
      %p190 = por %p188, %p189
      %p191 = scmp.ne.s32.totalorder %s183, %s186
      %p192 = scmp.eq.s32.totalorder %s21, 0
      %p193 = por %p191, %p192
      %p194 = scmp.ne.s32.totalorder %s183, %s186
      %p195 = scmp.eq.s32.totalorder %s26, 1
      %p196 = por %p194, %p195
      %p197 = scmp.ne.s32.totalorder %s186, %s187
      %p198 = scmp.eq.s32.totalorder %s26, 0
      %p199 = por %p197, %p198
      %p200 = scmp.ne.s32.totalorder %s186, %s187
      %p201 = scmp.eq.s32.totalorder %s27, 1
      %p202 = por %p200, %p201
      %p204 = scmp.ne.s32.totalorder %s187, %s203
      %p205 = scmp.eq.s32.totalorder %s27, 0
      %p206 = por %p204, %p205
      %p207 = scmp.le.s32.totalorder 1, %s21
      %p208 = scmp.lt.s32.totalorder %s21, 3
      %p209 = pnand %p207, %p208
      %p210 = pneg %p209
      // Predicated region
      $region9: #{tpu_custom_call.1} parent=5 // pred_check
        _
      $region10: #{tpu_custom_call.1} parent=5 // pred_check_branch
        %212 = sbr.rel (%p209) target = $region12
      $region11: #{tpu_custom_call.1} parent=5 // pred_region
        %s213 = ssub.s32 %s21, 1
        // Predicated region
        $region13: #{tpu_custom_call.1} parent=11 // pred_check
          %p214 = pneg %p68
        $region14: #{tpu_custom_call.1} parent=11 // pred_check_branch
          %216 = sbr.rel (%p214) target = $region16
        $region15: #{tpu_custom_call.1} parent=11 // pred_region
          %218 = vsyncadd [#allocation6], 0
          %s219 = sshll.u32 %s1, 4
          %s220 = int_to_ptr.hbm [resolvable:$true] %s219
          %s221 = sshll.u32 [#allocation5], 4
          %s222 = int_to_ptr.vmem [resolvable:$true] %s221
          %227 = dma.hbm_to_vmem [thread:$0]  %s220, 24576, %s222, [#allocation6], 256, 256, 16
        $region16: #{tpu_custom_call.1} parent=11 // pred_fallthru
          _
        // Predicated region
        $region17: #{tpu_custom_call.1} parent=11 // pred_check
          %p228 = pneg %p89
        $region18: #{tpu_custom_call.1} parent=11 // pred_check_branch
          %230 = sbr.rel (%p228) target = $region20
        $region19: #{tpu_custom_call.1} parent=11 // pred_region
          %232 = vsyncadd [#allocation6], 0
          %s234 = sshll.u32 %s2, 4
          %s235 = int_to_ptr.hbm [resolvable:$true] %s234
          %s236 = sshll.u32 [#allocation7], 4
          %s237 = int_to_ptr.vmem [resolvable:$true] %s236
          %239 = dma.hbm_to_vmem [thread:$0]  %s235, 64, %s237, [#allocation6]
        $region20: #{tpu_custom_call.1} parent=11 // pred_fallthru
          _
        // Predicated region
        $region21: #{tpu_custom_call.1} parent=11 // pred_check
          %p240 = pneg %p110
        $region22: #{tpu_custom_call.1} parent=11 // pred_check_branch
          %242 = sbr.rel (%p240) target = $region24
        $region23: #{tpu_custom_call.1} parent=11 // pred_region
          %244 = vsyncadd [#allocation9], 0
          %s245 = sshll.u32 %s3, 4
          %s246 = int_to_ptr.hbm [resolvable:$true] %s245
          %s247 = sshll.u32 [#allocation8], 4
          %s248 = int_to_ptr.vmem [resolvable:$true] %s247
          %253 = dma.hbm_to_vmem [thread:$0]  %s246, 4096, %s248, [#allocation9], 64, 64, 4
        $region24: #{tpu_custom_call.1} parent=11 // pred_fallthru
          _
        // Predicated region
        $region25: #{tpu_custom_call.1} parent=11 // pred_check
          %p254 = pneg %p131
        $region26: #{tpu_custom_call.1} parent=11 // pred_check_branch
          %256 = sbr.rel (%p254) target = $region28
        $region27: #{tpu_custom_call.1} parent=11 // pred_region
          _
        $region28: #{tpu_custom_call.1} parent=11 // pred_fallthru
          _
        // Predicated region
        $region29: #{tpu_custom_call.1} parent=11 // pred_check
          %p257 = pneg %p152
        $region30: #{tpu_custom_call.1} parent=11 // pred_check_branch
          %259 = sbr.rel (%p257) target = $region32
        $region31: #{tpu_custom_call.1} parent=11 // pred_region
          %261 = vsyncadd [#allocation9], 0
          %s262 = sshll.u32 %s5, 4
          %s263 = int_to_ptr.hbm [resolvable:$true] %s262
          %s264 = sshll.u32 [#allocation10], 4
          %s265 = int_to_ptr.vmem [resolvable:$true] %s264
          %270 = dma.hbm_to_vmem [thread:$0]  %s263, 1024, %s265, [#allocation9], 64, 64, 4
        $region32: #{tpu_custom_call.1} parent=11 // pred_fallthru
          _
        // Predicated region
        $region33: #{tpu_custom_call.1} parent=11 // pred_check
          %p271 = pneg %p173
        $region34: #{tpu_custom_call.1} parent=11 // pred_check_branch
          %273 = sbr.rel (%p271) target = $region36
        $region35: #{tpu_custom_call.1} parent=11 // pred_region
          _
        $region36: #{tpu_custom_call.1} parent=11 // pred_fallthru
          _
      $region12: #{tpu_custom_call.1} parent=5 // pred_fallthru
        _
      %p274 = scmp.lt.s32.totalorder %s21, 2
      // Predicated region
      $region37: #{tpu_custom_call.1} parent=5 // pred_check
        %p275 = pneg %p274
      $region38: #{tpu_custom_call.1} parent=5 // pred_check_branch
        %277 = sbr.rel (%p275) target = $region40
      $region39: #{tpu_custom_call.1} parent=5 // pred_region
        // Predicated region
        $region41: #{tpu_custom_call.1} parent=39 // pred_check
          %p278 = pneg %p41
        $region42: #{tpu_custom_call.1} parent=39 // pred_check_branch
          %280 = sbr.rel (%p278) target = $region44
        $region43: #{tpu_custom_call.1} parent=39 // pred_region
          %s281 = sand.u32 %s31, 1
          %s282 = scalar_lea.sflag [#allocation3], %s281
          %s283 = sand.u32 %s31, 1
          %s284 = smul.addr %s283, 768
          %s285 = scalar_lea.vmem [#allocation2], %s284
          %s286 = smul.u32 32, %s21
          %288 = vsyncadd %s282, 0
          %s289 = smul.addr %s286, 6
          %s290 = smul.addr %s289, 4
          %s291 = scalar_lea.hbm %s0, %s290
          %s292 = sshll.u32 %s291, 4
          %s293 = int_to_ptr.hbm [resolvable:$true] %s292
          %s294 = sshll.u32 %s285, 4
          %s295 = int_to_ptr.vmem [resolvable:$true] %s294
          %300 = dma.hbm_to_vmem [thread:$0]  %s293, 12288, %s295, %s282, 384, 384, 24
        $region44: #{tpu_custom_call.1} parent=39 // pred_fallthru
          _
      $region40: #{tpu_custom_call.1} parent=5 // pred_fallthru
        _
      %p301 = scmp.le.s32.totalorder 1, %s21
      %p302 = scmp.lt.s32.totalorder %s21, 3
      %p303 = pnand %p301, %p302
      %p304 = pneg %p303
      // Predicated region
      $region45: #{tpu_custom_call.1} parent=5 // pred_check
        _
      $region46: #{tpu_custom_call.1} parent=5 // pred_check_branch
        %306 = sbr.rel (%p303) target = $region48
      $region47: #{tpu_custom_call.1} parent=5 // pred_region
        %s307 = ssub.s32 %s21, 1
        %s308 = sand.u32 %s34, 1
        %s309 = scalar_lea.sflag [#allocation3], %s308
        %s310 = sand.u32 %s34, 1
        %s311 = smul.addr %s310, 768
        %s312 = scalar_lea.vmem [#allocation2], %s311
        // Predicated region
        $region49: #{tpu_custom_call.1} parent=47 // pred_check
          %p313 = pneg %p47
        $region50: #{tpu_custom_call.1} parent=47 // pred_check_branch
          %315 = sbr.rel (%p313) target = $region52
        $region51: #{tpu_custom_call.1} parent=47 // pred_region
          %317 = dma.done %s309, 12288
        $region52: #{tpu_custom_call.1} parent=47 // pred_fallthru
          _
        // Predicated region
        $region53: #{tpu_custom_call.1} parent=47 // pred_check
          %p318 = pneg %p68
        $region54: #{tpu_custom_call.1} parent=47 // pred_check_branch
          %320 = sbr.rel (%p318) target = $region56
        $region55: #{tpu_custom_call.1} parent=47 // pred_region
          %322 = dma.done [#allocation6], 24576
        $region56: #{tpu_custom_call.1} parent=47 // pred_fallthru
          _
        // Predicated region
        $region57: #{tpu_custom_call.1} parent=47 // pred_check
          %p323 = pneg %p89
        $region58: #{tpu_custom_call.1} parent=47 // pred_check_branch
          %325 = sbr.rel (%p323) target = $region60
        $region59: #{tpu_custom_call.1} parent=47 // pred_region
          %327 = dma.done [#allocation6], 64
        $region60: #{tpu_custom_call.1} parent=47 // pred_fallthru
          _
        // Predicated region
        $region61: #{tpu_custom_call.1} parent=47 // pred_check
          %p328 = pneg %p110
        $region62: #{tpu_custom_call.1} parent=47 // pred_check_branch
          %330 = sbr.rel (%p328) target = $region64
        $region63: #{tpu_custom_call.1} parent=47 // pred_region
          %332 = dma.done [#allocation9], 4096
        $region64: #{tpu_custom_call.1} parent=47 // pred_fallthru
          _
        // Predicated region
        $region65: #{tpu_custom_call.1} parent=47 // pred_check
          %p333 = pneg %p152
        $region66: #{tpu_custom_call.1} parent=47 // pred_check_branch
          %335 = sbr.rel (%p333) target = $region68
        $region67: #{tpu_custom_call.1} parent=47 // pred_region
          %337 = dma.done [#allocation9], 1024
        $region68: #{tpu_custom_call.1} parent=47 // pred_fallthru
          _
        %s338 = sand.u32 %s34, 1
        %s339 = scalar_lea.sflag [#allocation3], %s338
        %s340 = sand.u32 %s34, 1
        %s341 = smul.addr %s340, 768
        %s342 = scalar_lea.vmem [#allocation2], %s341
        %p343 = pneg %p47
        %p344 = pneg %p44
        %p345 = pneg %p68
        %p346 = pneg %p65
        %p347 = pneg %p89
        %p348 = pneg %p86
        %p349 = pneg %p110
        %p350 = pneg %p107
        %p351 = pneg %p131
        %p352 = pneg %p128
        %p353 = pneg %p152
        %p354 = pneg %p149
        %p355 = pneg %p173
        %p356 = pneg %p170
        %p357 = pneg %p199
        %p358 = pneg %p196
        %s359 = sand.u32 %s186, 1
        %s360 = scalar_lea.sflag [#allocation4], %s359
        %s361 = sand.u32 %s186, 1
        %s362 = smul.addr %s361, 256
        %s363 = scalar_lea.vmem [#allocation11], %s362
        %s364 = smul.u32 32, %s26
        %s365 = smul.u32 32, %s26
        %v366 = vld [vmem:[%s312] sm:$0xff]
        %v367 = vld [vmem:[%s312 + $0x8] sm:$0xff]
        %v368 = vld [vmem:[%s312 + $0x10] sm:$0xff]
        %v369 = vld [vmem:[%s312 + $0x18] sm:$0xff]
        %v370 = vld [vmem:[%s312 + $0x20] sm:$0xff]
        %v371 = vld [vmem:[%s312 + $0x28] sm:$0xff]
        %v372 = vld [vmem:[%s312 + $0x30] sm:$0xff]
        %v373 = vld [vmem:[%s312 + $0x38] sm:$0xff]
        %v374 = vld [vmem:[%s312 + $0x40] sm:$0xff]
        %v375 = vld [vmem:[%s312 + $0x48] sm:$0xff]
        %v376 = vld [vmem:[%s312 + $0x50] sm:$0xff]
        %v377 = vld [vmem:[%s312 + $0x58] sm:$0xff]
        %v378 = vld [vmem:[%s312 + $0x60] sm:$0xff]
        %v379 = vld [vmem:[%s312 + $0x68] sm:$0xff]
        %v380 = vld [vmem:[%s312 + $0x70] sm:$0xff]
        %v381 = vld [vmem:[%s312 + $0x78] sm:$0xff]
        %v382 = vld [vmem:[%s312 + $0x80] sm:$0xff]
        %v383 = vld [vmem:[%s312 + $0x88] sm:$0xff]
        %v384 = vld [vmem:[%s312 + $0x90] sm:$0xff]
        %v385 = vld [vmem:[%s312 + $0x98] sm:$0xff]
        %v386 = vld [vmem:[%s312 + $0xa0] sm:$0xff]
        %v387 = vld [vmem:[%s312 + $0xa8] sm:$0xff]
        %v388 = vld [vmem:[%s312 + $0xb0] sm:$0xff]
        %v389 = vld [vmem:[%s312 + $0xb8] sm:$0xff]
        %v390 = vld [vmem:[%s312 + $0xc0] sm:$0xff]
        %v391 = vld [vmem:[%s312 + $0xc8] sm:$0xff]
        %v392 = vld [vmem:[%s312 + $0xd0] sm:$0xff]
        %v393 = vld [vmem:[%s312 + $0xd8] sm:$0xff]
        %v394 = vld [vmem:[%s312 + $0xe0] sm:$0xff]
        %v395 = vld [vmem:[%s312 + $0xe8] sm:$0xff]
        %v396 = vld [vmem:[%s312 + $0xf0] sm:$0xff]
        %v397 = vld [vmem:[%s312 + $0xf8] sm:$0xff]
        %v398 = vld [vmem:[%s312 + $0x100] sm:$0xff]
        %v399 = vld [vmem:[%s312 + $0x108] sm:$0xff]
        %v400 = vld [vmem:[%s312 + $0x110] sm:$0xff]
        %v401 = vld [vmem:[%s312 + $0x118] sm:$0xff]
        %v402 = vld [vmem:[%s312 + $0x120] sm:$0xff]
        %v403 = vld [vmem:[%s312 + $0x128] sm:$0xff]
        %v404 = vld [vmem:[%s312 + $0x130] sm:$0xff]
        %v405 = vld [vmem:[%s312 + $0x138] sm:$0xff]
        %v406 = vld [vmem:[%s312 + $0x140] sm:$0xff]
        %v407 = vld [vmem:[%s312 + $0x148] sm:$0xff]
        %v408 = vld [vmem:[%s312 + $0x150] sm:$0xff]
        %v409 = vld [vmem:[%s312 + $0x158] sm:$0xff]
        %v410 = vld [vmem:[%s312 + $0x160] sm:$0xff]
        %v411 = vld [vmem:[%s312 + $0x168] sm:$0xff]
        %v412 = vld [vmem:[%s312 + $0x170] sm:$0xff]
        %v413 = vld [vmem:[%s312 + $0x178] sm:$0xff]
        %v414 = vld [vmem:[%s312 + $0x180] sm:$0xff]
        %v415 = vld [vmem:[%s312 + $0x188] sm:$0xff]
        %v416 = vld [vmem:[%s312 + $0x190] sm:$0xff]
        %v417 = vld [vmem:[%s312 + $0x198] sm:$0xff]
        %v418 = vld [vmem:[%s312 + $0x1a0] sm:$0xff]
        %v419 = vld [vmem:[%s312 + $0x1a8] sm:$0xff]
        %v420 = vld [vmem:[%s312 + $0x1b0] sm:$0xff]
        %v421 = vld [vmem:[%s312 + $0x1b8] sm:$0xff]
        %v422 = vld [vmem:[%s312 + $0x1c0] sm:$0xff]
        %v423 = vld [vmem:[%s312 + $0x1c8] sm:$0xff]
        %v424 = vld [vmem:[%s312 + $0x1d0] sm:$0xff]
        %v425 = vld [vmem:[%s312 + $0x1d8] sm:$0xff]
        %v426 = vld [vmem:[%s312 + $0x1e0] sm:$0xff]
        %v427 = vld [vmem:[%s312 + $0x1e8] sm:$0xff]
        %v428 = vld [vmem:[%s312 + $0x1f0] sm:$0xff]
        %v429 = vld [vmem:[%s312 + $0x1f8] sm:$0xff]
        %v430 = vld [vmem:[%s312 + $0x200] sm:$0xff]
        %v431 = vld [vmem:[%s312 + $0x208] sm:$0xff]
        %v432 = vld [vmem:[%s312 + $0x210] sm:$0xff]
        %v433 = vld [vmem:[%s312 + $0x218] sm:$0xff]
        %v434 = vld [vmem:[%s312 + $0x220] sm:$0xff]
        %v435 = vld [vmem:[%s312 + $0x228] sm:$0xff]
        %v436 = vld [vmem:[%s312 + $0x230] sm:$0xff]
        %v437 = vld [vmem:[%s312 + $0x238] sm:$0xff]
        %v438 = vld [vmem:[%s312 + $0x240] sm:$0xff]
        %v439 = vld [vmem:[%s312 + $0x248] sm:$0xff]
        %v440 = vld [vmem:[%s312 + $0x250] sm:$0xff]
        %v441 = vld [vmem:[%s312 + $0x258] sm:$0xff]
        %v442 = vld [vmem:[%s312 + $0x260] sm:$0xff]
        %v443 = vld [vmem:[%s312 + $0x268] sm:$0xff]
        %v444 = vld [vmem:[%s312 + $0x270] sm:$0xff]
        %v445 = vld [vmem:[%s312 + $0x278] sm:$0xff]
        %v446 = vld [vmem:[%s312 + $0x280] sm:$0xff]
        %v447 = vld [vmem:[%s312 + $0x288] sm:$0xff]
        %v448 = vld [vmem:[%s312 + $0x290] sm:$0xff]
        %v449 = vld [vmem:[%s312 + $0x298] sm:$0xff]
        %v450 = vld [vmem:[%s312 + $0x2a0] sm:$0xff]
        %v451 = vld [vmem:[%s312 + $0x2a8] sm:$0xff]
        %v452 = vld [vmem:[%s312 + $0x2b0] sm:$0xff]
        %v453 = vld [vmem:[%s312 + $0x2b8] sm:$0xff]
        %v454 = vld [vmem:[%s312 + $0x2c0] sm:$0xff]
        %v455 = vld [vmem:[%s312 + $0x2c8] sm:$0xff]
        %v456 = vld [vmem:[%s312 + $0x2d0] sm:$0xff]
        %v457 = vld [vmem:[%s312 + $0x2d8] sm:$0xff]
        %v458 = vld [vmem:[%s312 + $0x2e0] sm:$0xff]
        %v459 = vld [vmem:[%s312 + $0x2e8] sm:$0xff]
        %v460 = vld [vmem:[%s312 + $0x2f0] sm:$0xff]
        %v461 = vld [vmem:[%s312 + $0x2f8] sm:$0xff]
        %v462 = vld [vmem:[#allocation5] sm:$0xff]
        %v463 = vld [vmem:[#allocation5 + $0x8] sm:$0xff]
        %v464 = vld [vmem:[#allocation5 + $0x10] sm:$0xff]
        %v465 = vld [vmem:[#allocation5 + $0x18] sm:$0xff]
        %v466 = vld [vmem:[#allocation5 + $0x20] sm:$0xff]
        %v467 = vld [vmem:[#allocation5 + $0x28] sm:$0xff]
        %v468 = vld [vmem:[#allocation5 + $0x30] sm:$0xff]
        %v469 = vld [vmem:[#allocation5 + $0x38] sm:$0xff]
        %v470 = vld [vmem:[#allocation5 + $0x40] sm:$0xff]
        %v471 = vld [vmem:[#allocation5 + $0x48] sm:$0xff]
        %v472 = vld [vmem:[#allocation5 + $0x50] sm:$0xff]
        %v473 = vld [vmem:[#allocation5 + $0x58] sm:$0xff]
        %v474 = vld [vmem:[#allocation5 + $0x60] sm:$0xff]
        %v475 = vld [vmem:[#allocation5 + $0x68] sm:$0xff]
        %v476 = vld [vmem:[#allocation5 + $0x70] sm:$0xff]
        %v477 = vld [vmem:[#allocation5 + $0x78] sm:$0xff]
        %v478 = vld [vmem:[#allocation5 + $0x80] sm:$0xff]
        %v479 = vld [vmem:[#allocation5 + $0x88] sm:$0xff]
        %v480 = vld [vmem:[#allocation5 + $0x90] sm:$0xff]
        %v481 = vld [vmem:[#allocation5 + $0x98] sm:$0xff]
        %v482 = vld [vmem:[#allocation5 + $0xa0] sm:$0xff]
        %v483 = vld [vmem:[#allocation5 + $0xa8] sm:$0xff]
        %v484 = vld [vmem:[#allocation5 + $0xb0] sm:$0xff]
        %v485 = vld [vmem:[#allocation5 + $0xb8] sm:$0xff]
        %v486 = vld [vmem:[#allocation5 + $0xc0] sm:$0xff]
        %v487 = vld [vmem:[#allocation5 + $0xc8] sm:$0xff]
        %v488 = vld [vmem:[#allocation5 + $0xd0] sm:$0xff]
        %v489 = vld [vmem:[#allocation5 + $0xd8] sm:$0xff]
        %v490 = vld [vmem:[#allocation5 + $0xe0] sm:$0xff]
        %v491 = vld [vmem:[#allocation5 + $0xe8] sm:$0xff]
        %v492 = vld [vmem:[#allocation5 + $0xf0] sm:$0xff]
        %v493 = vld [vmem:[#allocation5 + $0xf8] sm:$0xff]
        %v494 = vld [vmem:[#allocation5 + $0x100] sm:$0xff]
        %v495 = vld [vmem:[#allocation5 + $0x108] sm:$0xff]
        %v496 = vld [vmem:[#allocation5 + $0x110] sm:$0xff]
        %v497 = vld [vmem:[#allocation5 + $0x118] sm:$0xff]
        %v498 = vld [vmem:[#allocation5 + $0x120] sm:$0xff]
        %v499 = vld [vmem:[#allocation5 + $0x128] sm:$0xff]
        %v500 = vld [vmem:[#allocation5 + $0x130] sm:$0xff]
        %v501 = vld [vmem:[#allocation5 + $0x138] sm:$0xff]
        %v502 = vld [vmem:[#allocation5 + $0x140] sm:$0xff]
        %v503 = vld [vmem:[#allocation5 + $0x148] sm:$0xff]
        %v504 = vld [vmem:[#allocation5 + $0x150] sm:$0xff]
        %v505 = vld [vmem:[#allocation5 + $0x158] sm:$0xff]
        %v506 = vld [vmem:[#allocation5 + $0x160] sm:$0xff]
        %v507 = vld [vmem:[#allocation5 + $0x168] sm:$0xff]
        %v508 = vld [vmem:[#allocation5 + $0x170] sm:$0xff]
        %v509 = vld [vmem:[#allocation5 + $0x178] sm:$0xff]
        %v510 = vld [vmem:[#allocation5 + $0x180] sm:$0xff]
        %v511 = vld [vmem:[#allocation5 + $0x188] sm:$0xff]
        %v512 = vld [vmem:[#allocation5 + $0x190] sm:$0xff]
        %v513 = vld [vmem:[#allocation5 + $0x198] sm:$0xff]
        %v514 = vld [vmem:[#allocation5 + $0x1a0] sm:$0xff]
        %v515 = vld [vmem:[#allocation5 + $0x1a8] sm:$0xff]
        %v516 = vld [vmem:[#allocation5 + $0x1b0] sm:$0xff]
        %v517 = vld [vmem:[#allocation5 + $0x1b8] sm:$0xff]
        %v518 = vld [vmem:[#allocation5 + $0x1c0] sm:$0xff]
        %v519 = vld [vmem:[#allocation5 + $0x1c8] sm:$0xff]
        %v520 = vld [vmem:[#allocation5 + $0x1d0] sm:$0xff]
        %v521 = vld [vmem:[#allocation5 + $0x1d8] sm:$0xff]
        %v522 = vld [vmem:[#allocation5 + $0x1e0] sm:$0xff]
        %v523 = vld [vmem:[#allocation5 + $0x1e8] sm:$0xff]
        %v524 = vld [vmem:[#allocation5 + $0x1f0] sm:$0xff]
        %v525 = vld [vmem:[#allocation5 + $0x1f8] sm:$0xff]
        %v526 = vld [vmem:[#allocation5 + $0x200] sm:$0xff]
        %v527 = vld [vmem:[#allocation5 + $0x208] sm:$0xff]
        %v528 = vld [vmem:[#allocation5 + $0x210] sm:$0xff]
        %v529 = vld [vmem:[#allocation5 + $0x218] sm:$0xff]
        %v530 = vld [vmem:[#allocation5 + $0x220] sm:$0xff]
        %v531 = vld [vmem:[#allocation5 + $0x228] sm:$0xff]
        %v532 = vld [vmem:[#allocation5 + $0x230] sm:$0xff]
        %v533 = vld [vmem:[#allocation5 + $0x238] sm:$0xff]
        %v534 = vld [vmem:[#allocation5 + $0x240] sm:$0xff]
        %v535 = vld [vmem:[#allocation5 + $0x248] sm:$0xff]
        %v536 = vld [vmem:[#allocation5 + $0x250] sm:$0xff]
        %v537 = vld [vmem:[#allocation5 + $0x258] sm:$0xff]
        %v538 = vld [vmem:[#allocation5 + $0x260] sm:$0xff]
        %v539 = vld [vmem:[#allocation5 + $0x268] sm:$0xff]
        %v540 = vld [vmem:[#allocation5 + $0x270] sm:$0xff]
        %v541 = vld [vmem:[#allocation5 + $0x278] sm:$0xff]
        %v542 = vld [vmem:[#allocation5 + $0x280] sm:$0xff]
        %v543 = vld [vmem:[#allocation5 + $0x288] sm:$0xff]
        %v544 = vld [vmem:[#allocation5 + $0x290] sm:$0xff]
        %v545 = vld [vmem:[#allocation5 + $0x298] sm:$0xff]
        %v546 = vld [vmem:[#allocation5 + $0x2a0] sm:$0xff]
        %v547 = vld [vmem:[#allocation5 + $0x2a8] sm:$0xff]
        %v548 = vld [vmem:[#allocation5 + $0x2b0] sm:$0xff]
        %v549 = vld [vmem:[#allocation5 + $0x2b8] sm:$0xff]
        %v550 = vld [vmem:[#allocation5 + $0x2c0] sm:$0xff]
        %v551 = vld [vmem:[#allocation5 + $0x2c8] sm:$0xff]
        %v552 = vld [vmem:[#allocation5 + $0x2d0] sm:$0xff]
        %v553 = vld [vmem:[#allocation5 + $0x2d8] sm:$0xff]
        %v554 = vld [vmem:[#allocation5 + $0x2e0] sm:$0xff]
        %v555 = vld [vmem:[#allocation5 + $0x2e8] sm:$0xff]
        %v556 = vld [vmem:[#allocation5 + $0x2f0] sm:$0xff]
        %v557 = vld [vmem:[#allocation5 + $0x2f8] sm:$0xff]
        %v558 = vld [vmem:[#allocation5 + $0x300] sm:$0xff]
        %v559 = vld [vmem:[#allocation5 + $0x308] sm:$0xff]
        %v560 = vld [vmem:[#allocation5 + $0x310] sm:$0xff]
        %v561 = vld [vmem:[#allocation5 + $0x318] sm:$0xff]
        %v562 = vld [vmem:[#allocation5 + $0x320] sm:$0xff]
        %v563 = vld [vmem:[#allocation5 + $0x328] sm:$0xff]
        %v564 = vld [vmem:[#allocation5 + $0x330] sm:$0xff]
        %v565 = vld [vmem:[#allocation5 + $0x338] sm:$0xff]
        %v566 = vld [vmem:[#allocation5 + $0x340] sm:$0xff]
        %v567 = vld [vmem:[#allocation5 + $0x348] sm:$0xff]
        %v568 = vld [vmem:[#allocation5 + $0x350] sm:$0xff]
        %v569 = vld [vmem:[#allocation5 + $0x358] sm:$0xff]
        %v570 = vld [vmem:[#allocation5 + $0x360] sm:$0xff]
        %v571 = vld [vmem:[#allocation5 + $0x368] sm:$0xff]
        %v572 = vld [vmem:[#allocation5 + $0x370] sm:$0xff]
        %v573 = vld [vmem:[#allocation5 + $0x378] sm:$0xff]
        %v574 = vld [vmem:[#allocation5 + $0x380] sm:$0xff]
        %v575 = vld [vmem:[#allocation5 + $0x388] sm:$0xff]
        %v576 = vld [vmem:[#allocation5 + $0x390] sm:$0xff]
        %v577 = vld [vmem:[#allocation5 + $0x398] sm:$0xff]
        %v578 = vld [vmem:[#allocation5 + $0x3a0] sm:$0xff]
        %v579 = vld [vmem:[#allocation5 + $0x3a8] sm:$0xff]
        %v580 = vld [vmem:[#allocation5 + $0x3b0] sm:$0xff]
        %v581 = vld [vmem:[#allocation5 + $0x3b8] sm:$0xff]
        %v582 = vld [vmem:[#allocation5 + $0x3c0] sm:$0xff]
        %v583 = vld [vmem:[#allocation5 + $0x3c8] sm:$0xff]
        %v584 = vld [vmem:[#allocation5 + $0x3d0] sm:$0xff]
        %v585 = vld [vmem:[#allocation5 + $0x3d8] sm:$0xff]
        %v586 = vld [vmem:[#allocation5 + $0x3e0] sm:$0xff]
        %v587 = vld [vmem:[#allocation5 + $0x3e8] sm:$0xff]
        %v588 = vld [vmem:[#allocation5 + $0x3f0] sm:$0xff]
        %v589 = vld [vmem:[#allocation5 + $0x3f8] sm:$0xff]
        %v590 = vld [vmem:[#allocation5 + $0x400] sm:$0xff]
        %v591 = vld [vmem:[#allocation5 + $0x408] sm:$0xff]
        %v592 = vld [vmem:[#allocation5 + $0x410] sm:$0xff]
        %v593 = vld [vmem:[#allocation5 + $0x418] sm:$0xff]
        %v594 = vld [vmem:[#allocation5 + $0x420] sm:$0xff]
        %v595 = vld [vmem:[#allocation5 + $0x428] sm:$0xff]
        %v596 = vld [vmem:[#allocation5 + $0x430] sm:$0xff]
        %v597 = vld [vmem:[#allocation5 + $0x438] sm:$0xff]
        %v598 = vld [vmem:[#allocation5 + $0x440] sm:$0xff]
        %v599 = vld [vmem:[#allocation5 + $0x448] sm:$0xff]
        %v600 = vld [vmem:[#allocation5 + $0x450] sm:$0xff]
        %v601 = vld [vmem:[#allocation5 + $0x458] sm:$0xff]
        %v602 = vld [vmem:[#allocation5 + $0x460] sm:$0xff]
        %v603 = vld [vmem:[#allocation5 + $0x468] sm:$0xff]
        %v604 = vld [vmem:[#allocation5 + $0x470] sm:$0xff]
        %v605 = vld [vmem:[#allocation5 + $0x478] sm:$0xff]
        %v606 = vld [vmem:[#allocation5 + $0x480] sm:$0xff]
        %v607 = vld [vmem:[#allocation5 + $0x488] sm:$0xff]
        %v608 = vld [vmem:[#allocation5 + $0x490] sm:$0xff]
        %v609 = vld [vmem:[#allocation5 + $0x498] sm:$0xff]
        %v610 = vld [vmem:[#allocation5 + $0x4a0] sm:$0xff]
        %v611 = vld [vmem:[#allocation5 + $0x4a8] sm:$0xff]
        %v612 = vld [vmem:[#allocation5 + $0x4b0] sm:$0xff]
        %v613 = vld [vmem:[#allocation5 + $0x4b8] sm:$0xff]
        %v614 = vld [vmem:[#allocation5 + $0x4c0] sm:$0xff]
        %v615 = vld [vmem:[#allocation5 + $0x4c8] sm:$0xff]
        %v616 = vld [vmem:[#allocation5 + $0x4d0] sm:$0xff]
        %v617 = vld [vmem:[#allocation5 + $0x4d8] sm:$0xff]
        %v618 = vld [vmem:[#allocation5 + $0x4e0] sm:$0xff]
        %v619 = vld [vmem:[#allocation5 + $0x4e8] sm:$0xff]
        %v620 = vld [vmem:[#allocation5 + $0x4f0] sm:$0xff]
        %v621 = vld [vmem:[#allocation5 + $0x4f8] sm:$0xff]
        %v622 = vld [vmem:[#allocation5 + $0x500] sm:$0xff]
        %v623 = vld [vmem:[#allocation5 + $0x508] sm:$0xff]
        %v624 = vld [vmem:[#allocation5 + $0x510] sm:$0xff]
        %v625 = vld [vmem:[#allocation5 + $0x518] sm:$0xff]
        %v626 = vld [vmem:[#allocation5 + $0x520] sm:$0xff]
        %v627 = vld [vmem:[#allocation5 + $0x528] sm:$0xff]
        %v628 = vld [vmem:[#allocation5 + $0x530] sm:$0xff]
        %v629 = vld [vmem:[#allocation5 + $0x538] sm:$0xff]
        %v630 = vld [vmem:[#allocation5 + $0x540] sm:$0xff]
        %v631 = vld [vmem:[#allocation5 + $0x548] sm:$0xff]
        %v632 = vld [vmem:[#allocation5 + $0x550] sm:$0xff]
        %v633 = vld [vmem:[#allocation5 + $0x558] sm:$0xff]
        %v634 = vld [vmem:[#allocation5 + $0x560] sm:$0xff]
        %v635 = vld [vmem:[#allocation5 + $0x568] sm:$0xff]
        %v636 = vld [vmem:[#allocation5 + $0x570] sm:$0xff]
        %v637 = vld [vmem:[#allocation5 + $0x578] sm:$0xff]
        %v638 = vld [vmem:[#allocation5 + $0x580] sm:$0xff]
        %v639 = vld [vmem:[#allocation5 + $0x588] sm:$0xff]
        %v640 = vld [vmem:[#allocation5 + $0x590] sm:$0xff]
        %v641 = vld [vmem:[#allocation5 + $0x598] sm:$0xff]
        %v642 = vld [vmem:[#allocation5 + $0x5a0] sm:$0xff]
        %v643 = vld [vmem:[#allocation5 + $0x5a8] sm:$0xff]
        %v644 = vld [vmem:[#allocation5 + $0x5b0] sm:$0xff]
        %v645 = vld [vmem:[#allocation5 + $0x5b8] sm:$0xff]
        %v646 = vld [vmem:[#allocation5 + $0x5c0] sm:$0xff]
        %v647 = vld [vmem:[#allocation5 + $0x5c8] sm:$0xff]
        %v648 = vld [vmem:[#allocation5 + $0x5d0] sm:$0xff]
        %v649 = vld [vmem:[#allocation5 + $0x5d8] sm:$0xff]
        %v650 = vld [vmem:[#allocation5 + $0x5e0] sm:$0xff]
        %v651 = vld [vmem:[#allocation5 + $0x5e8] sm:$0xff]
        %v652 = vld [vmem:[#allocation5 + $0x5f0] sm:$0xff]
        %v653 = vld [vmem:[#allocation5 + $0x5f8] sm:$0xff]
        %v654 = vld [vmem:[#allocation7] sm:$0xf]
        %v656 = vperm.slane %v654, 0
        %v657 = vperm.slane %v654, 1
        %v658 = vperm.slane %v654, 2
        %v659 = vperm.slane %v654, 3
        %v760 = vunpack.c.l.b16 %v366
        %v761 = vunpack.c.h.b16 %v366
        %v762 = vunpack.c.l.b16 %v367
        %v763 = vunpack.c.h.b16 %v367
        %v764 = vunpack.c.l.b16 %v368
        %v765 = vunpack.c.h.b16 %v368
        %v766 = vunpack.c.l.b16 %v369
        %v767 = vunpack.c.h.b16 %v369
        %v768 = vunpack.c.l.b16 %v370
        %v769 = vunpack.c.h.b16 %v370
        %v770 = vunpack.c.l.b16 %v371
        %v771 = vunpack.c.h.b16 %v371
        %v772 = vunpack.c.l.b16 %v372
        %v773 = vunpack.c.h.b16 %v372
        %v774 = vunpack.c.l.b16 %v373
        %v775 = vunpack.c.h.b16 %v373
        %v776 = vunpack.c.l.b16 %v374
        %v777 = vunpack.c.h.b16 %v374
        %v778 = vunpack.c.l.b16 %v375
        %v779 = vunpack.c.h.b16 %v375
        %v780 = vunpack.c.l.b16 %v376
        %v781 = vunpack.c.h.b16 %v376
        %v782 = vunpack.c.l.b16 %v377
        %v783 = vunpack.c.h.b16 %v377
        %v784 = vunpack.c.l.b16 %v378
        %v785 = vunpack.c.h.b16 %v378
        %v786 = vunpack.c.l.b16 %v379
        %v787 = vunpack.c.h.b16 %v379
        %v788 = vunpack.c.l.b16 %v380
        %v789 = vunpack.c.h.b16 %v380
        %v790 = vunpack.c.l.b16 %v381
        %v791 = vunpack.c.h.b16 %v381
        %v792 = vunpack.c.l.b16 %v382
        %v793 = vunpack.c.h.b16 %v382
        %v794 = vunpack.c.l.b16 %v383
        %v795 = vunpack.c.h.b16 %v383
        %v796 = vunpack.c.l.b16 %v384
        %v797 = vunpack.c.h.b16 %v384
        %v798 = vunpack.c.l.b16 %v385
        %v799 = vunpack.c.h.b16 %v385
        %v800 = vunpack.c.l.b16 %v386
        %v801 = vunpack.c.h.b16 %v386
        %v802 = vunpack.c.l.b16 %v387
        %v803 = vunpack.c.h.b16 %v387
        %v804 = vunpack.c.l.b16 %v388
        %v805 = vunpack.c.h.b16 %v388
        %v806 = vunpack.c.l.b16 %v389
        %v807 = vunpack.c.h.b16 %v389
        %v808 = vunpack.c.l.b16 %v390
        %v809 = vunpack.c.h.b16 %v390
        %v810 = vunpack.c.l.b16 %v391
        %v811 = vunpack.c.h.b16 %v391
        %v812 = vunpack.c.l.b16 %v392
        %v813 = vunpack.c.h.b16 %v392
        %v814 = vunpack.c.l.b16 %v393
        %v815 = vunpack.c.h.b16 %v393
        %v816 = vunpack.c.l.b16 %v394
        %v817 = vunpack.c.h.b16 %v394
        %v818 = vunpack.c.l.b16 %v395
        %v819 = vunpack.c.h.b16 %v395
        %v820 = vunpack.c.l.b16 %v396
        %v821 = vunpack.c.h.b16 %v396
        %v822 = vunpack.c.l.b16 %v397
        %v823 = vunpack.c.h.b16 %v397
        %v824 = vunpack.c.l.b16 %v398
        %v825 = vunpack.c.h.b16 %v398
        %v826 = vunpack.c.l.b16 %v399
        %v827 = vunpack.c.h.b16 %v399
        %v828 = vunpack.c.l.b16 %v400
        %v829 = vunpack.c.h.b16 %v400
        %v830 = vunpack.c.l.b16 %v401
        %v831 = vunpack.c.h.b16 %v401
        %v832 = vunpack.c.l.b16 %v402
        %v833 = vunpack.c.h.b16 %v402
        %v834 = vunpack.c.l.b16 %v403
        %v835 = vunpack.c.h.b16 %v403
        %v836 = vunpack.c.l.b16 %v404
        %v837 = vunpack.c.h.b16 %v404
        %v838 = vunpack.c.l.b16 %v405
        %v839 = vunpack.c.h.b16 %v405
        %v840 = vunpack.c.l.b16 %v406
        %v841 = vunpack.c.h.b16 %v406
        %v842 = vunpack.c.l.b16 %v407
        %v843 = vunpack.c.h.b16 %v407
        %v844 = vunpack.c.l.b16 %v408
        %v845 = vunpack.c.h.b16 %v408
        %v846 = vunpack.c.l.b16 %v409
        %v847 = vunpack.c.h.b16 %v409
        %v848 = vunpack.c.l.b16 %v410
        %v849 = vunpack.c.h.b16 %v410
        %v850 = vunpack.c.l.b16 %v411
        %v851 = vunpack.c.h.b16 %v411
        %v852 = vunpack.c.l.b16 %v412
        %v853 = vunpack.c.h.b16 %v412
        %v854 = vunpack.c.l.b16 %v413
        %v855 = vunpack.c.h.b16 %v413
        %v856 = vunpack.c.l.b16 %v414
        %v857 = vunpack.c.h.b16 %v414
        %v858 = vunpack.c.l.b16 %v415
        %v859 = vunpack.c.h.b16 %v415
        %v860 = vunpack.c.l.b16 %v416
        %v861 = vunpack.c.h.b16 %v416
        %v862 = vunpack.c.l.b16 %v417
        %v863 = vunpack.c.h.b16 %v417
        %v864 = vunpack.c.l.b16 %v418
        %v865 = vunpack.c.h.b16 %v418
        %v866 = vunpack.c.l.b16 %v419
        %v867 = vunpack.c.h.b16 %v419
        %v868 = vunpack.c.l.b16 %v420
        %v869 = vunpack.c.h.b16 %v420
        %v870 = vunpack.c.l.b16 %v421
        %v871 = vunpack.c.h.b16 %v421
        %v872 = vunpack.c.l.b16 %v422
        %v873 = vunpack.c.h.b16 %v422
        %v874 = vunpack.c.l.b16 %v423
        %v875 = vunpack.c.h.b16 %v423
        %v876 = vunpack.c.l.b16 %v424
        %v877 = vunpack.c.h.b16 %v424
        %v878 = vunpack.c.l.b16 %v425
        %v879 = vunpack.c.h.b16 %v425
        %v880 = vunpack.c.l.b16 %v426
        %v881 = vunpack.c.h.b16 %v426
        %v882 = vunpack.c.l.b16 %v427
        %v883 = vunpack.c.h.b16 %v427
        %v884 = vunpack.c.l.b16 %v428
        %v885 = vunpack.c.h.b16 %v428
        %v886 = vunpack.c.l.b16 %v429
        %v887 = vunpack.c.h.b16 %v429
        %v888 = vunpack.c.l.b16 %v430
        %v889 = vunpack.c.h.b16 %v430
        %v890 = vunpack.c.l.b16 %v431
        %v891 = vunpack.c.h.b16 %v431
        %v892 = vunpack.c.l.b16 %v432
        %v893 = vunpack.c.h.b16 %v432
        %v894 = vunpack.c.l.b16 %v433
        %v895 = vunpack.c.h.b16 %v433
        %v896 = vunpack.c.l.b16 %v434
        %v897 = vunpack.c.h.b16 %v434
        %v898 = vunpack.c.l.b16 %v435
        %v899 = vunpack.c.h.b16 %v435
        %v900 = vunpack.c.l.b16 %v436
        %v901 = vunpack.c.h.b16 %v436
        %v902 = vunpack.c.l.b16 %v437
        %v903 = vunpack.c.h.b16 %v437
        %v904 = vunpack.c.l.b16 %v438
        %v905 = vunpack.c.h.b16 %v438
        %v906 = vunpack.c.l.b16 %v439
        %v907 = vunpack.c.h.b16 %v439
        %v908 = vunpack.c.l.b16 %v440
        %v909 = vunpack.c.h.b16 %v440
        %v910 = vunpack.c.l.b16 %v441
        %v911 = vunpack.c.h.b16 %v441
        %v912 = vunpack.c.l.b16 %v442
        %v913 = vunpack.c.h.b16 %v442
        %v914 = vunpack.c.l.b16 %v443
        %v915 = vunpack.c.h.b16 %v443
        %v916 = vunpack.c.l.b16 %v444
        %v917 = vunpack.c.h.b16 %v444
        %v918 = vunpack.c.l.b16 %v445
        %v919 = vunpack.c.h.b16 %v445
        %v920 = vunpack.c.l.b16 %v446
        %v921 = vunpack.c.h.b16 %v446
        %v922 = vunpack.c.l.b16 %v447
        %v923 = vunpack.c.h.b16 %v447
        %v924 = vunpack.c.l.b16 %v448
        %v925 = vunpack.c.h.b16 %v448
        %v926 = vunpack.c.l.b16 %v449
        %v927 = vunpack.c.h.b16 %v449
        %v928 = vunpack.c.l.b16 %v450
        %v929 = vunpack.c.h.b16 %v450
        %v930 = vunpack.c.l.b16 %v451
        %v931 = vunpack.c.h.b16 %v451
        %v932 = vunpack.c.l.b16 %v452
        %v933 = vunpack.c.h.b16 %v452
        %v934 = vunpack.c.l.b16 %v453
        %v935 = vunpack.c.h.b16 %v453
        %v936 = vunpack.c.l.b16 %v454
        %v937 = vunpack.c.h.b16 %v454
        %v938 = vunpack.c.l.b16 %v455
        %v939 = vunpack.c.h.b16 %v455
        %v940 = vunpack.c.l.b16 %v456
        %v941 = vunpack.c.h.b16 %v456
        %v942 = vunpack.c.l.b16 %v457
        %v943 = vunpack.c.h.b16 %v457
        %v944 = vunpack.c.l.b16 %v458
        %v945 = vunpack.c.h.b16 %v458
        %v946 = vunpack.c.l.b16 %v459
        %v947 = vunpack.c.h.b16 %v459
        %v948 = vunpack.c.l.b16 %v460
        %v949 = vunpack.c.h.b16 %v460
        %v950 = vunpack.c.l.b16 %v461
        %v951 = vunpack.c.h.b16 %v461
        %v952 = vpack.c.b16 %v766, %v760
        %v953 = vpack.c.b16 %v767, %v761
        %v954 = vpack.c.b16 %v768, %v762
        %v955 = vpack.c.b16 %v769, %v763
        %v956 = vpack.c.b16 %v770, %v764
        %v957 = vpack.c.b16 %v771, %v765
        %v958 = vpack.c.b16 %v778, %v772
        %v959 = vpack.c.b16 %v779, %v773
        %v960 = vpack.c.b16 %v780, %v774
        %v961 = vpack.c.b16 %v781, %v775
        %v962 = vpack.c.b16 %v782, %v776
        %v963 = vpack.c.b16 %v783, %v777
        %v964 = vpack.c.b16 %v790, %v784
        %v965 = vpack.c.b16 %v791, %v785
        %v966 = vpack.c.b16 %v792, %v786
        %v967 = vpack.c.b16 %v793, %v787
        %v968 = vpack.c.b16 %v794, %v788
        %v969 = vpack.c.b16 %v795, %v789
        %v970 = vpack.c.b16 %v802, %v796
        %v971 = vpack.c.b16 %v803, %v797
        %v972 = vpack.c.b16 %v804, %v798
        %v973 = vpack.c.b16 %v805, %v799
        %v974 = vpack.c.b16 %v806, %v800
        %v975 = vpack.c.b16 %v807, %v801
        %v976 = vpack.c.b16 %v814, %v808
        %v977 = vpack.c.b16 %v815, %v809
        %v978 = vpack.c.b16 %v816, %v810
        %v979 = vpack.c.b16 %v817, %v811
        %v980 = vpack.c.b16 %v818, %v812
        %v981 = vpack.c.b16 %v819, %v813
        %v982 = vpack.c.b16 %v826, %v820
        %v983 = vpack.c.b16 %v827, %v821
        %v984 = vpack.c.b16 %v828, %v822
        %v985 = vpack.c.b16 %v829, %v823
        %v986 = vpack.c.b16 %v830, %v824
        %v987 = vpack.c.b16 %v831, %v825
        %v988 = vpack.c.b16 %v838, %v832
        %v989 = vpack.c.b16 %v839, %v833
        %v990 = vpack.c.b16 %v840, %v834
        %v991 = vpack.c.b16 %v841, %v835
        %v992 = vpack.c.b16 %v842, %v836
        %v993 = vpack.c.b16 %v843, %v837
        %v994 = vpack.c.b16 %v850, %v844
        %v995 = vpack.c.b16 %v851, %v845
        %v996 = vpack.c.b16 %v852, %v846
        %v997 = vpack.c.b16 %v853, %v847
        %v998 = vpack.c.b16 %v854, %v848
        %v999 = vpack.c.b16 %v855, %v849
        %v1000 = vpack.c.b16 %v862, %v856
        %v1001 = vpack.c.b16 %v863, %v857
        %v1002 = vpack.c.b16 %v864, %v858
        %v1003 = vpack.c.b16 %v865, %v859
        %v1004 = vpack.c.b16 %v866, %v860
        %v1005 = vpack.c.b16 %v867, %v861
        %v1006 = vpack.c.b16 %v874, %v868
        %v1007 = vpack.c.b16 %v875, %v869
        %v1008 = vpack.c.b16 %v876, %v870
        %v1009 = vpack.c.b16 %v877, %v871
        %v1010 = vpack.c.b16 %v878, %v872
        %v1011 = vpack.c.b16 %v879, %v873
        %v1012 = vpack.c.b16 %v886, %v880
        %v1013 = vpack.c.b16 %v887, %v881
        %v1014 = vpack.c.b16 %v888, %v882
        %v1015 = vpack.c.b16 %v889, %v883
        %v1016 = vpack.c.b16 %v890, %v884
        %v1017 = vpack.c.b16 %v891, %v885
        %v1018 = vpack.c.b16 %v898, %v892
        %v1019 = vpack.c.b16 %v899, %v893
        %v1020 = vpack.c.b16 %v900, %v894
        %v1021 = vpack.c.b16 %v901, %v895
        %v1022 = vpack.c.b16 %v902, %v896
        %v1023 = vpack.c.b16 %v903, %v897
        %v1024 = vpack.c.b16 %v910, %v904
        %v1025 = vpack.c.b16 %v911, %v905
        %v1026 = vpack.c.b16 %v912, %v906
        %v1027 = vpack.c.b16 %v913, %v907
        %v1028 = vpack.c.b16 %v914, %v908
        %v1029 = vpack.c.b16 %v915, %v909
        %v1030 = vpack.c.b16 %v922, %v916
        %v1031 = vpack.c.b16 %v923, %v917
        %v1032 = vpack.c.b16 %v924, %v918
        %v1033 = vpack.c.b16 %v925, %v919
        %v1034 = vpack.c.b16 %v926, %v920
        %v1035 = vpack.c.b16 %v927, %v921
        %v1036 = vpack.c.b16 %v934, %v928
        %v1037 = vpack.c.b16 %v935, %v929
        %v1038 = vpack.c.b16 %v936, %v930
        %v1039 = vpack.c.b16 %v937, %v931
        %v1040 = vpack.c.b16 %v938, %v932
        %v1041 = vpack.c.b16 %v939, %v933
        %v1042 = vpack.c.b16 %v946, %v940
        %v1043 = vpack.c.b16 %v947, %v941
        %v1044 = vpack.c.b16 %v948, %v942
        %v1045 = vpack.c.b16 %v949, %v943
        %v1046 = vpack.c.b16 %v950, %v944
        %v1047 = vpack.c.b16 %v951, %v945
        %v1336 = vunpack.c.l.b16 %v462
        %v1337 = vunpack.c.h.b16 %v462
        %v1338 = vunpack.c.l.b16 %v463
        %v1339 = vunpack.c.h.b16 %v463
        %v1340 = vunpack.c.l.b16 %v464
        %v1341 = vunpack.c.h.b16 %v464
        %v1342 = vunpack.c.l.b16 %v465
        %v1343 = vunpack.c.h.b16 %v465
        %v1344 = vunpack.c.l.b16 %v466
        %v1345 = vunpack.c.h.b16 %v466
        %v1346 = vunpack.c.l.b16 %v467
        %v1347 = vunpack.c.h.b16 %v467
        %v1348 = vunpack.c.l.b16 %v468
        %v1349 = vunpack.c.h.b16 %v468
        %v1350 = vunpack.c.l.b16 %v469
        %v1351 = vunpack.c.h.b16 %v469
        %v1352 = vunpack.c.l.b16 %v470
        %v1353 = vunpack.c.h.b16 %v470
        %v1354 = vunpack.c.l.b16 %v471
        %v1355 = vunpack.c.h.b16 %v471
        %v1356 = vunpack.c.l.b16 %v472
        %v1357 = vunpack.c.h.b16 %v472
        %v1358 = vunpack.c.l.b16 %v473
        %v1359 = vunpack.c.h.b16 %v473
        %v1360 = vunpack.c.l.b16 %v474
        %v1361 = vunpack.c.h.b16 %v474
        %v1362 = vunpack.c.l.b16 %v475
        %v1363 = vunpack.c.h.b16 %v475
        %v1364 = vunpack.c.l.b16 %v476
        %v1365 = vunpack.c.h.b16 %v476
        %v1366 = vunpack.c.l.b16 %v477
        %v1367 = vunpack.c.h.b16 %v477
        %v1368 = vunpack.c.l.b16 %v478
        %v1369 = vunpack.c.h.b16 %v478
        %v1370 = vunpack.c.l.b16 %v479
        %v1371 = vunpack.c.h.b16 %v479
        %v1372 = vunpack.c.l.b16 %v480
        %v1373 = vunpack.c.h.b16 %v480
        %v1374 = vunpack.c.l.b16 %v481
        %v1375 = vunpack.c.h.b16 %v481
        %v1376 = vunpack.c.l.b16 %v482
        %v1377 = vunpack.c.h.b16 %v482
        %v1378 = vunpack.c.l.b16 %v483
        %v1379 = vunpack.c.h.b16 %v483
        %v1380 = vunpack.c.l.b16 %v484
        %v1381 = vunpack.c.h.b16 %v484
        %v1382 = vunpack.c.l.b16 %v485
        %v1383 = vunpack.c.h.b16 %v485
        %v1384 = vunpack.c.l.b16 %v486
        %v1385 = vunpack.c.h.b16 %v486
        %v1386 = vunpack.c.l.b16 %v487
        %v1387 = vunpack.c.h.b16 %v487
        %v1388 = vunpack.c.l.b16 %v488
        %v1389 = vunpack.c.h.b16 %v488
        %v1390 = vunpack.c.l.b16 %v489
        %v1391 = vunpack.c.h.b16 %v489
        %v1392 = vunpack.c.l.b16 %v490
        %v1393 = vunpack.c.h.b16 %v490
        %v1394 = vunpack.c.l.b16 %v491
        %v1395 = vunpack.c.h.b16 %v491
        %v1396 = vunpack.c.l.b16 %v492
        %v1397 = vunpack.c.h.b16 %v492
        %v1398 = vunpack.c.l.b16 %v493
        %v1399 = vunpack.c.h.b16 %v493
        %v1400 = vunpack.c.l.b16 %v494
        %v1401 = vunpack.c.h.b16 %v494
        %v1402 = vunpack.c.l.b16 %v495
        %v1403 = vunpack.c.h.b16 %v495
        %v1404 = vunpack.c.l.b16 %v496
        %v1405 = vunpack.c.h.b16 %v496
        %v1406 = vunpack.c.l.b16 %v497
        %v1407 = vunpack.c.h.b16 %v497
        %v1408 = vunpack.c.l.b16 %v498
        %v1409 = vunpack.c.h.b16 %v498
        %v1410 = vunpack.c.l.b16 %v499
        %v1411 = vunpack.c.h.b16 %v499
        %v1412 = vunpack.c.l.b16 %v500
        %v1413 = vunpack.c.h.b16 %v500
        %v1414 = vunpack.c.l.b16 %v501
        %v1415 = vunpack.c.h.b16 %v501
        %v1416 = vunpack.c.l.b16 %v502
        %v1417 = vunpack.c.h.b16 %v502
        %v1418 = vunpack.c.l.b16 %v503
        %v1419 = vunpack.c.h.b16 %v503
        %v1420 = vunpack.c.l.b16 %v504
        %v1421 = vunpack.c.h.b16 %v504
        %v1422 = vunpack.c.l.b16 %v505
        %v1423 = vunpack.c.h.b16 %v505
        %v1424 = vunpack.c.l.b16 %v506
        %v1425 = vunpack.c.h.b16 %v506
        %v1426 = vunpack.c.l.b16 %v507
        %v1427 = vunpack.c.h.b16 %v507
        %v1428 = vunpack.c.l.b16 %v508
        %v1429 = vunpack.c.h.b16 %v508
        %v1430 = vunpack.c.l.b16 %v509
        %v1431 = vunpack.c.h.b16 %v509
        %v1432 = vunpack.c.l.b16 %v510
        %v1433 = vunpack.c.h.b16 %v510
        %v1434 = vunpack.c.l.b16 %v511
        %v1435 = vunpack.c.h.b16 %v511
        %v1436 = vunpack.c.l.b16 %v512
        %v1437 = vunpack.c.h.b16 %v512
        %v1438 = vunpack.c.l.b16 %v513
        %v1439 = vunpack.c.h.b16 %v513
        %v1440 = vunpack.c.l.b16 %v514
        %v1441 = vunpack.c.h.b16 %v514
        %v1442 = vunpack.c.l.b16 %v515
        %v1443 = vunpack.c.h.b16 %v515
        %v1444 = vunpack.c.l.b16 %v516
        %v1445 = vunpack.c.h.b16 %v516
        %v1446 = vunpack.c.l.b16 %v517
        %v1447 = vunpack.c.h.b16 %v517
        %v1448 = vunpack.c.l.b16 %v518
        %v1449 = vunpack.c.h.b16 %v518
        %v1450 = vunpack.c.l.b16 %v519
        %v1451 = vunpack.c.h.b16 %v519
        %v1452 = vunpack.c.l.b16 %v520
        %v1453 = vunpack.c.h.b16 %v520
        %v1454 = vunpack.c.l.b16 %v521
        %v1455 = vunpack.c.h.b16 %v521
        %v1456 = vunpack.c.l.b16 %v522
        %v1457 = vunpack.c.h.b16 %v522
        %v1458 = vunpack.c.l.b16 %v523
        %v1459 = vunpack.c.h.b16 %v523
        %v1460 = vunpack.c.l.b16 %v524
        %v1461 = vunpack.c.h.b16 %v524
        %v1462 = vunpack.c.l.b16 %v525
        %v1463 = vunpack.c.h.b16 %v525
        %v1464 = vunpack.c.l.b16 %v526
        %v1465 = vunpack.c.h.b16 %v526
        %v1466 = vunpack.c.l.b16 %v527
        %v1467 = vunpack.c.h.b16 %v527
        %v1468 = vunpack.c.l.b16 %v528
        %v1469 = vunpack.c.h.b16 %v528
        %v1470 = vunpack.c.l.b16 %v529
        %v1471 = vunpack.c.h.b16 %v529
        %v1472 = vunpack.c.l.b16 %v530
        %v1473 = vunpack.c.h.b16 %v530
        %v1474 = vunpack.c.l.b16 %v531
        %v1475 = vunpack.c.h.b16 %v531
        %v1476 = vunpack.c.l.b16 %v532
        %v1477 = vunpack.c.h.b16 %v532
        %v1478 = vunpack.c.l.b16 %v533
        %v1479 = vunpack.c.h.b16 %v533
        %v1480 = vunpack.c.l.b16 %v534
        %v1481 = vunpack.c.h.b16 %v534
        %v1482 = vunpack.c.l.b16 %v535
        %v1483 = vunpack.c.h.b16 %v535
        %v1484 = vunpack.c.l.b16 %v536
        %v1485 = vunpack.c.h.b16 %v536
        %v1486 = vunpack.c.l.b16 %v537
        %v1487 = vunpack.c.h.b16 %v537
        %v1488 = vunpack.c.l.b16 %v538
        %v1489 = vunpack.c.h.b16 %v538
        %v1490 = vunpack.c.l.b16 %v539
        %v1491 = vunpack.c.h.b16 %v539
        %v1492 = vunpack.c.l.b16 %v540
        %v1493 = vunpack.c.h.b16 %v540
        %v1494 = vunpack.c.l.b16 %v541
        %v1495 = vunpack.c.h.b16 %v541
        %v1496 = vunpack.c.l.b16 %v542
        %v1497 = vunpack.c.h.b16 %v542
        %v1498 = vunpack.c.l.b16 %v543
        %v1499 = vunpack.c.h.b16 %v543
        %v1500 = vunpack.c.l.b16 %v544
        %v1501 = vunpack.c.h.b16 %v544
        %v1502 = vunpack.c.l.b16 %v545
        %v1503 = vunpack.c.h.b16 %v545
        %v1504 = vunpack.c.l.b16 %v546
        %v1505 = vunpack.c.h.b16 %v546
        %v1506 = vunpack.c.l.b16 %v547
        %v1507 = vunpack.c.h.b16 %v547
        %v1508 = vunpack.c.l.b16 %v548
        %v1509 = vunpack.c.h.b16 %v548
        %v1510 = vunpack.c.l.b16 %v549
        %v1511 = vunpack.c.h.b16 %v549
        %v1512 = vunpack.c.l.b16 %v550
        %v1513 = vunpack.c.h.b16 %v550
        %v1514 = vunpack.c.l.b16 %v551
        %v1515 = vunpack.c.h.b16 %v551
        %v1516 = vunpack.c.l.b16 %v552
        %v1517 = vunpack.c.h.b16 %v552
        %v1518 = vunpack.c.l.b16 %v553
        %v1519 = vunpack.c.h.b16 %v553
        %v1520 = vunpack.c.l.b16 %v554
        %v1521 = vunpack.c.h.b16 %v554
        %v1522 = vunpack.c.l.b16 %v555
        %v1523 = vunpack.c.h.b16 %v555
        %v1524 = vunpack.c.l.b16 %v556
        %v1525 = vunpack.c.h.b16 %v556
        %v1526 = vunpack.c.l.b16 %v557
        %v1527 = vunpack.c.h.b16 %v557
        %v1528 = vunpack.c.l.b16 %v558
        %v1529 = vunpack.c.h.b16 %v558
        %v1530 = vunpack.c.l.b16 %v559
        %v1531 = vunpack.c.h.b16 %v559
        %v1532 = vunpack.c.l.b16 %v560
        %v1533 = vunpack.c.h.b16 %v560
        %v1534 = vunpack.c.l.b16 %v561
        %v1535 = vunpack.c.h.b16 %v561
        %v1536 = vunpack.c.l.b16 %v562
        %v1537 = vunpack.c.h.b16 %v562
        %v1538 = vunpack.c.l.b16 %v563
        %v1539 = vunpack.c.h.b16 %v563
        %v1540 = vunpack.c.l.b16 %v564
        %v1541 = vunpack.c.h.b16 %v564
        %v1542 = vunpack.c.l.b16 %v565
        %v1543 = vunpack.c.h.b16 %v565
        %v1544 = vunpack.c.l.b16 %v566
        %v1545 = vunpack.c.h.b16 %v566
        %v1546 = vunpack.c.l.b16 %v567
        %v1547 = vunpack.c.h.b16 %v567
        %v1548 = vunpack.c.l.b16 %v568
        %v1549 = vunpack.c.h.b16 %v568
        %v1550 = vunpack.c.l.b16 %v569
        %v1551 = vunpack.c.h.b16 %v569
        %v1552 = vunpack.c.l.b16 %v570
        %v1553 = vunpack.c.h.b16 %v570
        %v1554 = vunpack.c.l.b16 %v571
        %v1555 = vunpack.c.h.b16 %v571
        %v1556 = vunpack.c.l.b16 %v572
        %v1557 = vunpack.c.h.b16 %v572
        %v1558 = vunpack.c.l.b16 %v573
        %v1559 = vunpack.c.h.b16 %v573
        %v1560 = vunpack.c.l.b16 %v574
        %v1561 = vunpack.c.h.b16 %v574
        %v1562 = vunpack.c.l.b16 %v575
        %v1563 = vunpack.c.h.b16 %v575
        %v1564 = vunpack.c.l.b16 %v576
        %v1565 = vunpack.c.h.b16 %v576
        %v1566 = vunpack.c.l.b16 %v577
        %v1567 = vunpack.c.h.b16 %v577
        %v1568 = vunpack.c.l.b16 %v578
        %v1569 = vunpack.c.h.b16 %v578
        %v1570 = vunpack.c.l.b16 %v579
        %v1571 = vunpack.c.h.b16 %v579
        %v1572 = vunpack.c.l.b16 %v580
        %v1573 = vunpack.c.h.b16 %v580
        %v1574 = vunpack.c.l.b16 %v581
        %v1575 = vunpack.c.h.b16 %v581
        %v1576 = vunpack.c.l.b16 %v582
        %v1577 = vunpack.c.h.b16 %v582
        %v1578 = vunpack.c.l.b16 %v583
        %v1579 = vunpack.c.h.b16 %v583
        %v1580 = vunpack.c.l.b16 %v584
        %v1581 = vunpack.c.h.b16 %v584
        %v1582 = vunpack.c.l.b16 %v585
        %v1583 = vunpack.c.h.b16 %v585
        %v1584 = vunpack.c.l.b16 %v586
        %v1585 = vunpack.c.h.b16 %v586
        %v1586 = vunpack.c.l.b16 %v587
        %v1587 = vunpack.c.h.b16 %v587
        %v1588 = vunpack.c.l.b16 %v588
        %v1589 = vunpack.c.h.b16 %v588
        %v1590 = vunpack.c.l.b16 %v589
        %v1591 = vunpack.c.h.b16 %v589
        %v1592 = vunpack.c.l.b16 %v590
        %v1593 = vunpack.c.h.b16 %v590
        %v1594 = vunpack.c.l.b16 %v591
        %v1595 = vunpack.c.h.b16 %v591
        %v1596 = vunpack.c.l.b16 %v592
        %v1597 = vunpack.c.h.b16 %v592
        %v1598 = vunpack.c.l.b16 %v593
        %v1599 = vunpack.c.h.b16 %v593
        %v1600 = vunpack.c.l.b16 %v594
        %v1601 = vunpack.c.h.b16 %v594
        %v1602 = vunpack.c.l.b16 %v595
        %v1603 = vunpack.c.h.b16 %v595
        %v1604 = vunpack.c.l.b16 %v596
        %v1605 = vunpack.c.h.b16 %v596
        %v1606 = vunpack.c.l.b16 %v597
        %v1607 = vunpack.c.h.b16 %v597
        %v1608 = vunpack.c.l.b16 %v598
        %v1609 = vunpack.c.h.b16 %v598
        %v1610 = vunpack.c.l.b16 %v599
        %v1611 = vunpack.c.h.b16 %v599
        %v1612 = vunpack.c.l.b16 %v600
        %v1613 = vunpack.c.h.b16 %v600
        %v1614 = vunpack.c.l.b16 %v601
        %v1615 = vunpack.c.h.b16 %v601
        %v1616 = vunpack.c.l.b16 %v602
        %v1617 = vunpack.c.h.b16 %v602
        %v1618 = vunpack.c.l.b16 %v603
        %v1619 = vunpack.c.h.b16 %v603
        %v1620 = vunpack.c.l.b16 %v604
        %v1621 = vunpack.c.h.b16 %v604
        %v1622 = vunpack.c.l.b16 %v605
        %v1623 = vunpack.c.h.b16 %v605
        %v1624 = vunpack.c.l.b16 %v606
        %v1625 = vunpack.c.h.b16 %v606
        %v1626 = vunpack.c.l.b16 %v607
        %v1627 = vunpack.c.h.b16 %v607
        %v1628 = vunpack.c.l.b16 %v608
        %v1629 = vunpack.c.h.b16 %v608
        %v1630 = vunpack.c.l.b16 %v609
        %v1631 = vunpack.c.h.b16 %v609
        %v1632 = vunpack.c.l.b16 %v610
        %v1633 = vunpack.c.h.b16 %v610
        %v1634 = vunpack.c.l.b16 %v611
        %v1635 = vunpack.c.h.b16 %v611
        %v1636 = vunpack.c.l.b16 %v612
        %v1637 = vunpack.c.h.b16 %v612
        %v1638 = vunpack.c.l.b16 %v613
        %v1639 = vunpack.c.h.b16 %v613
        %v1640 = vunpack.c.l.b16 %v614
        %v1641 = vunpack.c.h.b16 %v614
        %v1642 = vunpack.c.l.b16 %v615
        %v1643 = vunpack.c.h.b16 %v615
        %v1644 = vunpack.c.l.b16 %v616
        %v1645 = vunpack.c.h.b16 %v616
        %v1646 = vunpack.c.l.b16 %v617
        %v1647 = vunpack.c.h.b16 %v617
        %v1648 = vunpack.c.l.b16 %v618
        %v1649 = vunpack.c.h.b16 %v618
        %v1650 = vunpack.c.l.b16 %v619
        %v1651 = vunpack.c.h.b16 %v619
        %v1652 = vunpack.c.l.b16 %v620
        %v1653 = vunpack.c.h.b16 %v620
        %v1654 = vunpack.c.l.b16 %v621
        %v1655 = vunpack.c.h.b16 %v621
        %v1656 = vunpack.c.l.b16 %v622
        %v1657 = vunpack.c.h.b16 %v622
        %v1658 = vunpack.c.l.b16 %v623
        %v1659 = vunpack.c.h.b16 %v623
        %v1660 = vunpack.c.l.b16 %v624
        %v1661 = vunpack.c.h.b16 %v624
        %v1662 = vunpack.c.l.b16 %v625
        %v1663 = vunpack.c.h.b16 %v625
        %v1664 = vunpack.c.l.b16 %v626
        %v1665 = vunpack.c.h.b16 %v626
        %v1666 = vunpack.c.l.b16 %v627
        %v1667 = vunpack.c.h.b16 %v627
        %v1668 = vunpack.c.l.b16 %v628
        %v1669 = vunpack.c.h.b16 %v628
        %v1670 = vunpack.c.l.b16 %v629
        %v1671 = vunpack.c.h.b16 %v629
        %v1672 = vunpack.c.l.b16 %v630
        %v1673 = vunpack.c.h.b16 %v630
        %v1674 = vunpack.c.l.b16 %v631
        %v1675 = vunpack.c.h.b16 %v631
        %v1676 = vunpack.c.l.b16 %v632
        %v1677 = vunpack.c.h.b16 %v632
        %v1678 = vunpack.c.l.b16 %v633
        %v1679 = vunpack.c.h.b16 %v633
        %v1680 = vunpack.c.l.b16 %v634
        %v1681 = vunpack.c.h.b16 %v634
        %v1682 = vunpack.c.l.b16 %v635
        %v1683 = vunpack.c.h.b16 %v635
        %v1684 = vunpack.c.l.b16 %v636
        %v1685 = vunpack.c.h.b16 %v636
        %v1686 = vunpack.c.l.b16 %v637
        %v1687 = vunpack.c.h.b16 %v637
        %v1688 = vunpack.c.l.b16 %v638
        %v1689 = vunpack.c.h.b16 %v638
        %v1690 = vunpack.c.l.b16 %v639
        %v1691 = vunpack.c.h.b16 %v639
        %v1692 = vunpack.c.l.b16 %v640
        %v1693 = vunpack.c.h.b16 %v640
        %v1694 = vunpack.c.l.b16 %v641
        %v1695 = vunpack.c.h.b16 %v641
        %v1696 = vunpack.c.l.b16 %v642
        %v1697 = vunpack.c.h.b16 %v642
        %v1698 = vunpack.c.l.b16 %v643
        %v1699 = vunpack.c.h.b16 %v643
        %v1700 = vunpack.c.l.b16 %v644
        %v1701 = vunpack.c.h.b16 %v644
        %v1702 = vunpack.c.l.b16 %v645
        %v1703 = vunpack.c.h.b16 %v645
        %v1704 = vunpack.c.l.b16 %v646
        %v1705 = vunpack.c.h.b16 %v646
        %v1706 = vunpack.c.l.b16 %v647
        %v1707 = vunpack.c.h.b16 %v647
        %v1708 = vunpack.c.l.b16 %v648
        %v1709 = vunpack.c.h.b16 %v648
        %v1710 = vunpack.c.l.b16 %v649
        %v1711 = vunpack.c.h.b16 %v649
        %v1712 = vunpack.c.l.b16 %v650
        %v1713 = vunpack.c.h.b16 %v650
        %v1714 = vunpack.c.l.b16 %v651
        %v1715 = vunpack.c.h.b16 %v651
        %v1716 = vunpack.c.l.b16 %v652
        %v1717 = vunpack.c.h.b16 %v652
        %v1718 = vunpack.c.l.b16 %v653
        %v1719 = vunpack.c.h.b16 %v653
        %v1720 = vpack.c.b16 %v1340, %v1336
        %v1721 = vpack.c.b16 %v1341, %v1337
        %v1722 = vpack.c.b16 %v1342, %v1338
        %v1723 = vpack.c.b16 %v1343, %v1339
        %v1724 = vpack.c.b16 %v1348, %v1344
        %v1725 = vpack.c.b16 %v1349, %v1345
        %v1726 = vpack.c.b16 %v1350, %v1346
        %v1727 = vpack.c.b16 %v1351, %v1347
        %v1728 = vpack.c.b16 %v1356, %v1352
        %v1729 = vpack.c.b16 %v1357, %v1353
        %v1730 = vpack.c.b16 %v1358, %v1354
        %v1731 = vpack.c.b16 %v1359, %v1355
        %v1732 = vpack.c.b16 %v1364, %v1360
        %v1733 = vpack.c.b16 %v1365, %v1361
        %v1734 = vpack.c.b16 %v1366, %v1362
        %v1735 = vpack.c.b16 %v1367, %v1363
        %v1736 = vpack.c.b16 %v1372, %v1368
        %v1737 = vpack.c.b16 %v1373, %v1369
        %v1738 = vpack.c.b16 %v1374, %v1370
        %v1739 = vpack.c.b16 %v1375, %v1371
        %v1740 = vpack.c.b16 %v1380, %v1376
        %v1741 = vpack.c.b16 %v1381, %v1377
        %v1742 = vpack.c.b16 %v1382, %v1378
        %v1743 = vpack.c.b16 %v1383, %v1379
        %v1744 = vpack.c.b16 %v1388, %v1384
        %v1745 = vpack.c.b16 %v1389, %v1385
        %v1746 = vpack.c.b16 %v1390, %v1386
        %v1747 = vpack.c.b16 %v1391, %v1387
        %v1748 = vpack.c.b16 %v1396, %v1392
        %v1749 = vpack.c.b16 %v1397, %v1393
        %v1750 = vpack.c.b16 %v1398, %v1394
        %v1751 = vpack.c.b16 %v1399, %v1395
        %v1752 = vpack.c.b16 %v1404, %v1400
        %v1753 = vpack.c.b16 %v1405, %v1401
        %v1754 = vpack.c.b16 %v1406, %v1402
        %v1755 = vpack.c.b16 %v1407, %v1403
        %v1756 = vpack.c.b16 %v1412, %v1408
        %v1757 = vpack.c.b16 %v1413, %v1409
        %v1758 = vpack.c.b16 %v1414, %v1410
        %v1759 = vpack.c.b16 %v1415, %v1411
        %v1760 = vpack.c.b16 %v1420, %v1416
        %v1761 = vpack.c.b16 %v1421, %v1417
        %v1762 = vpack.c.b16 %v1422, %v1418
        %v1763 = vpack.c.b16 %v1423, %v1419
        %v1764 = vpack.c.b16 %v1428, %v1424
        %v1765 = vpack.c.b16 %v1429, %v1425
        %v1766 = vpack.c.b16 %v1430, %v1426
        %v1767 = vpack.c.b16 %v1431, %v1427
        %v1768 = vpack.c.b16 %v1436, %v1432
        %v1769 = vpack.c.b16 %v1437, %v1433
        %v1770 = vpack.c.b16 %v1438, %v1434
        %v1771 = vpack.c.b16 %v1439, %v1435
        %v1772 = vpack.c.b16 %v1444, %v1440
        %v1773 = vpack.c.b16 %v1445, %v1441
        %v1774 = vpack.c.b16 %v1446, %v1442
        %v1775 = vpack.c.b16 %v1447, %v1443
        %v1776 = vpack.c.b16 %v1452, %v1448
        %v1777 = vpack.c.b16 %v1453, %v1449
        %v1778 = vpack.c.b16 %v1454, %v1450
        %v1779 = vpack.c.b16 %v1455, %v1451
        %v1780 = vpack.c.b16 %v1460, %v1456
        %v1781 = vpack.c.b16 %v1461, %v1457
        %v1782 = vpack.c.b16 %v1462, %v1458
        %v1783 = vpack.c.b16 %v1463, %v1459
        %v1784 = vpack.c.b16 %v1468, %v1464
        %v1785 = vpack.c.b16 %v1469, %v1465
        %v1786 = vpack.c.b16 %v1470, %v1466
        %v1787 = vpack.c.b16 %v1471, %v1467
        %v1788 = vpack.c.b16 %v1476, %v1472
        %v1789 = vpack.c.b16 %v1477, %v1473
        %v1790 = vpack.c.b16 %v1478, %v1474
        %v1791 = vpack.c.b16 %v1479, %v1475
        %v1792 = vpack.c.b16 %v1484, %v1480
        %v1793 = vpack.c.b16 %v1485, %v1481
        %v1794 = vpack.c.b16 %v1486, %v1482
        %v1795 = vpack.c.b16 %v1487, %v1483
        %v1796 = vpack.c.b16 %v1492, %v1488
        %v1797 = vpack.c.b16 %v1493, %v1489
        %v1798 = vpack.c.b16 %v1494, %v1490
        %v1799 = vpack.c.b16 %v1495, %v1491
        %v1800 = vpack.c.b16 %v1500, %v1496
        %v1801 = vpack.c.b16 %v1501, %v1497
        %v1802 = vpack.c.b16 %v1502, %v1498
        %v1803 = vpack.c.b16 %v1503, %v1499
        %v1804 = vpack.c.b16 %v1508, %v1504
        %v1805 = vpack.c.b16 %v1509, %v1505
        %v1806 = vpack.c.b16 %v1510, %v1506
        %v1807 = vpack.c.b16 %v1511, %v1507
        %v1808 = vpack.c.b16 %v1516, %v1512
        %v1809 = vpack.c.b16 %v1517, %v1513
        %v1810 = vpack.c.b16 %v1518, %v1514
        %v1811 = vpack.c.b16 %v1519, %v1515
        %v1812 = vpack.c.b16 %v1524, %v1520
        %v1813 = vpack.c.b16 %v1525, %v1521
        %v1814 = vpack.c.b16 %v1526, %v1522
        %v1815 = vpack.c.b16 %v1527, %v1523
        %v1816 = vpack.c.b16 %v1532, %v1528
        %v1817 = vpack.c.b16 %v1533, %v1529
        %v1818 = vpack.c.b16 %v1534, %v1530
        %v1819 = vpack.c.b16 %v1535, %v1531
        %v1820 = vpack.c.b16 %v1540, %v1536
        %v1821 = vpack.c.b16 %v1541, %v1537
        %v1822 = vpack.c.b16 %v1542, %v1538
        %v1823 = vpack.c.b16 %v1543, %v1539
        %v1824 = vpack.c.b16 %v1548, %v1544
        %v1825 = vpack.c.b16 %v1549, %v1545
        %v1826 = vpack.c.b16 %v1550, %v1546
        %v1827 = vpack.c.b16 %v1551, %v1547
        %v1828 = vpack.c.b16 %v1556, %v1552
        %v1829 = vpack.c.b16 %v1557, %v1553
        %v1830 = vpack.c.b16 %v1558, %v1554
        %v1831 = vpack.c.b16 %v1559, %v1555
        %v1832 = vpack.c.b16 %v1564, %v1560
        %v1833 = vpack.c.b16 %v1565, %v1561
        %v1834 = vpack.c.b16 %v1566, %v1562
        %v1835 = vpack.c.b16 %v1567, %v1563
        %v1836 = vpack.c.b16 %v1572, %v1568
        %v1837 = vpack.c.b16 %v1573, %v1569
        %v1838 = vpack.c.b16 %v1574, %v1570
        %v1839 = vpack.c.b16 %v1575, %v1571
        %v1840 = vpack.c.b16 %v1580, %v1576
        %v1841 = vpack.c.b16 %v1581, %v1577
        %v1842 = vpack.c.b16 %v1582, %v1578
        %v1843 = vpack.c.b16 %v1583, %v1579
        %v1844 = vpack.c.b16 %v1588, %v1584
        %v1845 = vpack.c.b16 %v1589, %v1585
        %v1846 = vpack.c.b16 %v1590, %v1586
        %v1847 = vpack.c.b16 %v1591, %v1587
        %v1848 = vpack.c.b16 %v1596, %v1592
        %v1849 = vpack.c.b16 %v1597, %v1593
        %v1850 = vpack.c.b16 %v1598, %v1594
        %v1851 = vpack.c.b16 %v1599, %v1595
        %v1852 = vpack.c.b16 %v1604, %v1600
        %v1853 = vpack.c.b16 %v1605, %v1601
        %v1854 = vpack.c.b16 %v1606, %v1602
        %v1855 = vpack.c.b16 %v1607, %v1603
        %v1856 = vpack.c.b16 %v1612, %v1608
        %v1857 = vpack.c.b16 %v1613, %v1609
        %v1858 = vpack.c.b16 %v1614, %v1610
        %v1859 = vpack.c.b16 %v1615, %v1611
        %v1860 = vpack.c.b16 %v1620, %v1616
        %v1861 = vpack.c.b16 %v1621, %v1617
        %v1862 = vpack.c.b16 %v1622, %v1618
        %v1863 = vpack.c.b16 %v1623, %v1619
        %v1864 = vpack.c.b16 %v1628, %v1624
        %v1865 = vpack.c.b16 %v1629, %v1625
        %v1866 = vpack.c.b16 %v1630, %v1626
        %v1867 = vpack.c.b16 %v1631, %v1627
        %v1868 = vpack.c.b16 %v1636, %v1632
        %v1869 = vpack.c.b16 %v1637, %v1633
        %v1870 = vpack.c.b16 %v1638, %v1634
        %v1871 = vpack.c.b16 %v1639, %v1635
        %v1872 = vpack.c.b16 %v1644, %v1640
        %v1873 = vpack.c.b16 %v1645, %v1641
        %v1874 = vpack.c.b16 %v1646, %v1642
        %v1875 = vpack.c.b16 %v1647, %v1643
        %v1876 = vpack.c.b16 %v1652, %v1648
        %v1877 = vpack.c.b16 %v1653, %v1649
        %v1878 = vpack.c.b16 %v1654, %v1650
        %v1879 = vpack.c.b16 %v1655, %v1651
        %v1880 = vpack.c.b16 %v1660, %v1656
        %v1881 = vpack.c.b16 %v1661, %v1657
        %v1882 = vpack.c.b16 %v1662, %v1658
        %v1883 = vpack.c.b16 %v1663, %v1659
        %v1884 = vpack.c.b16 %v1668, %v1664
        %v1885 = vpack.c.b16 %v1669, %v1665
        %v1886 = vpack.c.b16 %v1670, %v1666
        %v1887 = vpack.c.b16 %v1671, %v1667
        %v1888 = vpack.c.b16 %v1676, %v1672
        %v1889 = vpack.c.b16 %v1677, %v1673
        %v1890 = vpack.c.b16 %v1678, %v1674
        %v1891 = vpack.c.b16 %v1679, %v1675
        %v1892 = vpack.c.b16 %v1684, %v1680
        %v1893 = vpack.c.b16 %v1685, %v1681
        %v1894 = vpack.c.b16 %v1686, %v1682
        %v1895 = vpack.c.b16 %v1687, %v1683
        %v1896 = vpack.c.b16 %v1692, %v1688
        %v1897 = vpack.c.b16 %v1693, %v1689
        %v1898 = vpack.c.b16 %v1694, %v1690
        %v1899 = vpack.c.b16 %v1695, %v1691
        %v1900 = vpack.c.b16 %v1700, %v1696
        %v1901 = vpack.c.b16 %v1701, %v1697
        %v1902 = vpack.c.b16 %v1702, %v1698
        %v1903 = vpack.c.b16 %v1703, %v1699
        %v1904 = vpack.c.b16 %v1708, %v1704
        %v1905 = vpack.c.b16 %v1709, %v1705
        %v1906 = vpack.c.b16 %v1710, %v1706
        %v1907 = vpack.c.b16 %v1711, %v1707
        %v1908 = vpack.c.b16 %v1716, %v1712
        %v1909 = vpack.c.b16 %v1717, %v1713
        %v1910 = vpack.c.b16 %v1718, %v1714
        %v1911 = vpack.c.b16 %v1719, %v1715
        %2104 = vmatpush.bf16.msra.mxu0 %v1748
        %2105 = vmatpush.bf16.msra.mxu0 %v1744
        %2106 = vmatpush.bf16.msra.mxu0 %v1740
        %2107 = vmatpush.bf16.msra.mxu0 %v1736
        %2108 = vmatpush.bf16.msra.mxu0 %v1732
        %2109 = vmatpush.bf16.msra.mxu0 %v1728
        %2110 = vmatpush.bf16.msra.mxu0 %v1724
        %2111 = vmatpush.bf16.msra.mxu0 %v1720
        %2112 = vmatmul.bf16.gmra.mxu0 %v952
        %v2113 = vpop.f32.mrf.mxu0
        %v2114 = vadd.f32 %v656, %v2113
        %v2115 = vpop.f32.mrf.mxu0
        %v2116 = vadd.f32 %v656, %v2115
        %2117 = vmatmul.bf16.gmra.mxu0 %v958
        %v2118 = vpop.f32.mrf.mxu0
        %v2119 = vadd.f32 %v656, %v2118
        %v2120 = vpop.f32.mrf.mxu0
        %v2121 = vadd.f32 %v656, %v2120
        %2122 = vmatmul.bf16.gmra.mxu0 %v964
        %v2123 = vpop.f32.mrf.mxu0
        %v2124 = vadd.f32 %v656, %v2123
        %v2125 = vpop.f32.mrf.mxu0
        %v2126 = vadd.f32 %v656, %v2125
        %2127 = vmatmul.bf16.gmra.mxu0 %v970
        %v2128 = vpop.f32.mrf.mxu0
        %v2129 = vadd.f32 %v656, %v2128
        %v2130 = vpop.f32.mrf.mxu0
        %v2131 = vadd.f32 %v656, %v2130
        %2132 = vmatmul.bf16.gmra.mxu0 %v976
        %v2133 = vpop.f32.mrf.mxu0
        %v2134 = vadd.f32 %v656, %v2133
        %v2135 = vpop.f32.mrf.mxu0
        %v2136 = vadd.f32 %v656, %v2135
        %2137 = vmatmul.bf16.gmra.mxu0 %v982
        %v2138 = vpop.f32.mrf.mxu0
        %v2139 = vadd.f32 %v656, %v2138
        %v2140 = vpop.f32.mrf.mxu0
        %v2141 = vadd.f32 %v656, %v2140
        %2142 = vmatmul.bf16.gmra.mxu0 %v988
        %v2143 = vpop.f32.mrf.mxu0
        %v2144 = vadd.f32 %v656, %v2143
        %v2145 = vpop.f32.mrf.mxu0
        %v2146 = vadd.f32 %v656, %v2145
        %2147 = vmatmul.bf16.gmra.mxu0 %v994
        %v2148 = vpop.f32.mrf.mxu0
        %v2149 = vadd.f32 %v656, %v2148
        %v2150 = vpop.f32.mrf.mxu0
        %v2151 = vadd.f32 %v656, %v2150
        %2152 = vmatmul.bf16.gmra.mxu0 %v1000
        %v2153 = vpop.f32.mrf.mxu0
        %v2154 = vadd.f32 %v656, %v2153
        %v2155 = vpop.f32.mrf.mxu0
        %v2156 = vadd.f32 %v656, %v2155
        %2157 = vmatmul.bf16.gmra.mxu0 %v1006
        %v2158 = vpop.f32.mrf.mxu0
        %v2159 = vadd.f32 %v656, %v2158
        %v2160 = vpop.f32.mrf.mxu0
        %v2161 = vadd.f32 %v656, %v2160
        %2162 = vmatmul.bf16.gmra.mxu0 %v1012
        %v2163 = vpop.f32.mrf.mxu0
        %v2164 = vadd.f32 %v656, %v2163
        %v2165 = vpop.f32.mrf.mxu0
        %v2166 = vadd.f32 %v656, %v2165
        %2167 = vmatmul.bf16.gmra.mxu0 %v1018
        %v2168 = vpop.f32.mrf.mxu0
        %v2169 = vadd.f32 %v656, %v2168
        %v2170 = vpop.f32.mrf.mxu0
        %v2171 = vadd.f32 %v656, %v2170
        %2172 = vmatmul.bf16.gmra.mxu0 %v1024
        %v2173 = vpop.f32.mrf.mxu0
        %v2174 = vadd.f32 %v656, %v2173
        %v2175 = vpop.f32.mrf.mxu0
        %v2176 = vadd.f32 %v656, %v2175
        %2177 = vmatmul.bf16.gmra.mxu0 %v1030
        %v2178 = vpop.f32.mrf.mxu0
        %v2179 = vadd.f32 %v656, %v2178
        %v2180 = vpop.f32.mrf.mxu0
        %v2181 = vadd.f32 %v656, %v2180
        %2182 = vmatmul.bf16.gmra.mxu0 %v1036
        %v2183 = vpop.f32.mrf.mxu0
        %v2184 = vadd.f32 %v656, %v2183
        %v2185 = vpop.f32.mrf.mxu0
        %v2186 = vadd.f32 %v656, %v2185
        %2187 = vmatmul.bf16.gmra.mxu0 %v1042
        %v2188 = vpop.f32.mrf.mxu0
        %v2189 = vadd.f32 %v656, %v2188
        %v2190 = vpop.f32.mrf.mxu0
        %v2191 = vadd.f32 %v656, %v2190
        %2192 = vdwg.mxu0
        %2193 = vmatpush.bf16.msra.mxu0 %v1780
        %2194 = vmatpush.bf16.msra.mxu0 %v1776
        %2195 = vmatpush.bf16.msra.mxu0 %v1772
        %2196 = vmatpush.bf16.msra.mxu0 %v1768
        %2197 = vmatpush.bf16.msra.mxu0 %v1764
        %2198 = vmatpush.bf16.msra.mxu0 %v1760
        %2199 = vmatpush.bf16.msra.mxu0 %v1756
        %2200 = vmatpush.bf16.msra.mxu0 %v1752
        %2201 = vmatmul.bf16.gmra.mxu0 %v953
        %v2202 = vpop.f32.mrf.mxu0
        %v2203 = vadd.f32 %v2114, %v2202
        %v2204 = vpop.f32.mrf.mxu0
        %v2205 = vadd.f32 %v2116, %v2204
        %2206 = vmatmul.bf16.gmra.mxu0 %v959
        %v2207 = vpop.f32.mrf.mxu0
        %v2208 = vadd.f32 %v2119, %v2207
        %v2209 = vpop.f32.mrf.mxu0
        %v2210 = vadd.f32 %v2121, %v2209
        %2211 = vmatmul.bf16.gmra.mxu0 %v965
        %v2212 = vpop.f32.mrf.mxu0
        %v2213 = vadd.f32 %v2124, %v2212
        %v2214 = vpop.f32.mrf.mxu0
        %v2215 = vadd.f32 %v2126, %v2214
        %2216 = vmatmul.bf16.gmra.mxu0 %v971
        %v2217 = vpop.f32.mrf.mxu0
        %v2218 = vadd.f32 %v2129, %v2217
        %v2219 = vpop.f32.mrf.mxu0
        %v2220 = vadd.f32 %v2131, %v2219
        %2221 = vmatmul.bf16.gmra.mxu0 %v977
        %v2222 = vpop.f32.mrf.mxu0
        %v2223 = vadd.f32 %v2134, %v2222
        %v2224 = vpop.f32.mrf.mxu0
        %v2225 = vadd.f32 %v2136, %v2224
        %2226 = vmatmul.bf16.gmra.mxu0 %v983
        %v2227 = vpop.f32.mrf.mxu0
        %v2228 = vadd.f32 %v2139, %v2227
        %v2229 = vpop.f32.mrf.mxu0
        %v2230 = vadd.f32 %v2141, %v2229
        %2231 = vmatmul.bf16.gmra.mxu0 %v989
        %v2232 = vpop.f32.mrf.mxu0
        %v2233 = vadd.f32 %v2144, %v2232
        %v2234 = vpop.f32.mrf.mxu0
        %v2235 = vadd.f32 %v2146, %v2234
        %2236 = vmatmul.bf16.gmra.mxu0 %v995
        %v2237 = vpop.f32.mrf.mxu0
        %v2238 = vadd.f32 %v2149, %v2237
        %v2239 = vpop.f32.mrf.mxu0
        %v2240 = vadd.f32 %v2151, %v2239
        %2241 = vmatmul.bf16.gmra.mxu0 %v1001
        %v2242 = vpop.f32.mrf.mxu0
        %v2243 = vadd.f32 %v2154, %v2242
        %v2244 = vpop.f32.mrf.mxu0
        %v2245 = vadd.f32 %v2156, %v2244
        %2246 = vmatmul.bf16.gmra.mxu0 %v1007
        %v2247 = vpop.f32.mrf.mxu0
        %v2248 = vadd.f32 %v2159, %v2247
        %v2249 = vpop.f32.mrf.mxu0
        %v2250 = vadd.f32 %v2161, %v2249
        %2251 = vmatmul.bf16.gmra.mxu0 %v1013
        %v2252 = vpop.f32.mrf.mxu0
        %v2253 = vadd.f32 %v2164, %v2252
        %v2254 = vpop.f32.mrf.mxu0
        %v2255 = vadd.f32 %v2166, %v2254
        %2256 = vmatmul.bf16.gmra.mxu0 %v1019
        %v2257 = vpop.f32.mrf.mxu0
        %v2258 = vadd.f32 %v2169, %v2257
        %v2259 = vpop.f32.mrf.mxu0
        %v2260 = vadd.f32 %v2171, %v2259
        %2261 = vmatmul.bf16.gmra.mxu0 %v1025
        %v2262 = vpop.f32.mrf.mxu0
        %v2263 = vadd.f32 %v2174, %v2262
        %v2264 = vpop.f32.mrf.mxu0
        %v2265 = vadd.f32 %v2176, %v2264
        %2266 = vmatmul.bf16.gmra.mxu0 %v1031
        %v2267 = vpop.f32.mrf.mxu0
        %v2268 = vadd.f32 %v2179, %v2267
        %v2269 = vpop.f32.mrf.mxu0
        %v2270 = vadd.f32 %v2181, %v2269
        %2271 = vmatmul.bf16.gmra.mxu0 %v1037
        %v2272 = vpop.f32.mrf.mxu0
        %v2273 = vadd.f32 %v2184, %v2272
        %v2274 = vpop.f32.mrf.mxu0
        %v2275 = vadd.f32 %v2186, %v2274
        %2276 = vmatmul.bf16.gmra.mxu0 %v1043
        %v2277 = vpop.f32.mrf.mxu0
        %v2278 = vadd.f32 %v2189, %v2277
        %v2279 = vpop.f32.mrf.mxu0
        %v2280 = vadd.f32 %v2191, %v2279
        %2281 = vdwg.mxu0
        %2282 = vmatpush.bf16.msra.mxu0 %v1812
        %2283 = vmatpush.bf16.msra.mxu0 %v1808
        %2284 = vmatpush.bf16.msra.mxu0 %v1804
        %2285 = vmatpush.bf16.msra.mxu0 %v1800
        %2286 = vmatpush.bf16.msra.mxu0 %v1796
        %2287 = vmatpush.bf16.msra.mxu0 %v1792
        %2288 = vmatpush.bf16.msra.mxu0 %v1788
        %2289 = vmatpush.bf16.msra.mxu0 %v1784
        %2290 = vmatmul.bf16.gmra.mxu0 %v954
        %v2291 = vpop.f32.mrf.mxu0
        %v2292 = vadd.f32 %v2203, %v2291
        %v2293 = vpop.f32.mrf.mxu0
        %v2294 = vadd.f32 %v2205, %v2293
        %2295 = vmatmul.bf16.gmra.mxu0 %v960
        %v2296 = vpop.f32.mrf.mxu0
        %v2297 = vadd.f32 %v2208, %v2296
        %v2298 = vpop.f32.mrf.mxu0
        %v2299 = vadd.f32 %v2210, %v2298
        %2300 = vmatmul.bf16.gmra.mxu0 %v966
        %v2301 = vpop.f32.mrf.mxu0
        %v2302 = vadd.f32 %v2213, %v2301
        %v2303 = vpop.f32.mrf.mxu0
        %v2304 = vadd.f32 %v2215, %v2303
        %2305 = vmatmul.bf16.gmra.mxu0 %v972
        %v2306 = vpop.f32.mrf.mxu0
        %v2307 = vadd.f32 %v2218, %v2306
        %v2308 = vpop.f32.mrf.mxu0
        %v2309 = vadd.f32 %v2220, %v2308
        %2310 = vmatmul.bf16.gmra.mxu0 %v978
        %v2311 = vpop.f32.mrf.mxu0
        %v2312 = vadd.f32 %v2223, %v2311
        %v2313 = vpop.f32.mrf.mxu0
        %v2314 = vadd.f32 %v2225, %v2313
        %2315 = vmatmul.bf16.gmra.mxu0 %v984
        %v2316 = vpop.f32.mrf.mxu0
        %v2317 = vadd.f32 %v2228, %v2316
        %v2318 = vpop.f32.mrf.mxu0
        %v2319 = vadd.f32 %v2230, %v2318
        %2320 = vmatmul.bf16.gmra.mxu0 %v990
        %v2321 = vpop.f32.mrf.mxu0
        %v2322 = vadd.f32 %v2233, %v2321
        %v2323 = vpop.f32.mrf.mxu0
        %v2324 = vadd.f32 %v2235, %v2323
        %2325 = vmatmul.bf16.gmra.mxu0 %v996
        %v2326 = vpop.f32.mrf.mxu0
        %v2327 = vadd.f32 %v2238, %v2326
        %v2328 = vpop.f32.mrf.mxu0
        %v2329 = vadd.f32 %v2240, %v2328
        %2330 = vmatmul.bf16.gmra.mxu0 %v1002
        %v2331 = vpop.f32.mrf.mxu0
        %v2332 = vadd.f32 %v2243, %v2331
        %v2333 = vpop.f32.mrf.mxu0
        %v2334 = vadd.f32 %v2245, %v2333
        %2335 = vmatmul.bf16.gmra.mxu0 %v1008
        %v2336 = vpop.f32.mrf.mxu0
        %v2337 = vadd.f32 %v2248, %v2336
        %v2338 = vpop.f32.mrf.mxu0
        %v2339 = vadd.f32 %v2250, %v2338
        %2340 = vmatmul.bf16.gmra.mxu0 %v1014
        %v2341 = vpop.f32.mrf.mxu0
        %v2342 = vadd.f32 %v2253, %v2341
        %v2343 = vpop.f32.mrf.mxu0
        %v2344 = vadd.f32 %v2255, %v2343
        %2345 = vmatmul.bf16.gmra.mxu0 %v1020
        %v2346 = vpop.f32.mrf.mxu0
        %v2347 = vadd.f32 %v2258, %v2346
        %v2348 = vpop.f32.mrf.mxu0
        %v2349 = vadd.f32 %v2260, %v2348
        %2350 = vmatmul.bf16.gmra.mxu0 %v1026
        %v2351 = vpop.f32.mrf.mxu0
        %v2352 = vadd.f32 %v2263, %v2351
        %v2353 = vpop.f32.mrf.mxu0
        %v2354 = vadd.f32 %v2265, %v2353
        %2355 = vmatmul.bf16.gmra.mxu0 %v1032
        %v2356 = vpop.f32.mrf.mxu0
        %v2357 = vadd.f32 %v2268, %v2356
        %v2358 = vpop.f32.mrf.mxu0
        %v2359 = vadd.f32 %v2270, %v2358
        %2360 = vmatmul.bf16.gmra.mxu0 %v1038
        %v2361 = vpop.f32.mrf.mxu0
        %v2362 = vadd.f32 %v2273, %v2361
        %v2363 = vpop.f32.mrf.mxu0
        %v2364 = vadd.f32 %v2275, %v2363
        %2365 = vmatmul.bf16.gmra.mxu0 %v1044
        %v2366 = vpop.f32.mrf.mxu0
        %v2367 = vadd.f32 %v2278, %v2366
        %v2368 = vpop.f32.mrf.mxu0
        %v2369 = vadd.f32 %v2280, %v2368
        %2370 = vdwg.mxu0
        %2371 = vmatpush.bf16.msra.mxu0 %v1844
        %2372 = vmatpush.bf16.msra.mxu0 %v1840
        %2373 = vmatpush.bf16.msra.mxu0 %v1836
        %2374 = vmatpush.bf16.msra.mxu0 %v1832
        %2375 = vmatpush.bf16.msra.mxu0 %v1828
        %2376 = vmatpush.bf16.msra.mxu0 %v1824
        %2377 = vmatpush.bf16.msra.mxu0 %v1820
        %2378 = vmatpush.bf16.msra.mxu0 %v1816
        %2379 = vmatmul.bf16.gmra.mxu0 %v955
        %v2380 = vpop.f32.mrf.mxu0
        %v2381 = vadd.f32 %v2292, %v2380
        %v2382 = vpop.f32.mrf.mxu0
        %v2383 = vadd.f32 %v2294, %v2382
        %2384 = vmatmul.bf16.gmra.mxu0 %v961
        %v2385 = vpop.f32.mrf.mxu0
        %v2386 = vadd.f32 %v2297, %v2385
        %v2387 = vpop.f32.mrf.mxu0
        %v2388 = vadd.f32 %v2299, %v2387
        %2389 = vmatmul.bf16.gmra.mxu0 %v967
        %v2390 = vpop.f32.mrf.mxu0
        %v2391 = vadd.f32 %v2302, %v2390
        %v2392 = vpop.f32.mrf.mxu0
        %v2393 = vadd.f32 %v2304, %v2392
        %2394 = vmatmul.bf16.gmra.mxu0 %v973
        %v2395 = vpop.f32.mrf.mxu0
        %v2396 = vadd.f32 %v2307, %v2395
        %v2397 = vpop.f32.mrf.mxu0
        %v2398 = vadd.f32 %v2309, %v2397
        %2399 = vmatmul.bf16.gmra.mxu0 %v979
        %v2400 = vpop.f32.mrf.mxu0
        %v2401 = vadd.f32 %v2312, %v2400
        %v2402 = vpop.f32.mrf.mxu0
        %v2403 = vadd.f32 %v2314, %v2402
        %2404 = vmatmul.bf16.gmra.mxu0 %v985
        %v2405 = vpop.f32.mrf.mxu0
        %v2406 = vadd.f32 %v2317, %v2405
        %v2407 = vpop.f32.mrf.mxu0
        %v2408 = vadd.f32 %v2319, %v2407
        %2409 = vmatmul.bf16.gmra.mxu0 %v991
        %v2410 = vpop.f32.mrf.mxu0
        %v2411 = vadd.f32 %v2322, %v2410
        %v2412 = vpop.f32.mrf.mxu0
        %v2413 = vadd.f32 %v2324, %v2412
        %2414 = vmatmul.bf16.gmra.mxu0 %v997
        %v2415 = vpop.f32.mrf.mxu0
        %v2416 = vadd.f32 %v2327, %v2415
        %v2417 = vpop.f32.mrf.mxu0
        %v2418 = vadd.f32 %v2329, %v2417
        %2419 = vmatmul.bf16.gmra.mxu0 %v1003
        %v2420 = vpop.f32.mrf.mxu0
        %v2421 = vadd.f32 %v2332, %v2420
        %v2422 = vpop.f32.mrf.mxu0
        %v2423 = vadd.f32 %v2334, %v2422
        %2424 = vmatmul.bf16.gmra.mxu0 %v1009
        %v2425 = vpop.f32.mrf.mxu0
        %v2426 = vadd.f32 %v2337, %v2425
        %v2427 = vpop.f32.mrf.mxu0
        %v2428 = vadd.f32 %v2339, %v2427
        %2429 = vmatmul.bf16.gmra.mxu0 %v1015
        %v2430 = vpop.f32.mrf.mxu0
        %v2431 = vadd.f32 %v2342, %v2430
        %v2432 = vpop.f32.mrf.mxu0
        %v2433 = vadd.f32 %v2344, %v2432
        %2434 = vmatmul.bf16.gmra.mxu0 %v1021
        %v2435 = vpop.f32.mrf.mxu0
        %v2436 = vadd.f32 %v2347, %v2435
        %v2437 = vpop.f32.mrf.mxu0
        %v2438 = vadd.f32 %v2349, %v2437
        %2439 = vmatmul.bf16.gmra.mxu0 %v1027
        %v2440 = vpop.f32.mrf.mxu0
        %v2441 = vadd.f32 %v2352, %v2440
        %v2442 = vpop.f32.mrf.mxu0
        %v2443 = vadd.f32 %v2354, %v2442
        %2444 = vmatmul.bf16.gmra.mxu0 %v1033
        %v2445 = vpop.f32.mrf.mxu0
        %v2446 = vadd.f32 %v2357, %v2445
        %v2447 = vpop.f32.mrf.mxu0
        %v2448 = vadd.f32 %v2359, %v2447
        %2449 = vmatmul.bf16.gmra.mxu0 %v1039
        %v2450 = vpop.f32.mrf.mxu0
        %v2451 = vadd.f32 %v2362, %v2450
        %v2452 = vpop.f32.mrf.mxu0
        %v2453 = vadd.f32 %v2364, %v2452
        %2454 = vmatmul.bf16.gmra.mxu0 %v1045
        %v2455 = vpop.f32.mrf.mxu0
        %v2456 = vadd.f32 %v2367, %v2455
        %v2457 = vpop.f32.mrf.mxu0
        %v2458 = vadd.f32 %v2369, %v2457
        %2459 = vdwg.mxu0
        %2460 = vmatpush.bf16.msra.mxu0 %v1876
        %2461 = vmatpush.bf16.msra.mxu0 %v1872
        %2462 = vmatpush.bf16.msra.mxu0 %v1868
        %2463 = vmatpush.bf16.msra.mxu0 %v1864
        %2464 = vmatpush.bf16.msra.mxu0 %v1860
        %2465 = vmatpush.bf16.msra.mxu0 %v1856
        %2466 = vmatpush.bf16.msra.mxu0 %v1852
        %2467 = vmatpush.bf16.msra.mxu0 %v1848
        %2468 = vmatmul.bf16.gmra.mxu0 %v956
        %v2469 = vpop.f32.mrf.mxu0
        %v2470 = vadd.f32 %v2381, %v2469
        %v2471 = vpop.f32.mrf.mxu0
        %v2472 = vadd.f32 %v2383, %v2471
        %2473 = vmatmul.bf16.gmra.mxu0 %v962
        %v2474 = vpop.f32.mrf.mxu0
        %v2475 = vadd.f32 %v2386, %v2474
        %v2476 = vpop.f32.mrf.mxu0
        %v2477 = vadd.f32 %v2388, %v2476
        %2478 = vmatmul.bf16.gmra.mxu0 %v968
        %v2479 = vpop.f32.mrf.mxu0
        %v2480 = vadd.f32 %v2391, %v2479
        %v2481 = vpop.f32.mrf.mxu0
        %v2482 = vadd.f32 %v2393, %v2481
        %2483 = vmatmul.bf16.gmra.mxu0 %v974
        %v2484 = vpop.f32.mrf.mxu0
        %v2485 = vadd.f32 %v2396, %v2484
        %v2486 = vpop.f32.mrf.mxu0
        %v2487 = vadd.f32 %v2398, %v2486
        %2488 = vmatmul.bf16.gmra.mxu0 %v980
        %v2489 = vpop.f32.mrf.mxu0
        %v2490 = vadd.f32 %v2401, %v2489
        %v2491 = vpop.f32.mrf.mxu0
        %v2492 = vadd.f32 %v2403, %v2491
        %2493 = vmatmul.bf16.gmra.mxu0 %v986
        %v2494 = vpop.f32.mrf.mxu0
        %v2495 = vadd.f32 %v2406, %v2494
        %v2496 = vpop.f32.mrf.mxu0
        %v2497 = vadd.f32 %v2408, %v2496
        %2498 = vmatmul.bf16.gmra.mxu0 %v992
        %v2499 = vpop.f32.mrf.mxu0
        %v2500 = vadd.f32 %v2411, %v2499
        %v2501 = vpop.f32.mrf.mxu0
        %v2502 = vadd.f32 %v2413, %v2501
        %2503 = vmatmul.bf16.gmra.mxu0 %v998
        %v2504 = vpop.f32.mrf.mxu0
        %v2505 = vadd.f32 %v2416, %v2504
        %v2506 = vpop.f32.mrf.mxu0
        %v2507 = vadd.f32 %v2418, %v2506
        %2508 = vmatmul.bf16.gmra.mxu0 %v1004
        %v2509 = vpop.f32.mrf.mxu0
        %v2510 = vadd.f32 %v2421, %v2509
        %v2511 = vpop.f32.mrf.mxu0
        %v2512 = vadd.f32 %v2423, %v2511
        %2513 = vmatmul.bf16.gmra.mxu0 %v1010
        %v2514 = vpop.f32.mrf.mxu0
        %v2515 = vadd.f32 %v2426, %v2514
        %v2516 = vpop.f32.mrf.mxu0
        %v2517 = vadd.f32 %v2428, %v2516
        %2518 = vmatmul.bf16.gmra.mxu0 %v1016
        %v2519 = vpop.f32.mrf.mxu0
        %v2520 = vadd.f32 %v2431, %v2519
        %v2521 = vpop.f32.mrf.mxu0
        %v2522 = vadd.f32 %v2433, %v2521
        %2523 = vmatmul.bf16.gmra.mxu0 %v1022
        %v2524 = vpop.f32.mrf.mxu0
        %v2525 = vadd.f32 %v2436, %v2524
        %v2526 = vpop.f32.mrf.mxu0
        %v2527 = vadd.f32 %v2438, %v2526
        %2528 = vmatmul.bf16.gmra.mxu0 %v1028
        %v2529 = vpop.f32.mrf.mxu0
        %v2530 = vadd.f32 %v2441, %v2529
        %v2531 = vpop.f32.mrf.mxu0
        %v2532 = vadd.f32 %v2443, %v2531
        %2533 = vmatmul.bf16.gmra.mxu0 %v1034
        %v2534 = vpop.f32.mrf.mxu0
        %v2535 = vadd.f32 %v2446, %v2534
        %v2536 = vpop.f32.mrf.mxu0
        %v2537 = vadd.f32 %v2448, %v2536
        %2538 = vmatmul.bf16.gmra.mxu0 %v1040
        %v2539 = vpop.f32.mrf.mxu0
        %v2540 = vadd.f32 %v2451, %v2539
        %v2541 = vpop.f32.mrf.mxu0
        %v2542 = vadd.f32 %v2453, %v2541
        %2543 = vmatmul.bf16.gmra.mxu0 %v1046
        %v2544 = vpop.f32.mrf.mxu0
        %v2545 = vadd.f32 %v2456, %v2544
        %v2546 = vpop.f32.mrf.mxu0
        %v2547 = vadd.f32 %v2458, %v2546
        %2548 = vdwg.mxu0
        %2549 = vmatpush.bf16.msra.mxu0 %v1908
        %2550 = vmatpush.bf16.msra.mxu0 %v1904
        %2551 = vmatpush.bf16.msra.mxu0 %v1900
        %2552 = vmatpush.bf16.msra.mxu0 %v1896
        %2553 = vmatpush.bf16.msra.mxu0 %v1892
        %2554 = vmatpush.bf16.msra.mxu0 %v1888
        %2555 = vmatpush.bf16.msra.mxu0 %v1884
        %2556 = vmatpush.bf16.msra.mxu0 %v1880
        %2557 = vmatmul.bf16.gmra.mxu0 %v957
        %v2558 = vpop.f32.mrf.mxu0
        %v2559 = vadd.f32 %v2470, %v2558
        %v2560 = vpop.f32.mrf.mxu0
        %v2561 = vadd.f32 %v2472, %v2560
        %2562 = vmatmul.bf16.gmra.mxu0 %v963
        %v2563 = vpop.f32.mrf.mxu0
        %v2564 = vadd.f32 %v2475, %v2563
        %v2565 = vpop.f32.mrf.mxu0
        %v2566 = vadd.f32 %v2477, %v2565
        %2567 = vmatmul.bf16.gmra.mxu0 %v969
        %v2568 = vpop.f32.mrf.mxu0
        %v2569 = vadd.f32 %v2480, %v2568
        %v2570 = vpop.f32.mrf.mxu0
        %v2571 = vadd.f32 %v2482, %v2570
        %2572 = vmatmul.bf16.gmra.mxu0 %v975
        %v2573 = vpop.f32.mrf.mxu0
        %v2574 = vadd.f32 %v2485, %v2573
        %v2575 = vpop.f32.mrf.mxu0
        %v2576 = vadd.f32 %v2487, %v2575
        %2577 = vmatmul.bf16.gmra.mxu0 %v981
        %v2578 = vpop.f32.mrf.mxu0
        %v2579 = vadd.f32 %v2490, %v2578
        %v2580 = vpop.f32.mrf.mxu0
        %v2581 = vadd.f32 %v2492, %v2580
        %2582 = vmatmul.bf16.gmra.mxu0 %v987
        %v2583 = vpop.f32.mrf.mxu0
        %v2584 = vadd.f32 %v2495, %v2583
        %v2585 = vpop.f32.mrf.mxu0
        %v2586 = vadd.f32 %v2497, %v2585
        %2587 = vmatmul.bf16.gmra.mxu0 %v993
        %v2588 = vpop.f32.mrf.mxu0
        %v2589 = vadd.f32 %v2500, %v2588
        %v2590 = vpop.f32.mrf.mxu0
        %v2591 = vadd.f32 %v2502, %v2590
        %2592 = vmatmul.bf16.gmra.mxu0 %v999
        %v2593 = vpop.f32.mrf.mxu0
        %v2594 = vadd.f32 %v2505, %v2593
        %v2595 = vpop.f32.mrf.mxu0
        %v2596 = vadd.f32 %v2507, %v2595
        %2597 = vmatmul.bf16.gmra.mxu0 %v1005
        %v2598 = vpop.f32.mrf.mxu0
        %v2599 = vadd.f32 %v2510, %v2598
        %v2600 = vpop.f32.mrf.mxu0
        %v2601 = vadd.f32 %v2512, %v2600
        %2602 = vmatmul.bf16.gmra.mxu0 %v1011
        %v2603 = vpop.f32.mrf.mxu0
        %v2604 = vadd.f32 %v2515, %v2603
        %v2605 = vpop.f32.mrf.mxu0
        %v2606 = vadd.f32 %v2517, %v2605
        %2607 = vmatmul.bf16.gmra.mxu0 %v1017
        %v2608 = vpop.f32.mrf.mxu0
        %v2609 = vadd.f32 %v2520, %v2608
        %v2610 = vpop.f32.mrf.mxu0
        %v2611 = vadd.f32 %v2522, %v2610
        %2612 = vmatmul.bf16.gmra.mxu0 %v1023
        %v2613 = vpop.f32.mrf.mxu0
        %v2614 = vadd.f32 %v2525, %v2613
        %v2615 = vpop.f32.mrf.mxu0
        %v2616 = vadd.f32 %v2527, %v2615
        %2617 = vmatmul.bf16.gmra.mxu0 %v1029
        %v2618 = vpop.f32.mrf.mxu0
        %v2619 = vadd.f32 %v2530, %v2618
        %v2620 = vpop.f32.mrf.mxu0
        %v2621 = vadd.f32 %v2532, %v2620
        %2622 = vmatmul.bf16.gmra.mxu0 %v1035
        %v2623 = vpop.f32.mrf.mxu0
        %v2624 = vadd.f32 %v2535, %v2623
        %v2625 = vpop.f32.mrf.mxu0
        %v2626 = vadd.f32 %v2537, %v2625
        %2627 = vmatmul.bf16.gmra.mxu0 %v1041
        %v2628 = vpop.f32.mrf.mxu0
        %v2629 = vadd.f32 %v2540, %v2628
        %v2630 = vpop.f32.mrf.mxu0
        %v2631 = vadd.f32 %v2542, %v2630
        %2632 = vmatmul.bf16.gmra.mxu0 %v1047
        %v2633 = vpop.f32.mrf.mxu0
        %v2634 = vadd.f32 %v2545, %v2633
        %v2635 = vpop.f32.mrf.mxu0
        %v2636 = vadd.f32 %v2547, %v2635
        %2637 = vdwg.mxu0
        %2638 = vmatpush.bf16.msra.mxu0 %v1749
        %2639 = vmatpush.bf16.msra.mxu0 %v1745
        %2640 = vmatpush.bf16.msra.mxu0 %v1741
        %2641 = vmatpush.bf16.msra.mxu0 %v1737
        %2642 = vmatpush.bf16.msra.mxu0 %v1733
        %2643 = vmatpush.bf16.msra.mxu0 %v1729
        %2644 = vmatpush.bf16.msra.mxu0 %v1725
        %2645 = vmatpush.bf16.msra.mxu0 %v1721
        %2646 = vmatmul.bf16.gmra.mxu0 %v952
        %v2647 = vpop.f32.mrf.mxu0
        %v2648 = vadd.f32 %v657, %v2647
        %v2649 = vpop.f32.mrf.mxu0
        %v2650 = vadd.f32 %v657, %v2649
        %2651 = vmatmul.bf16.gmra.mxu0 %v958
        %v2652 = vpop.f32.mrf.mxu0
        %v2653 = vadd.f32 %v657, %v2652
        %v2654 = vpop.f32.mrf.mxu0
        %v2655 = vadd.f32 %v657, %v2654
        %2656 = vmatmul.bf16.gmra.mxu0 %v964
        %v2657 = vpop.f32.mrf.mxu0
        %v2658 = vadd.f32 %v657, %v2657
        %v2659 = vpop.f32.mrf.mxu0
        %v2660 = vadd.f32 %v657, %v2659
        %2661 = vmatmul.bf16.gmra.mxu0 %v970
        %v2662 = vpop.f32.mrf.mxu0
        %v2663 = vadd.f32 %v657, %v2662
        %v2664 = vpop.f32.mrf.mxu0
        %v2665 = vadd.f32 %v657, %v2664
        %2666 = vmatmul.bf16.gmra.mxu0 %v976
        %v2667 = vpop.f32.mrf.mxu0
        %v2668 = vadd.f32 %v657, %v2667
        %v2669 = vpop.f32.mrf.mxu0
        %v2670 = vadd.f32 %v657, %v2669
        %2671 = vmatmul.bf16.gmra.mxu0 %v982
        %v2672 = vpop.f32.mrf.mxu0
        %v2673 = vadd.f32 %v657, %v2672
        %v2674 = vpop.f32.mrf.mxu0
        %v2675 = vadd.f32 %v657, %v2674
        %2676 = vmatmul.bf16.gmra.mxu0 %v988
        %v2677 = vpop.f32.mrf.mxu0
        %v2678 = vadd.f32 %v657, %v2677
        %v2679 = vpop.f32.mrf.mxu0
        %v2680 = vadd.f32 %v657, %v2679
        %2681 = vmatmul.bf16.gmra.mxu0 %v994
        %v2682 = vpop.f32.mrf.mxu0
        %v2683 = vadd.f32 %v657, %v2682
        %v2684 = vpop.f32.mrf.mxu0
        %v2685 = vadd.f32 %v657, %v2684
        %2686 = vmatmul.bf16.gmra.mxu0 %v1000
        %v2687 = vpop.f32.mrf.mxu0
        %v2688 = vadd.f32 %v657, %v2687
        %v2689 = vpop.f32.mrf.mxu0
        %v2690 = vadd.f32 %v657, %v2689
        %2691 = vmatmul.bf16.gmra.mxu0 %v1006
        %v2692 = vpop.f32.mrf.mxu0
        %v2693 = vadd.f32 %v657, %v2692
        %v2694 = vpop.f32.mrf.mxu0
        %v2695 = vadd.f32 %v657, %v2694
        %2696 = vmatmul.bf16.gmra.mxu0 %v1012
        %v2697 = vpop.f32.mrf.mxu0
        %v2698 = vadd.f32 %v657, %v2697
        %v2699 = vpop.f32.mrf.mxu0
        %v2700 = vadd.f32 %v657, %v2699
        %2701 = vmatmul.bf16.gmra.mxu0 %v1018
        %v2702 = vpop.f32.mrf.mxu0
        %v2703 = vadd.f32 %v657, %v2702
        %v2704 = vpop.f32.mrf.mxu0
        %v2705 = vadd.f32 %v657, %v2704
        %2706 = vmatmul.bf16.gmra.mxu0 %v1024
        %v2707 = vpop.f32.mrf.mxu0
        %v2708 = vadd.f32 %v657, %v2707
        %v2709 = vpop.f32.mrf.mxu0
        %v2710 = vadd.f32 %v657, %v2709
        %2711 = vmatmul.bf16.gmra.mxu0 %v1030
        %v2712 = vpop.f32.mrf.mxu0
        %v2713 = vadd.f32 %v657, %v2712
        %v2714 = vpop.f32.mrf.mxu0
        %v2715 = vadd.f32 %v657, %v2714
        %2716 = vmatmul.bf16.gmra.mxu0 %v1036
        %v2717 = vpop.f32.mrf.mxu0
        %v2718 = vadd.f32 %v657, %v2717
        %v2719 = vpop.f32.mrf.mxu0
        %v2720 = vadd.f32 %v657, %v2719
        %2721 = vmatmul.bf16.gmra.mxu0 %v1042
        %v2722 = vpop.f32.mrf.mxu0
        %v2723 = vadd.f32 %v657, %v2722
        %v2724 = vpop.f32.mrf.mxu0
        %v2725 = vadd.f32 %v657, %v2724
        %2726 = vdwg.mxu0
        %2727 = vmatpush.bf16.msra.mxu0 %v1781
        %2728 = vmatpush.bf16.msra.mxu0 %v1777
        %2729 = vmatpush.bf16.msra.mxu0 %v1773
        %2730 = vmatpush.bf16.msra.mxu0 %v1769
        %2731 = vmatpush.bf16.msra.mxu0 %v1765
        %2732 = vmatpush.bf16.msra.mxu0 %v1761
        %2733 = vmatpush.bf16.msra.mxu0 %v1757
        %2734 = vmatpush.bf16.msra.mxu0 %v1753
        %2735 = vmatmul.bf16.gmra.mxu0 %v953
        %v2736 = vpop.f32.mrf.mxu0
        %v2737 = vadd.f32 %v2648, %v2736
        %v2738 = vpop.f32.mrf.mxu0
        %v2739 = vadd.f32 %v2650, %v2738
        %2740 = vmatmul.bf16.gmra.mxu0 %v959
        %v2741 = vpop.f32.mrf.mxu0
        %v2742 = vadd.f32 %v2653, %v2741
        %v2743 = vpop.f32.mrf.mxu0
        %v2744 = vadd.f32 %v2655, %v2743
        %2745 = vmatmul.bf16.gmra.mxu0 %v965
        %v2746 = vpop.f32.mrf.mxu0
        %v2747 = vadd.f32 %v2658, %v2746
        %v2748 = vpop.f32.mrf.mxu0
        %v2749 = vadd.f32 %v2660, %v2748
        %2750 = vmatmul.bf16.gmra.mxu0 %v971
        %v2751 = vpop.f32.mrf.mxu0
        %v2752 = vadd.f32 %v2663, %v2751
        %v2753 = vpop.f32.mrf.mxu0
        %v2754 = vadd.f32 %v2665, %v2753
        %2755 = vmatmul.bf16.gmra.mxu0 %v977
        %v2756 = vpop.f32.mrf.mxu0
        %v2757 = vadd.f32 %v2668, %v2756
        %v2758 = vpop.f32.mrf.mxu0
        %v2759 = vadd.f32 %v2670, %v2758
        %2760 = vmatmul.bf16.gmra.mxu0 %v983
        %v2761 = vpop.f32.mrf.mxu0
        %v2762 = vadd.f32 %v2673, %v2761
        %v2763 = vpop.f32.mrf.mxu0
        %v2764 = vadd.f32 %v2675, %v2763
        %2765 = vmatmul.bf16.gmra.mxu0 %v989
        %v2766 = vpop.f32.mrf.mxu0
        %v2767 = vadd.f32 %v2678, %v2766
        %v2768 = vpop.f32.mrf.mxu0
        %v2769 = vadd.f32 %v2680, %v2768
        %2770 = vmatmul.bf16.gmra.mxu0 %v995
        %v2771 = vpop.f32.mrf.mxu0
        %v2772 = vadd.f32 %v2683, %v2771
        %v2773 = vpop.f32.mrf.mxu0
        %v2774 = vadd.f32 %v2685, %v2773
        %2775 = vmatmul.bf16.gmra.mxu0 %v1001
        %v2776 = vpop.f32.mrf.mxu0
        %v2777 = vadd.f32 %v2688, %v2776
        %v2778 = vpop.f32.mrf.mxu0
        %v2779 = vadd.f32 %v2690, %v2778
        %2780 = vmatmul.bf16.gmra.mxu0 %v1007
        %v2781 = vpop.f32.mrf.mxu0
        %v2782 = vadd.f32 %v2693, %v2781
        %v2783 = vpop.f32.mrf.mxu0
        %v2784 = vadd.f32 %v2695, %v2783
        %2785 = vmatmul.bf16.gmra.mxu0 %v1013
        %v2786 = vpop.f32.mrf.mxu0
        %v2787 = vadd.f32 %v2698, %v2786
        %v2788 = vpop.f32.mrf.mxu0
        %v2789 = vadd.f32 %v2700, %v2788
        %2790 = vmatmul.bf16.gmra.mxu0 %v1019
        %v2791 = vpop.f32.mrf.mxu0
        %v2792 = vadd.f32 %v2703, %v2791
        %v2793 = vpop.f32.mrf.mxu0
        %v2794 = vadd.f32 %v2705, %v2793
        %2795 = vmatmul.bf16.gmra.mxu0 %v1025
        %v2796 = vpop.f32.mrf.mxu0
        %v2797 = vadd.f32 %v2708, %v2796
        %v2798 = vpop.f32.mrf.mxu0
        %v2799 = vadd.f32 %v2710, %v2798
        %2800 = vmatmul.bf16.gmra.mxu0 %v1031
        %v2801 = vpop.f32.mrf.mxu0
        %v2802 = vadd.f32 %v2713, %v2801
        %v2803 = vpop.f32.mrf.mxu0
        %v2804 = vadd.f32 %v2715, %v2803
        %2805 = vmatmul.bf16.gmra.mxu0 %v1037
        %v2806 = vpop.f32.mrf.mxu0
        %v2807 = vadd.f32 %v2718, %v2806
        %v2808 = vpop.f32.mrf.mxu0
        %v2809 = vadd.f32 %v2720, %v2808
        %2810 = vmatmul.bf16.gmra.mxu0 %v1043
        %v2811 = vpop.f32.mrf.mxu0
        %v2812 = vadd.f32 %v2723, %v2811
        %v2813 = vpop.f32.mrf.mxu0
        %v2814 = vadd.f32 %v2725, %v2813
        %2815 = vdwg.mxu0
        %2816 = vmatpush.bf16.msra.mxu0 %v1813
        %2817 = vmatpush.bf16.msra.mxu0 %v1809
        %2818 = vmatpush.bf16.msra.mxu0 %v1805
        %2819 = vmatpush.bf16.msra.mxu0 %v1801
        %2820 = vmatpush.bf16.msra.mxu0 %v1797
        %2821 = vmatpush.bf16.msra.mxu0 %v1793
        %2822 = vmatpush.bf16.msra.mxu0 %v1789
        %2823 = vmatpush.bf16.msra.mxu0 %v1785
        %2824 = vmatmul.bf16.gmra.mxu0 %v954
        %v2825 = vpop.f32.mrf.mxu0
        %v2826 = vadd.f32 %v2737, %v2825
        %v2827 = vpop.f32.mrf.mxu0
        %v2828 = vadd.f32 %v2739, %v2827
        %2829 = vmatmul.bf16.gmra.mxu0 %v960
        %v2830 = vpop.f32.mrf.mxu0
        %v2831 = vadd.f32 %v2742, %v2830
        %v2832 = vpop.f32.mrf.mxu0
        %v2833 = vadd.f32 %v2744, %v2832
        %2834 = vmatmul.bf16.gmra.mxu0 %v966
        %v2835 = vpop.f32.mrf.mxu0
        %v2836 = vadd.f32 %v2747, %v2835
        %v2837 = vpop.f32.mrf.mxu0
        %v2838 = vadd.f32 %v2749, %v2837
        %2839 = vmatmul.bf16.gmra.mxu0 %v972
        %v2840 = vpop.f32.mrf.mxu0
        %v2841 = vadd.f32 %v2752, %v2840
        %v2842 = vpop.f32.mrf.mxu0
        %v2843 = vadd.f32 %v2754, %v2842
        %2844 = vmatmul.bf16.gmra.mxu0 %v978
        %v2845 = vpop.f32.mrf.mxu0
        %v2846 = vadd.f32 %v2757, %v2845
        %v2847 = vpop.f32.mrf.mxu0
        %v2848 = vadd.f32 %v2759, %v2847
        %2849 = vmatmul.bf16.gmra.mxu0 %v984
        %v2850 = vpop.f32.mrf.mxu0
        %v2851 = vadd.f32 %v2762, %v2850
        %v2852 = vpop.f32.mrf.mxu0
        %v2853 = vadd.f32 %v2764, %v2852
        %2854 = vmatmul.bf16.gmra.mxu0 %v990
        %v2855 = vpop.f32.mrf.mxu0
        %v2856 = vadd.f32 %v2767, %v2855
        %v2857 = vpop.f32.mrf.mxu0
        %v2858 = vadd.f32 %v2769, %v2857
        %2859 = vmatmul.bf16.gmra.mxu0 %v996
        %v2860 = vpop.f32.mrf.mxu0
        %v2861 = vadd.f32 %v2772, %v2860
        %v2862 = vpop.f32.mrf.mxu0
        %v2863 = vadd.f32 %v2774, %v2862
        %2864 = vmatmul.bf16.gmra.mxu0 %v1002
        %v2865 = vpop.f32.mrf.mxu0
        %v2866 = vadd.f32 %v2777, %v2865
        %v2867 = vpop.f32.mrf.mxu0
        %v2868 = vadd.f32 %v2779, %v2867
        %2869 = vmatmul.bf16.gmra.mxu0 %v1008
        %v2870 = vpop.f32.mrf.mxu0
        %v2871 = vadd.f32 %v2782, %v2870
        %v2872 = vpop.f32.mrf.mxu0
        %v2873 = vadd.f32 %v2784, %v2872
        %2874 = vmatmul.bf16.gmra.mxu0 %v1014
        %v2875 = vpop.f32.mrf.mxu0
        %v2876 = vadd.f32 %v2787, %v2875
        %v2877 = vpop.f32.mrf.mxu0
        %v2878 = vadd.f32 %v2789, %v2877
        %2879 = vmatmul.bf16.gmra.mxu0 %v1020
        %v2880 = vpop.f32.mrf.mxu0
        %v2881 = vadd.f32 %v2792, %v2880
        %v2882 = vpop.f32.mrf.mxu0
        %v2883 = vadd.f32 %v2794, %v2882
        %2884 = vmatmul.bf16.gmra.mxu0 %v1026
        %v2885 = vpop.f32.mrf.mxu0
        %v2886 = vadd.f32 %v2797, %v2885
        %v2887 = vpop.f32.mrf.mxu0
        %v2888 = vadd.f32 %v2799, %v2887
        %2889 = vmatmul.bf16.gmra.mxu0 %v1032
        %v2890 = vpop.f32.mrf.mxu0
        %v2891 = vadd.f32 %v2802, %v2890
        %v2892 = vpop.f32.mrf.mxu0
        %v2893 = vadd.f32 %v2804, %v2892
        %2894 = vmatmul.bf16.gmra.mxu0 %v1038
        %v2895 = vpop.f32.mrf.mxu0
        %v2896 = vadd.f32 %v2807, %v2895
        %v2897 = vpop.f32.mrf.mxu0
        %v2898 = vadd.f32 %v2809, %v2897
        %2899 = vmatmul.bf16.gmra.mxu0 %v1044
        %v2900 = vpop.f32.mrf.mxu0
        %v2901 = vadd.f32 %v2812, %v2900
        %v2902 = vpop.f32.mrf.mxu0
        %v2903 = vadd.f32 %v2814, %v2902
        %2904 = vdwg.mxu0
        %2905 = vmatpush.bf16.msra.mxu0 %v1845
        %2906 = vmatpush.bf16.msra.mxu0 %v1841
        %2907 = vmatpush.bf16.msra.mxu0 %v1837
        %2908 = vmatpush.bf16.msra.mxu0 %v1833
        %2909 = vmatpush.bf16.msra.mxu0 %v1829
        %2910 = vmatpush.bf16.msra.mxu0 %v1825
        %2911 = vmatpush.bf16.msra.mxu0 %v1821
        %2912 = vmatpush.bf16.msra.mxu0 %v1817
        %2913 = vmatmul.bf16.gmra.mxu0 %v955
        %v2914 = vpop.f32.mrf.mxu0
        %v2915 = vadd.f32 %v2826, %v2914
        %v2916 = vpop.f32.mrf.mxu0
        %v2917 = vadd.f32 %v2828, %v2916
        %2918 = vmatmul.bf16.gmra.mxu0 %v961
        %v2919 = vpop.f32.mrf.mxu0
        %v2920 = vadd.f32 %v2831, %v2919
        %v2921 = vpop.f32.mrf.mxu0
        %v2922 = vadd.f32 %v2833, %v2921
        %2923 = vmatmul.bf16.gmra.mxu0 %v967
        %v2924 = vpop.f32.mrf.mxu0
        %v2925 = vadd.f32 %v2836, %v2924
        %v2926 = vpop.f32.mrf.mxu0
        %v2927 = vadd.f32 %v2838, %v2926
        %2928 = vmatmul.bf16.gmra.mxu0 %v973
        %v2929 = vpop.f32.mrf.mxu0
        %v2930 = vadd.f32 %v2841, %v2929
        %v2931 = vpop.f32.mrf.mxu0
        %v2932 = vadd.f32 %v2843, %v2931
        %2933 = vmatmul.bf16.gmra.mxu0 %v979
        %v2934 = vpop.f32.mrf.mxu0
        %v2935 = vadd.f32 %v2846, %v2934
        %v2936 = vpop.f32.mrf.mxu0
        %v2937 = vadd.f32 %v2848, %v2936
        %2938 = vmatmul.bf16.gmra.mxu0 %v985
        %v2939 = vpop.f32.mrf.mxu0
        %v2940 = vadd.f32 %v2851, %v2939
        %v2941 = vpop.f32.mrf.mxu0
        %v2942 = vadd.f32 %v2853, %v2941
        %2943 = vmatmul.bf16.gmra.mxu0 %v991
        %v2944 = vpop.f32.mrf.mxu0
        %v2945 = vadd.f32 %v2856, %v2944
        %v2946 = vpop.f32.mrf.mxu0
        %v2947 = vadd.f32 %v2858, %v2946
        %2948 = vmatmul.bf16.gmra.mxu0 %v997
        %v2949 = vpop.f32.mrf.mxu0
        %v2950 = vadd.f32 %v2861, %v2949
        %v2951 = vpop.f32.mrf.mxu0
        %v2952 = vadd.f32 %v2863, %v2951
        %2953 = vmatmul.bf16.gmra.mxu0 %v1003
        %v2954 = vpop.f32.mrf.mxu0
        %v2955 = vadd.f32 %v2866, %v2954
        %v2956 = vpop.f32.mrf.mxu0
        %v2957 = vadd.f32 %v2868, %v2956
        %2958 = vmatmul.bf16.gmra.mxu0 %v1009
        %v2959 = vpop.f32.mrf.mxu0
        %v2960 = vadd.f32 %v2871, %v2959
        %v2961 = vpop.f32.mrf.mxu0
        %v2962 = vadd.f32 %v2873, %v2961
        %2963 = vmatmul.bf16.gmra.mxu0 %v1015
        %v2964 = vpop.f32.mrf.mxu0
        %v2965 = vadd.f32 %v2876, %v2964
        %v2966 = vpop.f32.mrf.mxu0
        %v2967 = vadd.f32 %v2878, %v2966
        %2968 = vmatmul.bf16.gmra.mxu0 %v1021
        %v2969 = vpop.f32.mrf.mxu0
        %v2970 = vadd.f32 %v2881, %v2969
        %v2971 = vpop.f32.mrf.mxu0
        %v2972 = vadd.f32 %v2883, %v2971
        %2973 = vmatmul.bf16.gmra.mxu0 %v1027
        %v2974 = vpop.f32.mrf.mxu0
        %v2975 = vadd.f32 %v2886, %v2974
        %v2976 = vpop.f32.mrf.mxu0
        %v2977 = vadd.f32 %v2888, %v2976
        %2978 = vmatmul.bf16.gmra.mxu0 %v1033
        %v2979 = vpop.f32.mrf.mxu0
        %v2980 = vadd.f32 %v2891, %v2979
        %v2981 = vpop.f32.mrf.mxu0
        %v2982 = vadd.f32 %v2893, %v2981
        %2983 = vmatmul.bf16.gmra.mxu0 %v1039
        %v2984 = vpop.f32.mrf.mxu0
        %v2985 = vadd.f32 %v2896, %v2984
        %v2986 = vpop.f32.mrf.mxu0
        %v2987 = vadd.f32 %v2898, %v2986
        %2988 = vmatmul.bf16.gmra.mxu0 %v1045
        %v2989 = vpop.f32.mrf.mxu0
        %v2990 = vadd.f32 %v2901, %v2989
        %v2991 = vpop.f32.mrf.mxu0
        %v2992 = vadd.f32 %v2903, %v2991
        %2993 = vdwg.mxu0
        %2994 = vmatpush.bf16.msra.mxu0 %v1877
        %2995 = vmatpush.bf16.msra.mxu0 %v1873
        %2996 = vmatpush.bf16.msra.mxu0 %v1869
        %2997 = vmatpush.bf16.msra.mxu0 %v1865
        %2998 = vmatpush.bf16.msra.mxu0 %v1861
        %2999 = vmatpush.bf16.msra.mxu0 %v1857
        %3000 = vmatpush.bf16.msra.mxu0 %v1853
        %3001 = vmatpush.bf16.msra.mxu0 %v1849
        %3002 = vmatmul.bf16.gmra.mxu0 %v956
        %v3003 = vpop.f32.mrf.mxu0
        %v3004 = vadd.f32 %v2915, %v3003
        %v3005 = vpop.f32.mrf.mxu0
        %v3006 = vadd.f32 %v2917, %v3005
        %3007 = vmatmul.bf16.gmra.mxu0 %v962
        %v3008 = vpop.f32.mrf.mxu0
        %v3009 = vadd.f32 %v2920, %v3008
        %v3010 = vpop.f32.mrf.mxu0
        %v3011 = vadd.f32 %v2922, %v3010
        %3012 = vmatmul.bf16.gmra.mxu0 %v968
        %v3013 = vpop.f32.mrf.mxu0
        %v3014 = vadd.f32 %v2925, %v3013
        %v3015 = vpop.f32.mrf.mxu0
        %v3016 = vadd.f32 %v2927, %v3015
        %3017 = vmatmul.bf16.gmra.mxu0 %v974
        %v3018 = vpop.f32.mrf.mxu0
        %v3019 = vadd.f32 %v2930, %v3018
        %v3020 = vpop.f32.mrf.mxu0
        %v3021 = vadd.f32 %v2932, %v3020
        %3022 = vmatmul.bf16.gmra.mxu0 %v980
        %v3023 = vpop.f32.mrf.mxu0
        %v3024 = vadd.f32 %v2935, %v3023
        %v3025 = vpop.f32.mrf.mxu0
        %v3026 = vadd.f32 %v2937, %v3025
        %3027 = vmatmul.bf16.gmra.mxu0 %v986
        %v3028 = vpop.f32.mrf.mxu0
        %v3029 = vadd.f32 %v2940, %v3028
        %v3030 = vpop.f32.mrf.mxu0
        %v3031 = vadd.f32 %v2942, %v3030
        %3032 = vmatmul.bf16.gmra.mxu0 %v992
        %v3033 = vpop.f32.mrf.mxu0
        %v3034 = vadd.f32 %v2945, %v3033
        %v3035 = vpop.f32.mrf.mxu0
        %v3036 = vadd.f32 %v2947, %v3035
        %3037 = vmatmul.bf16.gmra.mxu0 %v998
        %v3038 = vpop.f32.mrf.mxu0
        %v3039 = vadd.f32 %v2950, %v3038
        %v3040 = vpop.f32.mrf.mxu0
        %v3041 = vadd.f32 %v2952, %v3040
        %3042 = vmatmul.bf16.gmra.mxu0 %v1004
        %v3043 = vpop.f32.mrf.mxu0
        %v3044 = vadd.f32 %v2955, %v3043
        %v3045 = vpop.f32.mrf.mxu0
        %v3046 = vadd.f32 %v2957, %v3045
        %3047 = vmatmul.bf16.gmra.mxu0 %v1010
        %v3048 = vpop.f32.mrf.mxu0
        %v3049 = vadd.f32 %v2960, %v3048
        %v3050 = vpop.f32.mrf.mxu0
        %v3051 = vadd.f32 %v2962, %v3050
        %3052 = vmatmul.bf16.gmra.mxu0 %v1016
        %v3053 = vpop.f32.mrf.mxu0
        %v3054 = vadd.f32 %v2965, %v3053
        %v3055 = vpop.f32.mrf.mxu0
        %v3056 = vadd.f32 %v2967, %v3055
        %3057 = vmatmul.bf16.gmra.mxu0 %v1022
        %v3058 = vpop.f32.mrf.mxu0
        %v3059 = vadd.f32 %v2970, %v3058
        %v3060 = vpop.f32.mrf.mxu0
        %v3061 = vadd.f32 %v2972, %v3060
        %3062 = vmatmul.bf16.gmra.mxu0 %v1028
        %v3063 = vpop.f32.mrf.mxu0
        %v3064 = vadd.f32 %v2975, %v3063
        %v3065 = vpop.f32.mrf.mxu0
        %v3066 = vadd.f32 %v2977, %v3065
        %3067 = vmatmul.bf16.gmra.mxu0 %v1034
        %v3068 = vpop.f32.mrf.mxu0
        %v3069 = vadd.f32 %v2980, %v3068
        %v3070 = vpop.f32.mrf.mxu0
        %v3071 = vadd.f32 %v2982, %v3070
        %3072 = vmatmul.bf16.gmra.mxu0 %v1040
        %v3073 = vpop.f32.mrf.mxu0
        %v3074 = vadd.f32 %v2985, %v3073
        %v3075 = vpop.f32.mrf.mxu0
        %v3076 = vadd.f32 %v2987, %v3075
        %3077 = vmatmul.bf16.gmra.mxu0 %v1046
        %v3078 = vpop.f32.mrf.mxu0
        %v3079 = vadd.f32 %v2990, %v3078
        %v3080 = vpop.f32.mrf.mxu0
        %v3081 = vadd.f32 %v2992, %v3080
        %3082 = vdwg.mxu0
        %3083 = vmatpush.bf16.msra.mxu0 %v1909
        %3084 = vmatpush.bf16.msra.mxu0 %v1905
        %3085 = vmatpush.bf16.msra.mxu0 %v1901
        %3086 = vmatpush.bf16.msra.mxu0 %v1897
        %3087 = vmatpush.bf16.msra.mxu0 %v1893
        %3088 = vmatpush.bf16.msra.mxu0 %v1889
        %3089 = vmatpush.bf16.msra.mxu0 %v1885
        %3090 = vmatpush.bf16.msra.mxu0 %v1881
        %3091 = vmatmul.bf16.gmra.mxu0 %v957
        %v3092 = vpop.f32.mrf.mxu0
        %v3093 = vadd.f32 %v3004, %v3092
        %v3094 = vpop.f32.mrf.mxu0
        %v3095 = vadd.f32 %v3006, %v3094
        %3096 = vmatmul.bf16.gmra.mxu0 %v963
        %v3097 = vpop.f32.mrf.mxu0
        %v3098 = vadd.f32 %v3009, %v3097
        %v3099 = vpop.f32.mrf.mxu0
        %v3100 = vadd.f32 %v3011, %v3099
        %3101 = vmatmul.bf16.gmra.mxu0 %v969
        %v3102 = vpop.f32.mrf.mxu0
        %v3103 = vadd.f32 %v3014, %v3102
        %v3104 = vpop.f32.mrf.mxu0
        %v3105 = vadd.f32 %v3016, %v3104
        %3106 = vmatmul.bf16.gmra.mxu0 %v975
        %v3107 = vpop.f32.mrf.mxu0
        %v3108 = vadd.f32 %v3019, %v3107
        %v3109 = vpop.f32.mrf.mxu0
        %v3110 = vadd.f32 %v3021, %v3109
        %3111 = vmatmul.bf16.gmra.mxu0 %v981
        %v3112 = vpop.f32.mrf.mxu0
        %v3113 = vadd.f32 %v3024, %v3112
        %v3114 = vpop.f32.mrf.mxu0
        %v3115 = vadd.f32 %v3026, %v3114
        %3116 = vmatmul.bf16.gmra.mxu0 %v987
        %v3117 = vpop.f32.mrf.mxu0
        %v3118 = vadd.f32 %v3029, %v3117
        %v3119 = vpop.f32.mrf.mxu0
        %v3120 = vadd.f32 %v3031, %v3119
        %3121 = vmatmul.bf16.gmra.mxu0 %v993
        %v3122 = vpop.f32.mrf.mxu0
        %v3123 = vadd.f32 %v3034, %v3122
        %v3124 = vpop.f32.mrf.mxu0
        %v3125 = vadd.f32 %v3036, %v3124
        %3126 = vmatmul.bf16.gmra.mxu0 %v999
        %v3127 = vpop.f32.mrf.mxu0
        %v3128 = vadd.f32 %v3039, %v3127
        %v3129 = vpop.f32.mrf.mxu0
        %v3130 = vadd.f32 %v3041, %v3129
        %3131 = vmatmul.bf16.gmra.mxu0 %v1005
        %v3132 = vpop.f32.mrf.mxu0
        %v3133 = vadd.f32 %v3044, %v3132
        %v3134 = vpop.f32.mrf.mxu0
        %v3135 = vadd.f32 %v3046, %v3134
        %3136 = vmatmul.bf16.gmra.mxu0 %v1011
        %v3137 = vpop.f32.mrf.mxu0
        %v3138 = vadd.f32 %v3049, %v3137
        %v3139 = vpop.f32.mrf.mxu0
        %v3140 = vadd.f32 %v3051, %v3139
        %3141 = vmatmul.bf16.gmra.mxu0 %v1017
        %v3142 = vpop.f32.mrf.mxu0
        %v3143 = vadd.f32 %v3054, %v3142
        %v3144 = vpop.f32.mrf.mxu0
        %v3145 = vadd.f32 %v3056, %v3144
        %3146 = vmatmul.bf16.gmra.mxu0 %v1023
        %v3147 = vpop.f32.mrf.mxu0
        %v3148 = vadd.f32 %v3059, %v3147
        %v3149 = vpop.f32.mrf.mxu0
        %v3150 = vadd.f32 %v3061, %v3149
        %3151 = vmatmul.bf16.gmra.mxu0 %v1029
        %v3152 = vpop.f32.mrf.mxu0
        %v3153 = vadd.f32 %v3064, %v3152
        %v3154 = vpop.f32.mrf.mxu0
        %v3155 = vadd.f32 %v3066, %v3154
        %3156 = vmatmul.bf16.gmra.mxu0 %v1035
        %v3157 = vpop.f32.mrf.mxu0
        %v3158 = vadd.f32 %v3069, %v3157
        %v3159 = vpop.f32.mrf.mxu0
        %v3160 = vadd.f32 %v3071, %v3159
        %3161 = vmatmul.bf16.gmra.mxu0 %v1041
        %v3162 = vpop.f32.mrf.mxu0
        %v3163 = vadd.f32 %v3074, %v3162
        %v3164 = vpop.f32.mrf.mxu0
        %v3165 = vadd.f32 %v3076, %v3164
        %3166 = vmatmul.bf16.gmra.mxu0 %v1047
        %v3167 = vpop.f32.mrf.mxu0
        %v3168 = vadd.f32 %v3079, %v3167
        %v3169 = vpop.f32.mrf.mxu0
        %v3170 = vadd.f32 %v3081, %v3169
        %3171 = vdwg.mxu0
        %3172 = vmatpush.bf16.msra.mxu0 %v1750
        %3173 = vmatpush.bf16.msra.mxu0 %v1746
        %3174 = vmatpush.bf16.msra.mxu0 %v1742
        %3175 = vmatpush.bf16.msra.mxu0 %v1738
        %3176 = vmatpush.bf16.msra.mxu0 %v1734
        %3177 = vmatpush.bf16.msra.mxu0 %v1730
        %3178 = vmatpush.bf16.msra.mxu0 %v1726
        %3179 = vmatpush.bf16.msra.mxu0 %v1722
        %3180 = vmatmul.bf16.gmra.mxu0 %v952
        %v3181 = vpop.f32.mrf.mxu0
        %v3182 = vadd.f32 %v658, %v3181
        %v3183 = vpop.f32.mrf.mxu0
        %v3184 = vadd.f32 %v658, %v3183
        %3185 = vmatmul.bf16.gmra.mxu0 %v958
        %v3186 = vpop.f32.mrf.mxu0
        %v3187 = vadd.f32 %v658, %v3186
        %v3188 = vpop.f32.mrf.mxu0
        %v3189 = vadd.f32 %v658, %v3188
        %3190 = vmatmul.bf16.gmra.mxu0 %v964
        %v3191 = vpop.f32.mrf.mxu0
        %v3192 = vadd.f32 %v658, %v3191
        %v3193 = vpop.f32.mrf.mxu0
        %v3194 = vadd.f32 %v658, %v3193
        %3195 = vmatmul.bf16.gmra.mxu0 %v970
        %v3196 = vpop.f32.mrf.mxu0
        %v3197 = vadd.f32 %v658, %v3196
        %v3198 = vpop.f32.mrf.mxu0
        %v3199 = vadd.f32 %v658, %v3198
        %3200 = vmatmul.bf16.gmra.mxu0 %v976
        %v3201 = vpop.f32.mrf.mxu0
        %v3202 = vadd.f32 %v658, %v3201
        %v3203 = vpop.f32.mrf.mxu0
        %v3204 = vadd.f32 %v658, %v3203
        %3205 = vmatmul.bf16.gmra.mxu0 %v982
        %v3206 = vpop.f32.mrf.mxu0
        %v3207 = vadd.f32 %v658, %v3206
        %v3208 = vpop.f32.mrf.mxu0
        %v3209 = vadd.f32 %v658, %v3208
        %3210 = vmatmul.bf16.gmra.mxu0 %v988
        %v3211 = vpop.f32.mrf.mxu0
        %v3212 = vadd.f32 %v658, %v3211
        %v3213 = vpop.f32.mrf.mxu0
        %v3214 = vadd.f32 %v658, %v3213
        %3215 = vmatmul.bf16.gmra.mxu0 %v994
        %v3216 = vpop.f32.mrf.mxu0
        %v3217 = vadd.f32 %v658, %v3216
        %v3218 = vpop.f32.mrf.mxu0
        %v3219 = vadd.f32 %v658, %v3218
        %3220 = vmatmul.bf16.gmra.mxu0 %v1000
        %v3221 = vpop.f32.mrf.mxu0
        %v3222 = vadd.f32 %v658, %v3221
        %v3223 = vpop.f32.mrf.mxu0
        %v3224 = vadd.f32 %v658, %v3223
        %3225 = vmatmul.bf16.gmra.mxu0 %v1006
        %v3226 = vpop.f32.mrf.mxu0
        %v3227 = vadd.f32 %v658, %v3226
        %v3228 = vpop.f32.mrf.mxu0
        %v3229 = vadd.f32 %v658, %v3228
        %3230 = vmatmul.bf16.gmra.mxu0 %v1012
        %v3231 = vpop.f32.mrf.mxu0
        %v3232 = vadd.f32 %v658, %v3231
        %v3233 = vpop.f32.mrf.mxu0
        %v3234 = vadd.f32 %v658, %v3233
        %3235 = vmatmul.bf16.gmra.mxu0 %v1018
        %v3236 = vpop.f32.mrf.mxu0
        %v3237 = vadd.f32 %v658, %v3236
        %v3238 = vpop.f32.mrf.mxu0
        %v3239 = vadd.f32 %v658, %v3238
        %3240 = vmatmul.bf16.gmra.mxu0 %v1024
        %v3241 = vpop.f32.mrf.mxu0
        %v3242 = vadd.f32 %v658, %v3241
        %v3243 = vpop.f32.mrf.mxu0
        %v3244 = vadd.f32 %v658, %v3243
        %3245 = vmatmul.bf16.gmra.mxu0 %v1030
        %v3246 = vpop.f32.mrf.mxu0
        %v3247 = vadd.f32 %v658, %v3246
        %v3248 = vpop.f32.mrf.mxu0
        %v3249 = vadd.f32 %v658, %v3248
        %3250 = vmatmul.bf16.gmra.mxu0 %v1036
        %v3251 = vpop.f32.mrf.mxu0
        %v3252 = vadd.f32 %v658, %v3251
        %v3253 = vpop.f32.mrf.mxu0
        %v3254 = vadd.f32 %v658, %v3253
        %3255 = vmatmul.bf16.gmra.mxu0 %v1042
        %v3256 = vpop.f32.mrf.mxu0
        %v3257 = vadd.f32 %v658, %v3256
        %v3258 = vpop.f32.mrf.mxu0
        %v3259 = vadd.f32 %v658, %v3258
        %3260 = vdwg.mxu0
        %3261 = vmatpush.bf16.msra.mxu0 %v1782
        %3262 = vmatpush.bf16.msra.mxu0 %v1778
        %3263 = vmatpush.bf16.msra.mxu0 %v1774
        %3264 = vmatpush.bf16.msra.mxu0 %v1770
        %3265 = vmatpush.bf16.msra.mxu0 %v1766
        %3266 = vmatpush.bf16.msra.mxu0 %v1762
        %3267 = vmatpush.bf16.msra.mxu0 %v1758
        %3268 = vmatpush.bf16.msra.mxu0 %v1754
        %3269 = vmatmul.bf16.gmra.mxu0 %v953
        %v3270 = vpop.f32.mrf.mxu0
        %v3271 = vadd.f32 %v3182, %v3270
        %v3272 = vpop.f32.mrf.mxu0
        %v3273 = vadd.f32 %v3184, %v3272
        %3274 = vmatmul.bf16.gmra.mxu0 %v959
        %v3275 = vpop.f32.mrf.mxu0
        %v3276 = vadd.f32 %v3187, %v3275
        %v3277 = vpop.f32.mrf.mxu0
        %v3278 = vadd.f32 %v3189, %v3277
        %3279 = vmatmul.bf16.gmra.mxu0 %v965
        %v3280 = vpop.f32.mrf.mxu0
        %v3281 = vadd.f32 %v3192, %v3280
        %v3282 = vpop.f32.mrf.mxu0
        %v3283 = vadd.f32 %v3194, %v3282
        %3284 = vmatmul.bf16.gmra.mxu0 %v971
        %v3285 = vpop.f32.mrf.mxu0
        %v3286 = vadd.f32 %v3197, %v3285
        %v3287 = vpop.f32.mrf.mxu0
        %v3288 = vadd.f32 %v3199, %v3287
        %3289 = vmatmul.bf16.gmra.mxu0 %v977
        %v3290 = vpop.f32.mrf.mxu0
        %v3291 = vadd.f32 %v3202, %v3290
        %v3292 = vpop.f32.mrf.mxu0
        %v3293 = vadd.f32 %v3204, %v3292
        %3294 = vmatmul.bf16.gmra.mxu0 %v983
        %v3295 = vpop.f32.mrf.mxu0
        %v3296 = vadd.f32 %v3207, %v3295
        %v3297 = vpop.f32.mrf.mxu0
        %v3298 = vadd.f32 %v3209, %v3297
        %3299 = vmatmul.bf16.gmra.mxu0 %v989
        %v3300 = vpop.f32.mrf.mxu0
        %v3301 = vadd.f32 %v3212, %v3300
        %v3302 = vpop.f32.mrf.mxu0
        %v3303 = vadd.f32 %v3214, %v3302
        %3304 = vmatmul.bf16.gmra.mxu0 %v995
        %v3305 = vpop.f32.mrf.mxu0
        %v3306 = vadd.f32 %v3217, %v3305
        %v3307 = vpop.f32.mrf.mxu0
        %v3308 = vadd.f32 %v3219, %v3307
        %3309 = vmatmul.bf16.gmra.mxu0 %v1001
        %v3310 = vpop.f32.mrf.mxu0
        %v3311 = vadd.f32 %v3222, %v3310
        %v3312 = vpop.f32.mrf.mxu0
        %v3313 = vadd.f32 %v3224, %v3312
        %3314 = vmatmul.bf16.gmra.mxu0 %v1007
        %v3315 = vpop.f32.mrf.mxu0
        %v3316 = vadd.f32 %v3227, %v3315
        %v3317 = vpop.f32.mrf.mxu0
        %v3318 = vadd.f32 %v3229, %v3317
        %3319 = vmatmul.bf16.gmra.mxu0 %v1013
        %v3320 = vpop.f32.mrf.mxu0
        %v3321 = vadd.f32 %v3232, %v3320
        %v3322 = vpop.f32.mrf.mxu0
        %v3323 = vadd.f32 %v3234, %v3322
        %3324 = vmatmul.bf16.gmra.mxu0 %v1019
        %v3325 = vpop.f32.mrf.mxu0
        %v3326 = vadd.f32 %v3237, %v3325
        %v3327 = vpop.f32.mrf.mxu0
        %v3328 = vadd.f32 %v3239, %v3327
        %3329 = vmatmul.bf16.gmra.mxu0 %v1025
        %v3330 = vpop.f32.mrf.mxu0
        %v3331 = vadd.f32 %v3242, %v3330
        %v3332 = vpop.f32.mrf.mxu0
        %v3333 = vadd.f32 %v3244, %v3332
        %3334 = vmatmul.bf16.gmra.mxu0 %v1031
        %v3335 = vpop.f32.mrf.mxu0
        %v3336 = vadd.f32 %v3247, %v3335
        %v3337 = vpop.f32.mrf.mxu0
        %v3338 = vadd.f32 %v3249, %v3337
        %3339 = vmatmul.bf16.gmra.mxu0 %v1037
        %v3340 = vpop.f32.mrf.mxu0
        %v3341 = vadd.f32 %v3252, %v3340
        %v3342 = vpop.f32.mrf.mxu0
        %v3343 = vadd.f32 %v3254, %v3342
        %3344 = vmatmul.bf16.gmra.mxu0 %v1043
        %v3345 = vpop.f32.mrf.mxu0
        %v3346 = vadd.f32 %v3257, %v3345
        %v3347 = vpop.f32.mrf.mxu0
        %v3348 = vadd.f32 %v3259, %v3347
        %3349 = vdwg.mxu0
        %3350 = vmatpush.bf16.msra.mxu0 %v1814
        %3351 = vmatpush.bf16.msra.mxu0 %v1810
        %3352 = vmatpush.bf16.msra.mxu0 %v1806
        %3353 = vmatpush.bf16.msra.mxu0 %v1802
        %3354 = vmatpush.bf16.msra.mxu0 %v1798
        %3355 = vmatpush.bf16.msra.mxu0 %v1794
        %3356 = vmatpush.bf16.msra.mxu0 %v1790
        %3357 = vmatpush.bf16.msra.mxu0 %v1786
        %3358 = vmatmul.bf16.gmra.mxu0 %v954
        %v3359 = vpop.f32.mrf.mxu0
        %v3360 = vadd.f32 %v3271, %v3359
        %v3361 = vpop.f32.mrf.mxu0
        %v3362 = vadd.f32 %v3273, %v3361
        %3363 = vmatmul.bf16.gmra.mxu0 %v960
        %v3364 = vpop.f32.mrf.mxu0
        %v3365 = vadd.f32 %v3276, %v3364
        %v3366 = vpop.f32.mrf.mxu0
        %v3367 = vadd.f32 %v3278, %v3366
        %3368 = vmatmul.bf16.gmra.mxu0 %v966
        %v3369 = vpop.f32.mrf.mxu0
        %v3370 = vadd.f32 %v3281, %v3369
        %v3371 = vpop.f32.mrf.mxu0
        %v3372 = vadd.f32 %v3283, %v3371
        %3373 = vmatmul.bf16.gmra.mxu0 %v972
        %v3374 = vpop.f32.mrf.mxu0
        %v3375 = vadd.f32 %v3286, %v3374
        %v3376 = vpop.f32.mrf.mxu0
        %v3377 = vadd.f32 %v3288, %v3376
        %3378 = vmatmul.bf16.gmra.mxu0 %v978
        %v3379 = vpop.f32.mrf.mxu0
        %v3380 = vadd.f32 %v3291, %v3379
        %v3381 = vpop.f32.mrf.mxu0
        %v3382 = vadd.f32 %v3293, %v3381
        %3383 = vmatmul.bf16.gmra.mxu0 %v984
        %v3384 = vpop.f32.mrf.mxu0
        %v3385 = vadd.f32 %v3296, %v3384
        %v3386 = vpop.f32.mrf.mxu0
        %v3387 = vadd.f32 %v3298, %v3386
        %3388 = vmatmul.bf16.gmra.mxu0 %v990
        %v3389 = vpop.f32.mrf.mxu0
        %v3390 = vadd.f32 %v3301, %v3389
        %v3391 = vpop.f32.mrf.mxu0
        %v3392 = vadd.f32 %v3303, %v3391
        %3393 = vmatmul.bf16.gmra.mxu0 %v996
        %v3394 = vpop.f32.mrf.mxu0
        %v3395 = vadd.f32 %v3306, %v3394
        %v3396 = vpop.f32.mrf.mxu0
        %v3397 = vadd.f32 %v3308, %v3396
        %3398 = vmatmul.bf16.gmra.mxu0 %v1002
        %v3399 = vpop.f32.mrf.mxu0
        %v3400 = vadd.f32 %v3311, %v3399
        %v3401 = vpop.f32.mrf.mxu0
        %v3402 = vadd.f32 %v3313, %v3401
        %3403 = vmatmul.bf16.gmra.mxu0 %v1008
        %v3404 = vpop.f32.mrf.mxu0
        %v3405 = vadd.f32 %v3316, %v3404
        %v3406 = vpop.f32.mrf.mxu0
        %v3407 = vadd.f32 %v3318, %v3406
        %3408 = vmatmul.bf16.gmra.mxu0 %v1014
        %v3409 = vpop.f32.mrf.mxu0
        %v3410 = vadd.f32 %v3321, %v3409
        %v3411 = vpop.f32.mrf.mxu0
        %v3412 = vadd.f32 %v3323, %v3411
        %3413 = vmatmul.bf16.gmra.mxu0 %v1020
        %v3414 = vpop.f32.mrf.mxu0
        %v3415 = vadd.f32 %v3326, %v3414
        %v3416 = vpop.f32.mrf.mxu0
        %v3417 = vadd.f32 %v3328, %v3416
        %3418 = vmatmul.bf16.gmra.mxu0 %v1026
        %v3419 = vpop.f32.mrf.mxu0
        %v3420 = vadd.f32 %v3331, %v3419
        %v3421 = vpop.f32.mrf.mxu0
        %v3422 = vadd.f32 %v3333, %v3421
        %3423 = vmatmul.bf16.gmra.mxu0 %v1032
        %v3424 = vpop.f32.mrf.mxu0
        %v3425 = vadd.f32 %v3336, %v3424
        %v3426 = vpop.f32.mrf.mxu0
        %v3427 = vadd.f32 %v3338, %v3426
        %3428 = vmatmul.bf16.gmra.mxu0 %v1038
        %v3429 = vpop.f32.mrf.mxu0
        %v3430 = vadd.f32 %v3341, %v3429
        %v3431 = vpop.f32.mrf.mxu0
        %v3432 = vadd.f32 %v3343, %v3431
        %3433 = vmatmul.bf16.gmra.mxu0 %v1044
        %v3434 = vpop.f32.mrf.mxu0
        %v3435 = vadd.f32 %v3346, %v3434
        %v3436 = vpop.f32.mrf.mxu0
        %v3437 = vadd.f32 %v3348, %v3436
        %3438 = vdwg.mxu0
        %3439 = vmatpush.bf16.msra.mxu0 %v1846
        %3440 = vmatpush.bf16.msra.mxu0 %v1842
        %3441 = vmatpush.bf16.msra.mxu0 %v1838
        %3442 = vmatpush.bf16.msra.mxu0 %v1834
        %3443 = vmatpush.bf16.msra.mxu0 %v1830
        %3444 = vmatpush.bf16.msra.mxu0 %v1826
        %3445 = vmatpush.bf16.msra.mxu0 %v1822
        %3446 = vmatpush.bf16.msra.mxu0 %v1818
        %3447 = vmatmul.bf16.gmra.mxu0 %v955
        %v3448 = vpop.f32.mrf.mxu0
        %v3449 = vadd.f32 %v3360, %v3448
        %v3450 = vpop.f32.mrf.mxu0
        %v3451 = vadd.f32 %v3362, %v3450
        %3452 = vmatmul.bf16.gmra.mxu0 %v961
        %v3453 = vpop.f32.mrf.mxu0
        %v3454 = vadd.f32 %v3365, %v3453
        %v3455 = vpop.f32.mrf.mxu0
        %v3456 = vadd.f32 %v3367, %v3455
        %3457 = vmatmul.bf16.gmra.mxu0 %v967
        %v3458 = vpop.f32.mrf.mxu0
        %v3459 = vadd.f32 %v3370, %v3458
        %v3460 = vpop.f32.mrf.mxu0
        %v3461 = vadd.f32 %v3372, %v3460
        %3462 = vmatmul.bf16.gmra.mxu0 %v973
        %v3463 = vpop.f32.mrf.mxu0
        %v3464 = vadd.f32 %v3375, %v3463
        %v3465 = vpop.f32.mrf.mxu0
        %v3466 = vadd.f32 %v3377, %v3465
        %3467 = vmatmul.bf16.gmra.mxu0 %v979
        %v3468 = vpop.f32.mrf.mxu0
        %v3469 = vadd.f32 %v3380, %v3468
        %v3470 = vpop.f32.mrf.mxu0
        %v3471 = vadd.f32 %v3382, %v3470
        %3472 = vmatmul.bf16.gmra.mxu0 %v985
        %v3473 = vpop.f32.mrf.mxu0
        %v3474 = vadd.f32 %v3385, %v3473
        %v3475 = vpop.f32.mrf.mxu0
        %v3476 = vadd.f32 %v3387, %v3475
        %3477 = vmatmul.bf16.gmra.mxu0 %v991
        %v3478 = vpop.f32.mrf.mxu0
        %v3479 = vadd.f32 %v3390, %v3478
        %v3480 = vpop.f32.mrf.mxu0
        %v3481 = vadd.f32 %v3392, %v3480
        %3482 = vmatmul.bf16.gmra.mxu0 %v997
        %v3483 = vpop.f32.mrf.mxu0
        %v3484 = vadd.f32 %v3395, %v3483
        %v3485 = vpop.f32.mrf.mxu0
        %v3486 = vadd.f32 %v3397, %v3485
        %3487 = vmatmul.bf16.gmra.mxu0 %v1003
        %v3488 = vpop.f32.mrf.mxu0
        %v3489 = vadd.f32 %v3400, %v3488
        %v3490 = vpop.f32.mrf.mxu0
        %v3491 = vadd.f32 %v3402, %v3490
        %3492 = vmatmul.bf16.gmra.mxu0 %v1009
        %v3493 = vpop.f32.mrf.mxu0
        %v3494 = vadd.f32 %v3405, %v3493
        %v3495 = vpop.f32.mrf.mxu0
        %v3496 = vadd.f32 %v3407, %v3495
        %3497 = vmatmul.bf16.gmra.mxu0 %v1015
        %v3498 = vpop.f32.mrf.mxu0
        %v3499 = vadd.f32 %v3410, %v3498
        %v3500 = vpop.f32.mrf.mxu0
        %v3501 = vadd.f32 %v3412, %v3500
        %3502 = vmatmul.bf16.gmra.mxu0 %v1021
        %v3503 = vpop.f32.mrf.mxu0
        %v3504 = vadd.f32 %v3415, %v3503
        %v3505 = vpop.f32.mrf.mxu0
        %v3506 = vadd.f32 %v3417, %v3505
        %3507 = vmatmul.bf16.gmra.mxu0 %v1027
        %v3508 = vpop.f32.mrf.mxu0
        %v3509 = vadd.f32 %v3420, %v3508
        %v3510 = vpop.f32.mrf.mxu0
        %v3511 = vadd.f32 %v3422, %v3510
        %3512 = vmatmul.bf16.gmra.mxu0 %v1033
        %v3513 = vpop.f32.mrf.mxu0
        %v3514 = vadd.f32 %v3425, %v3513
        %v3515 = vpop.f32.mrf.mxu0
        %v3516 = vadd.f32 %v3427, %v3515
        %3517 = vmatmul.bf16.gmra.mxu0 %v1039
        %v3518 = vpop.f32.mrf.mxu0
        %v3519 = vadd.f32 %v3430, %v3518
        %v3520 = vpop.f32.mrf.mxu0
        %v3521 = vadd.f32 %v3432, %v3520
        %3522 = vmatmul.bf16.gmra.mxu0 %v1045
        %v3523 = vpop.f32.mrf.mxu0
        %v3524 = vadd.f32 %v3435, %v3523
        %v3525 = vpop.f32.mrf.mxu0
        %v3526 = vadd.f32 %v3437, %v3525
        %3527 = vdwg.mxu0
        %3528 = vmatpush.bf16.msra.mxu0 %v1878
        %3529 = vmatpush.bf16.msra.mxu0 %v1874
        %3530 = vmatpush.bf16.msra.mxu0 %v1870
        %3531 = vmatpush.bf16.msra.mxu0 %v1866
        %3532 = vmatpush.bf16.msra.mxu0 %v1862
        %3533 = vmatpush.bf16.msra.mxu0 %v1858
        %3534 = vmatpush.bf16.msra.mxu0 %v1854
        %3535 = vmatpush.bf16.msra.mxu0 %v1850
        %3536 = vmatmul.bf16.gmra.mxu0 %v956
        %v3537 = vpop.f32.mrf.mxu0
        %v3538 = vadd.f32 %v3449, %v3537
        %v3539 = vpop.f32.mrf.mxu0
        %v3540 = vadd.f32 %v3451, %v3539
        %3541 = vmatmul.bf16.gmra.mxu0 %v962
        %v3542 = vpop.f32.mrf.mxu0
        %v3543 = vadd.f32 %v3454, %v3542
        %v3544 = vpop.f32.mrf.mxu0
        %v3545 = vadd.f32 %v3456, %v3544
        %3546 = vmatmul.bf16.gmra.mxu0 %v968
        %v3547 = vpop.f32.mrf.mxu0
        %v3548 = vadd.f32 %v3459, %v3547
        %v3549 = vpop.f32.mrf.mxu0
        %v3550 = vadd.f32 %v3461, %v3549
        %3551 = vmatmul.bf16.gmra.mxu0 %v974
        %v3552 = vpop.f32.mrf.mxu0
        %v3553 = vadd.f32 %v3464, %v3552
        %v3554 = vpop.f32.mrf.mxu0
        %v3555 = vadd.f32 %v3466, %v3554
        %3556 = vmatmul.bf16.gmra.mxu0 %v980
        %v3557 = vpop.f32.mrf.mxu0
        %v3558 = vadd.f32 %v3469, %v3557
        %v3559 = vpop.f32.mrf.mxu0
        %v3560 = vadd.f32 %v3471, %v3559
        %3561 = vmatmul.bf16.gmra.mxu0 %v986
        %v3562 = vpop.f32.mrf.mxu0
        %v3563 = vadd.f32 %v3474, %v3562
        %v3564 = vpop.f32.mrf.mxu0
        %v3565 = vadd.f32 %v3476, %v3564
        %3566 = vmatmul.bf16.gmra.mxu0 %v992
        %v3567 = vpop.f32.mrf.mxu0
        %v3568 = vadd.f32 %v3479, %v3567
        %v3569 = vpop.f32.mrf.mxu0
        %v3570 = vadd.f32 %v3481, %v3569
        %3571 = vmatmul.bf16.gmra.mxu0 %v998
        %v3572 = vpop.f32.mrf.mxu0
        %v3573 = vadd.f32 %v3484, %v3572
        %v3574 = vpop.f32.mrf.mxu0
        %v3575 = vadd.f32 %v3486, %v3574
        %3576 = vmatmul.bf16.gmra.mxu0 %v1004
        %v3577 = vpop.f32.mrf.mxu0
        %v3578 = vadd.f32 %v3489, %v3577
        %v3579 = vpop.f32.mrf.mxu0
        %v3580 = vadd.f32 %v3491, %v3579
        %3581 = vmatmul.bf16.gmra.mxu0 %v1010
        %v3582 = vpop.f32.mrf.mxu0
        %v3583 = vadd.f32 %v3494, %v3582
        %v3584 = vpop.f32.mrf.mxu0
        %v3585 = vadd.f32 %v3496, %v3584
        %3586 = vmatmul.bf16.gmra.mxu0 %v1016
        %v3587 = vpop.f32.mrf.mxu0
        %v3588 = vadd.f32 %v3499, %v3587
        %v3589 = vpop.f32.mrf.mxu0
        %v3590 = vadd.f32 %v3501, %v3589
        %3591 = vmatmul.bf16.gmra.mxu0 %v1022
        %v3592 = vpop.f32.mrf.mxu0
        %v3593 = vadd.f32 %v3504, %v3592
        %v3594 = vpop.f32.mrf.mxu0
        %v3595 = vadd.f32 %v3506, %v3594
        %3596 = vmatmul.bf16.gmra.mxu0 %v1028
        %v3597 = vpop.f32.mrf.mxu0
        %v3598 = vadd.f32 %v3509, %v3597
        %v3599 = vpop.f32.mrf.mxu0
        %v3600 = vadd.f32 %v3511, %v3599
        %3601 = vmatmul.bf16.gmra.mxu0 %v1034
        %v3602 = vpop.f32.mrf.mxu0
        %v3603 = vadd.f32 %v3514, %v3602
        %v3604 = vpop.f32.mrf.mxu0
        %v3605 = vadd.f32 %v3516, %v3604
        %3606 = vmatmul.bf16.gmra.mxu0 %v1040
        %v3607 = vpop.f32.mrf.mxu0
        %v3608 = vadd.f32 %v3519, %v3607
        %v3609 = vpop.f32.mrf.mxu0
        %v3610 = vadd.f32 %v3521, %v3609
        %3611 = vmatmul.bf16.gmra.mxu0 %v1046
        %v3612 = vpop.f32.mrf.mxu0
        %v3613 = vadd.f32 %v3524, %v3612
        %v3614 = vpop.f32.mrf.mxu0
        %v3615 = vadd.f32 %v3526, %v3614
        %3616 = vdwg.mxu0
        %3617 = vmatpush.bf16.msra.mxu0 %v1910
        %3618 = vmatpush.bf16.msra.mxu0 %v1906
        %3619 = vmatpush.bf16.msra.mxu0 %v1902
        %3620 = vmatpush.bf16.msra.mxu0 %v1898
        %3621 = vmatpush.bf16.msra.mxu0 %v1894
        %3622 = vmatpush.bf16.msra.mxu0 %v1890
        %3623 = vmatpush.bf16.msra.mxu0 %v1886
        %3624 = vmatpush.bf16.msra.mxu0 %v1882
        %3625 = vmatmul.bf16.gmra.mxu0 %v957
        %v3626 = vpop.f32.mrf.mxu0
        %v3627 = vadd.f32 %v3538, %v3626
        %v3628 = vpop.f32.mrf.mxu0
        %v3629 = vadd.f32 %v3540, %v3628
        %3630 = vmatmul.bf16.gmra.mxu0 %v963
        %v3631 = vpop.f32.mrf.mxu0
        %v3632 = vadd.f32 %v3543, %v3631
        %v3633 = vpop.f32.mrf.mxu0
        %v3634 = vadd.f32 %v3545, %v3633
        %3635 = vmatmul.bf16.gmra.mxu0 %v969
        %v3636 = vpop.f32.mrf.mxu0
        %v3637 = vadd.f32 %v3548, %v3636
        %v3638 = vpop.f32.mrf.mxu0
        %v3639 = vadd.f32 %v3550, %v3638
        %3640 = vmatmul.bf16.gmra.mxu0 %v975
        %v3641 = vpop.f32.mrf.mxu0
        %v3642 = vadd.f32 %v3553, %v3641
        %v3643 = vpop.f32.mrf.mxu0
        %v3644 = vadd.f32 %v3555, %v3643
        %3645 = vmatmul.bf16.gmra.mxu0 %v981
        %v3646 = vpop.f32.mrf.mxu0
        %v3647 = vadd.f32 %v3558, %v3646
        %v3648 = vpop.f32.mrf.mxu0
        %v3649 = vadd.f32 %v3560, %v3648
        %3650 = vmatmul.bf16.gmra.mxu0 %v987
        %v3651 = vpop.f32.mrf.mxu0
        %v3652 = vadd.f32 %v3563, %v3651
        %v3653 = vpop.f32.mrf.mxu0
        %v3654 = vadd.f32 %v3565, %v3653
        %3655 = vmatmul.bf16.gmra.mxu0 %v993
        %v3656 = vpop.f32.mrf.mxu0
        %v3657 = vadd.f32 %v3568, %v3656
        %v3658 = vpop.f32.mrf.mxu0
        %v3659 = vadd.f32 %v3570, %v3658
        %3660 = vmatmul.bf16.gmra.mxu0 %v999
        %v3661 = vpop.f32.mrf.mxu0
        %v3662 = vadd.f32 %v3573, %v3661
        %v3663 = vpop.f32.mrf.mxu0
        %v3664 = vadd.f32 %v3575, %v3663
        %3665 = vmatmul.bf16.gmra.mxu0 %v1005
        %v3666 = vpop.f32.mrf.mxu0
        %v3667 = vadd.f32 %v3578, %v3666
        %v3668 = vpop.f32.mrf.mxu0
        %v3669 = vadd.f32 %v3580, %v3668
        %3670 = vmatmul.bf16.gmra.mxu0 %v1011
        %v3671 = vpop.f32.mrf.mxu0
        %v3672 = vadd.f32 %v3583, %v3671
        %v3673 = vpop.f32.mrf.mxu0
        %v3674 = vadd.f32 %v3585, %v3673
        %3675 = vmatmul.bf16.gmra.mxu0 %v1017
        %v3676 = vpop.f32.mrf.mxu0
        %v3677 = vadd.f32 %v3588, %v3676
        %v3678 = vpop.f32.mrf.mxu0
        %v3679 = vadd.f32 %v3590, %v3678
        %3680 = vmatmul.bf16.gmra.mxu0 %v1023
        %v3681 = vpop.f32.mrf.mxu0
        %v3682 = vadd.f32 %v3593, %v3681
        %v3683 = vpop.f32.mrf.mxu0
        %v3684 = vadd.f32 %v3595, %v3683
        %3685 = vmatmul.bf16.gmra.mxu0 %v1029
        %v3686 = vpop.f32.mrf.mxu0
        %v3687 = vadd.f32 %v3598, %v3686
        %v3688 = vpop.f32.mrf.mxu0
        %v3689 = vadd.f32 %v3600, %v3688
        %3690 = vmatmul.bf16.gmra.mxu0 %v1035
        %v3691 = vpop.f32.mrf.mxu0
        %v3692 = vadd.f32 %v3603, %v3691
        %v3693 = vpop.f32.mrf.mxu0
        %v3694 = vadd.f32 %v3605, %v3693
        %3695 = vmatmul.bf16.gmra.mxu0 %v1041
        %v3696 = vpop.f32.mrf.mxu0
        %v3697 = vadd.f32 %v3608, %v3696
        %v3698 = vpop.f32.mrf.mxu0
        %v3699 = vadd.f32 %v3610, %v3698
        %3700 = vmatmul.bf16.gmra.mxu0 %v1047
        %v3701 = vpop.f32.mrf.mxu0
        %v3702 = vadd.f32 %v3613, %v3701
        %v3703 = vpop.f32.mrf.mxu0
        %v3704 = vadd.f32 %v3615, %v3703
        %3705 = vdwg.mxu0
        %3706 = vmatpush.bf16.msra.mxu0 %v1751
        %3707 = vmatpush.bf16.msra.mxu0 %v1747
        %3708 = vmatpush.bf16.msra.mxu0 %v1743
        %3709 = vmatpush.bf16.msra.mxu0 %v1739
        %3710 = vmatpush.bf16.msra.mxu0 %v1735
        %3711 = vmatpush.bf16.msra.mxu0 %v1731
        %3712 = vmatpush.bf16.msra.mxu0 %v1727
        %3713 = vmatpush.bf16.msra.mxu0 %v1723
        %3714 = vmatmul.bf16.gmra.mxu0 %v952
        %v3715 = vpop.f32.mrf.mxu0
        %v3716 = vadd.f32 %v659, %v3715
        %v3717 = vpop.f32.mrf.mxu0
        %v3718 = vadd.f32 %v659, %v3717
        %3719 = vmatmul.bf16.gmra.mxu0 %v958
        %v3720 = vpop.f32.mrf.mxu0
        %v3721 = vadd.f32 %v659, %v3720
        %v3722 = vpop.f32.mrf.mxu0
        %v3723 = vadd.f32 %v659, %v3722
        %3724 = vmatmul.bf16.gmra.mxu0 %v964
        %v3725 = vpop.f32.mrf.mxu0
        %v3726 = vadd.f32 %v659, %v3725
        %v3727 = vpop.f32.mrf.mxu0
        %v3728 = vadd.f32 %v659, %v3727
        %3729 = vmatmul.bf16.gmra.mxu0 %v970
        %v3730 = vpop.f32.mrf.mxu0
        %v3731 = vadd.f32 %v659, %v3730
        %v3732 = vpop.f32.mrf.mxu0
        %v3733 = vadd.f32 %v659, %v3732
        %3734 = vmatmul.bf16.gmra.mxu0 %v976
        %v3735 = vpop.f32.mrf.mxu0
        %v3736 = vadd.f32 %v659, %v3735
        %v3737 = vpop.f32.mrf.mxu0
        %v3738 = vadd.f32 %v659, %v3737
        %3739 = vmatmul.bf16.gmra.mxu0 %v982
        %v3740 = vpop.f32.mrf.mxu0
        %v3741 = vadd.f32 %v659, %v3740
        %v3742 = vpop.f32.mrf.mxu0
        %v3743 = vadd.f32 %v659, %v3742
        %3744 = vmatmul.bf16.gmra.mxu0 %v988
        %v3745 = vpop.f32.mrf.mxu0
        %v3746 = vadd.f32 %v659, %v3745
        %v3747 = vpop.f32.mrf.mxu0
        %v3748 = vadd.f32 %v659, %v3747
        %3749 = vmatmul.bf16.gmra.mxu0 %v994
        %v3750 = vpop.f32.mrf.mxu0
        %v3751 = vadd.f32 %v659, %v3750
        %v3752 = vpop.f32.mrf.mxu0
        %v3753 = vadd.f32 %v659, %v3752
        %3754 = vmatmul.bf16.gmra.mxu0 %v1000
        %v3755 = vpop.f32.mrf.mxu0
        %v3756 = vadd.f32 %v659, %v3755
        %v3757 = vpop.f32.mrf.mxu0
        %v3758 = vadd.f32 %v659, %v3757
        %3759 = vmatmul.bf16.gmra.mxu0 %v1006
        %v3760 = vpop.f32.mrf.mxu0
        %v3761 = vadd.f32 %v659, %v3760
        %v3762 = vpop.f32.mrf.mxu0
        %v3763 = vadd.f32 %v659, %v3762
        %3764 = vmatmul.bf16.gmra.mxu0 %v1012
        %v3765 = vpop.f32.mrf.mxu0
        %v3766 = vadd.f32 %v659, %v3765
        %v3767 = vpop.f32.mrf.mxu0
        %v3768 = vadd.f32 %v659, %v3767
        %3769 = vmatmul.bf16.gmra.mxu0 %v1018
        %v3770 = vpop.f32.mrf.mxu0
        %v3771 = vadd.f32 %v659, %v3770
        %v3772 = vpop.f32.mrf.mxu0
        %v3773 = vadd.f32 %v659, %v3772
        %3774 = vmatmul.bf16.gmra.mxu0 %v1024
        %v3775 = vpop.f32.mrf.mxu0
        %v3776 = vadd.f32 %v659, %v3775
        %v3777 = vpop.f32.mrf.mxu0
        %v3778 = vadd.f32 %v659, %v3777
        %3779 = vmatmul.bf16.gmra.mxu0 %v1030
        %v3780 = vpop.f32.mrf.mxu0
        %v3781 = vadd.f32 %v659, %v3780
        %v3782 = vpop.f32.mrf.mxu0
        %v3783 = vadd.f32 %v659, %v3782
        %3784 = vmatmul.bf16.gmra.mxu0 %v1036
        %v3785 = vpop.f32.mrf.mxu0
        %v3786 = vadd.f32 %v659, %v3785
        %v3787 = vpop.f32.mrf.mxu0
        %v3788 = vadd.f32 %v659, %v3787
        %3789 = vmatmul.bf16.gmra.mxu0 %v1042
        %v3790 = vpop.f32.mrf.mxu0
        %v3791 = vadd.f32 %v659, %v3790
        %v3792 = vpop.f32.mrf.mxu0
        %v3793 = vadd.f32 %v659, %v3792
        %3794 = vdwg.mxu0
        %3795 = vmatpush.bf16.msra.mxu0 %v1783
        %3796 = vmatpush.bf16.msra.mxu0 %v1779
        %3797 = vmatpush.bf16.msra.mxu0 %v1775
        %3798 = vmatpush.bf16.msra.mxu0 %v1771
        %3799 = vmatpush.bf16.msra.mxu0 %v1767
        %3800 = vmatpush.bf16.msra.mxu0 %v1763
        %3801 = vmatpush.bf16.msra.mxu0 %v1759
        %3802 = vmatpush.bf16.msra.mxu0 %v1755
        %3803 = vmatmul.bf16.gmra.mxu0 %v953
        %v3804 = vpop.f32.mrf.mxu0
        %v3805 = vadd.f32 %v3716, %v3804
        %v3806 = vpop.f32.mrf.mxu0
        %v3807 = vadd.f32 %v3718, %v3806
        %3808 = vmatmul.bf16.gmra.mxu0 %v959
        %v3809 = vpop.f32.mrf.mxu0
        %v3810 = vadd.f32 %v3721, %v3809
        %v3811 = vpop.f32.mrf.mxu0
        %v3812 = vadd.f32 %v3723, %v3811
        %3813 = vmatmul.bf16.gmra.mxu0 %v965
        %v3814 = vpop.f32.mrf.mxu0
        %v3815 = vadd.f32 %v3726, %v3814
        %v3816 = vpop.f32.mrf.mxu0
        %v3817 = vadd.f32 %v3728, %v3816
        %3818 = vmatmul.bf16.gmra.mxu0 %v971
        %v3819 = vpop.f32.mrf.mxu0
        %v3820 = vadd.f32 %v3731, %v3819
        %v3821 = vpop.f32.mrf.mxu0
        %v3822 = vadd.f32 %v3733, %v3821
        %3823 = vmatmul.bf16.gmra.mxu0 %v977
        %v3824 = vpop.f32.mrf.mxu0
        %v3825 = vadd.f32 %v3736, %v3824
        %v3826 = vpop.f32.mrf.mxu0
        %v3827 = vadd.f32 %v3738, %v3826
        %3828 = vmatmul.bf16.gmra.mxu0 %v983
        %v3829 = vpop.f32.mrf.mxu0
        %v3830 = vadd.f32 %v3741, %v3829
        %v3831 = vpop.f32.mrf.mxu0
        %v3832 = vadd.f32 %v3743, %v3831
        %3833 = vmatmul.bf16.gmra.mxu0 %v989
        %v3834 = vpop.f32.mrf.mxu0
        %v3835 = vadd.f32 %v3746, %v3834
        %v3836 = vpop.f32.mrf.mxu0
        %v3837 = vadd.f32 %v3748, %v3836
        %3838 = vmatmul.bf16.gmra.mxu0 %v995
        %v3839 = vpop.f32.mrf.mxu0
        %v3840 = vadd.f32 %v3751, %v3839
        %v3841 = vpop.f32.mrf.mxu0
        %v3842 = vadd.f32 %v3753, %v3841
        %3843 = vmatmul.bf16.gmra.mxu0 %v1001
        %v3844 = vpop.f32.mrf.mxu0
        %v3845 = vadd.f32 %v3756, %v3844
        %v3846 = vpop.f32.mrf.mxu0
        %v3847 = vadd.f32 %v3758, %v3846
        %3848 = vmatmul.bf16.gmra.mxu0 %v1007
        %v3849 = vpop.f32.mrf.mxu0
        %v3850 = vadd.f32 %v3761, %v3849
        %v3851 = vpop.f32.mrf.mxu0
        %v3852 = vadd.f32 %v3763, %v3851
        %3853 = vmatmul.bf16.gmra.mxu0 %v1013
        %v3854 = vpop.f32.mrf.mxu0
        %v3855 = vadd.f32 %v3766, %v3854
        %v3856 = vpop.f32.mrf.mxu0
        %v3857 = vadd.f32 %v3768, %v3856
        %3858 = vmatmul.bf16.gmra.mxu0 %v1019
        %v3859 = vpop.f32.mrf.mxu0
        %v3860 = vadd.f32 %v3771, %v3859
        %v3861 = vpop.f32.mrf.mxu0
        %v3862 = vadd.f32 %v3773, %v3861
        %3863 = vmatmul.bf16.gmra.mxu0 %v1025
        %v3864 = vpop.f32.mrf.mxu0
        %v3865 = vadd.f32 %v3776, %v3864
        %v3866 = vpop.f32.mrf.mxu0
        %v3867 = vadd.f32 %v3778, %v3866
        %3868 = vmatmul.bf16.gmra.mxu0 %v1031
        %v3869 = vpop.f32.mrf.mxu0
        %v3870 = vadd.f32 %v3781, %v3869
        %v3871 = vpop.f32.mrf.mxu0
        %v3872 = vadd.f32 %v3783, %v3871
        %3873 = vmatmul.bf16.gmra.mxu0 %v1037
        %v3874 = vpop.f32.mrf.mxu0
        %v3875 = vadd.f32 %v3786, %v3874
        %v3876 = vpop.f32.mrf.mxu0
        %v3877 = vadd.f32 %v3788, %v3876
        %3878 = vmatmul.bf16.gmra.mxu0 %v1043
        %v3879 = vpop.f32.mrf.mxu0
        %v3880 = vadd.f32 %v3791, %v3879
        %v3881 = vpop.f32.mrf.mxu0
        %v3882 = vadd.f32 %v3793, %v3881
        %3883 = vdwg.mxu0
        %3884 = vmatpush.bf16.msra.mxu0 %v1815
        %3885 = vmatpush.bf16.msra.mxu0 %v1811
        %3886 = vmatpush.bf16.msra.mxu0 %v1807
        %3887 = vmatpush.bf16.msra.mxu0 %v1803
        %3888 = vmatpush.bf16.msra.mxu0 %v1799
        %3889 = vmatpush.bf16.msra.mxu0 %v1795
        %3890 = vmatpush.bf16.msra.mxu0 %v1791
        %3891 = vmatpush.bf16.msra.mxu0 %v1787
        %3892 = vmatmul.bf16.gmra.mxu0 %v954
        %v3893 = vpop.f32.mrf.mxu0
        %v3894 = vadd.f32 %v3805, %v3893
        %v3895 = vpop.f32.mrf.mxu0
        %v3896 = vadd.f32 %v3807, %v3895
        %3897 = vmatmul.bf16.gmra.mxu0 %v960
        %v3898 = vpop.f32.mrf.mxu0
        %v3899 = vadd.f32 %v3810, %v3898
        %v3900 = vpop.f32.mrf.mxu0
        %v3901 = vadd.f32 %v3812, %v3900
        %3902 = vmatmul.bf16.gmra.mxu0 %v966
        %v3903 = vpop.f32.mrf.mxu0
        %v3904 = vadd.f32 %v3815, %v3903
        %v3905 = vpop.f32.mrf.mxu0
        %v3906 = vadd.f32 %v3817, %v3905
        %3907 = vmatmul.bf16.gmra.mxu0 %v972
        %v3908 = vpop.f32.mrf.mxu0
        %v3909 = vadd.f32 %v3820, %v3908
        %v3910 = vpop.f32.mrf.mxu0
        %v3911 = vadd.f32 %v3822, %v3910
        %3912 = vmatmul.bf16.gmra.mxu0 %v978
        %v3913 = vpop.f32.mrf.mxu0
        %v3914 = vadd.f32 %v3825, %v3913
        %v3915 = vpop.f32.mrf.mxu0
        %v3916 = vadd.f32 %v3827, %v3915
        %3917 = vmatmul.bf16.gmra.mxu0 %v984
        %v3918 = vpop.f32.mrf.mxu0
        %v3919 = vadd.f32 %v3830, %v3918
        %v3920 = vpop.f32.mrf.mxu0
        %v3921 = vadd.f32 %v3832, %v3920
        %3922 = vmatmul.bf16.gmra.mxu0 %v990
        %v3923 = vpop.f32.mrf.mxu0
        %v3924 = vadd.f32 %v3835, %v3923
        %v3925 = vpop.f32.mrf.mxu0
        %v3926 = vadd.f32 %v3837, %v3925
        %3927 = vmatmul.bf16.gmra.mxu0 %v996
        %v3928 = vpop.f32.mrf.mxu0
        %v3929 = vadd.f32 %v3840, %v3928
        %v3930 = vpop.f32.mrf.mxu0
        %v3931 = vadd.f32 %v3842, %v3930
        %3932 = vmatmul.bf16.gmra.mxu0 %v1002
        %v3933 = vpop.f32.mrf.mxu0
        %v3934 = vadd.f32 %v3845, %v3933
        %v3935 = vpop.f32.mrf.mxu0
        %v3936 = vadd.f32 %v3847, %v3935
        %3937 = vmatmul.bf16.gmra.mxu0 %v1008
        %v3938 = vpop.f32.mrf.mxu0
        %v3939 = vadd.f32 %v3850, %v3938
        %v3940 = vpop.f32.mrf.mxu0
        %v3941 = vadd.f32 %v3852, %v3940
        %3942 = vmatmul.bf16.gmra.mxu0 %v1014
        %v3943 = vpop.f32.mrf.mxu0
        %v3944 = vadd.f32 %v3855, %v3943
        %v3945 = vpop.f32.mrf.mxu0
        %v3946 = vadd.f32 %v3857, %v3945
        %3947 = vmatmul.bf16.gmra.mxu0 %v1020
        %v3948 = vpop.f32.mrf.mxu0
        %v3949 = vadd.f32 %v3860, %v3948
        %v3950 = vpop.f32.mrf.mxu0
        %v3951 = vadd.f32 %v3862, %v3950
        %3952 = vmatmul.bf16.gmra.mxu0 %v1026
        %v3953 = vpop.f32.mrf.mxu0
        %v3954 = vadd.f32 %v3865, %v3953
        %v3955 = vpop.f32.mrf.mxu0
        %v3956 = vadd.f32 %v3867, %v3955
        %3957 = vmatmul.bf16.gmra.mxu0 %v1032
        %v3958 = vpop.f32.mrf.mxu0
        %v3959 = vadd.f32 %v3870, %v3958
        %v3960 = vpop.f32.mrf.mxu0
        %v3961 = vadd.f32 %v3872, %v3960
        %3962 = vmatmul.bf16.gmra.mxu0 %v1038
        %v3963 = vpop.f32.mrf.mxu0
        %v3964 = vadd.f32 %v3875, %v3963
        %v3965 = vpop.f32.mrf.mxu0
        %v3966 = vadd.f32 %v3877, %v3965
        %3967 = vmatmul.bf16.gmra.mxu0 %v1044
        %v3968 = vpop.f32.mrf.mxu0
        %v3969 = vadd.f32 %v3880, %v3968
        %v3970 = vpop.f32.mrf.mxu0
        %v3971 = vadd.f32 %v3882, %v3970
        %3972 = vdwg.mxu0
        %3973 = vmatpush.bf16.msra.mxu0 %v1847
        %3974 = vmatpush.bf16.msra.mxu0 %v1843
        %3975 = vmatpush.bf16.msra.mxu0 %v1839
        %3976 = vmatpush.bf16.msra.mxu0 %v1835
        %3977 = vmatpush.bf16.msra.mxu0 %v1831
        %3978 = vmatpush.bf16.msra.mxu0 %v1827
        %3979 = vmatpush.bf16.msra.mxu0 %v1823
        %3980 = vmatpush.bf16.msra.mxu0 %v1819
        %3981 = vmatmul.bf16.gmra.mxu0 %v955
        %v3982 = vpop.f32.mrf.mxu0
        %v3983 = vadd.f32 %v3894, %v3982
        %v3984 = vpop.f32.mrf.mxu0
        %v3985 = vadd.f32 %v3896, %v3984
        %3986 = vmatmul.bf16.gmra.mxu0 %v961
        %v3987 = vpop.f32.mrf.mxu0
        %v3988 = vadd.f32 %v3899, %v3987
        %v3989 = vpop.f32.mrf.mxu0
        %v3990 = vadd.f32 %v3901, %v3989
        %3991 = vmatmul.bf16.gmra.mxu0 %v967
        %v3992 = vpop.f32.mrf.mxu0
        %v3993 = vadd.f32 %v3904, %v3992
        %v3994 = vpop.f32.mrf.mxu0
        %v3995 = vadd.f32 %v3906, %v3994
        %3996 = vmatmul.bf16.gmra.mxu0 %v973
        %v3997 = vpop.f32.mrf.mxu0
        %v3998 = vadd.f32 %v3909, %v3997
        %v3999 = vpop.f32.mrf.mxu0
        %v4000 = vadd.f32 %v3911, %v3999
        %4001 = vmatmul.bf16.gmra.mxu0 %v979
        %v4002 = vpop.f32.mrf.mxu0
        %v4003 = vadd.f32 %v3914, %v4002
        %v4004 = vpop.f32.mrf.mxu0
        %v4005 = vadd.f32 %v3916, %v4004
        %4006 = vmatmul.bf16.gmra.mxu0 %v985
        %v4007 = vpop.f32.mrf.mxu0
        %v4008 = vadd.f32 %v3919, %v4007
        %v4009 = vpop.f32.mrf.mxu0
        %v4010 = vadd.f32 %v3921, %v4009
        %4011 = vmatmul.bf16.gmra.mxu0 %v991
        %v4012 = vpop.f32.mrf.mxu0
        %v4013 = vadd.f32 %v3924, %v4012
        %v4014 = vpop.f32.mrf.mxu0
        %v4015 = vadd.f32 %v3926, %v4014
        %4016 = vmatmul.bf16.gmra.mxu0 %v997
        %v4017 = vpop.f32.mrf.mxu0
        %v4018 = vadd.f32 %v3929, %v4017
        %v4019 = vpop.f32.mrf.mxu0
        %v4020 = vadd.f32 %v3931, %v4019
        %4021 = vmatmul.bf16.gmra.mxu0 %v1003
        %v4022 = vpop.f32.mrf.mxu0
        %v4023 = vadd.f32 %v3934, %v4022
        %v4024 = vpop.f32.mrf.mxu0
        %v4025 = vadd.f32 %v3936, %v4024
        %4026 = vmatmul.bf16.gmra.mxu0 %v1009
        %v4027 = vpop.f32.mrf.mxu0
        %v4028 = vadd.f32 %v3939, %v4027
        %v4029 = vpop.f32.mrf.mxu0
        %v4030 = vadd.f32 %v3941, %v4029
        %4031 = vmatmul.bf16.gmra.mxu0 %v1015
        %v4032 = vpop.f32.mrf.mxu0
        %v4033 = vadd.f32 %v3944, %v4032
        %v4034 = vpop.f32.mrf.mxu0
        %v4035 = vadd.f32 %v3946, %v4034
        %4036 = vmatmul.bf16.gmra.mxu0 %v1021
        %v4037 = vpop.f32.mrf.mxu0
        %v4038 = vadd.f32 %v3949, %v4037
        %v4039 = vpop.f32.mrf.mxu0
        %v4040 = vadd.f32 %v3951, %v4039
        %4041 = vmatmul.bf16.gmra.mxu0 %v1027
        %v4042 = vpop.f32.mrf.mxu0
        %v4043 = vadd.f32 %v3954, %v4042
        %v4044 = vpop.f32.mrf.mxu0
        %v4045 = vadd.f32 %v3956, %v4044
        %4046 = vmatmul.bf16.gmra.mxu0 %v1033
        %v4047 = vpop.f32.mrf.mxu0
        %v4048 = vadd.f32 %v3959, %v4047
        %v4049 = vpop.f32.mrf.mxu0
        %v4050 = vadd.f32 %v3961, %v4049
        %4051 = vmatmul.bf16.gmra.mxu0 %v1039
        %v4052 = vpop.f32.mrf.mxu0
        %v4053 = vadd.f32 %v3964, %v4052
        %v4054 = vpop.f32.mrf.mxu0
        %v4055 = vadd.f32 %v3966, %v4054
        %4056 = vmatmul.bf16.gmra.mxu0 %v1045
        %v4057 = vpop.f32.mrf.mxu0
        %v4058 = vadd.f32 %v3969, %v4057
        %v4059 = vpop.f32.mrf.mxu0
        %v4060 = vadd.f32 %v3971, %v4059
        %4061 = vdwg.mxu0
        %4062 = vmatpush.bf16.msra.mxu0 %v1879
        %4063 = vmatpush.bf16.msra.mxu0 %v1875
        %4064 = vmatpush.bf16.msra.mxu0 %v1871
        %4065 = vmatpush.bf16.msra.mxu0 %v1867
        %4066 = vmatpush.bf16.msra.mxu0 %v1863
        %4067 = vmatpush.bf16.msra.mxu0 %v1859
        %4068 = vmatpush.bf16.msra.mxu0 %v1855
        %4069 = vmatpush.bf16.msra.mxu0 %v1851
        %4070 = vmatmul.bf16.gmra.mxu0 %v956
        %v4071 = vpop.f32.mrf.mxu0
        %v4072 = vadd.f32 %v3983, %v4071
        %v4073 = vpop.f32.mrf.mxu0
        %v4074 = vadd.f32 %v3985, %v4073
        %4075 = vmatmul.bf16.gmra.mxu0 %v962
        %v4076 = vpop.f32.mrf.mxu0
        %v4077 = vadd.f32 %v3988, %v4076
        %v4078 = vpop.f32.mrf.mxu0
        %v4079 = vadd.f32 %v3990, %v4078
        %4080 = vmatmul.bf16.gmra.mxu0 %v968
        %v4081 = vpop.f32.mrf.mxu0
        %v4082 = vadd.f32 %v3993, %v4081
        %v4083 = vpop.f32.mrf.mxu0
        %v4084 = vadd.f32 %v3995, %v4083
        %4085 = vmatmul.bf16.gmra.mxu0 %v974
        %v4086 = vpop.f32.mrf.mxu0
        %v4087 = vadd.f32 %v3998, %v4086
        %v4088 = vpop.f32.mrf.mxu0
        %v4089 = vadd.f32 %v4000, %v4088
        %4090 = vmatmul.bf16.gmra.mxu0 %v980
        %v4091 = vpop.f32.mrf.mxu0
        %v4092 = vadd.f32 %v4003, %v4091
        %v4093 = vpop.f32.mrf.mxu0
        %v4094 = vadd.f32 %v4005, %v4093
        %4095 = vmatmul.bf16.gmra.mxu0 %v986
        %v4096 = vpop.f32.mrf.mxu0
        %v4097 = vadd.f32 %v4008, %v4096
        %v4098 = vpop.f32.mrf.mxu0
        %v4099 = vadd.f32 %v4010, %v4098
        %4100 = vmatmul.bf16.gmra.mxu0 %v992
        %v4101 = vpop.f32.mrf.mxu0
        %v4102 = vadd.f32 %v4013, %v4101
        %v4103 = vpop.f32.mrf.mxu0
        %v4104 = vadd.f32 %v4015, %v4103
        %4105 = vmatmul.bf16.gmra.mxu0 %v998
        %v4106 = vpop.f32.mrf.mxu0
        %v4107 = vadd.f32 %v4018, %v4106
        %v4108 = vpop.f32.mrf.mxu0
        %v4109 = vadd.f32 %v4020, %v4108
        %4110 = vmatmul.bf16.gmra.mxu0 %v1004
        %v4111 = vpop.f32.mrf.mxu0
        %v4112 = vadd.f32 %v4023, %v4111
        %v4113 = vpop.f32.mrf.mxu0
        %v4114 = vadd.f32 %v4025, %v4113
        %4115 = vmatmul.bf16.gmra.mxu0 %v1010
        %v4116 = vpop.f32.mrf.mxu0
        %v4117 = vadd.f32 %v4028, %v4116
        %v4118 = vpop.f32.mrf.mxu0
        %v4119 = vadd.f32 %v4030, %v4118
        %4120 = vmatmul.bf16.gmra.mxu0 %v1016
        %v4121 = vpop.f32.mrf.mxu0
        %v4122 = vadd.f32 %v4033, %v4121
        %v4123 = vpop.f32.mrf.mxu0
        %v4124 = vadd.f32 %v4035, %v4123
        %4125 = vmatmul.bf16.gmra.mxu0 %v1022
        %v4126 = vpop.f32.mrf.mxu0
        %v4127 = vadd.f32 %v4038, %v4126
        %v4128 = vpop.f32.mrf.mxu0
        %v4129 = vadd.f32 %v4040, %v4128
        %4130 = vmatmul.bf16.gmra.mxu0 %v1028
        %v4131 = vpop.f32.mrf.mxu0
        %v4132 = vadd.f32 %v4043, %v4131
        %v4133 = vpop.f32.mrf.mxu0
        %v4134 = vadd.f32 %v4045, %v4133
        %4135 = vmatmul.bf16.gmra.mxu0 %v1034
        %v4136 = vpop.f32.mrf.mxu0
        %v4137 = vadd.f32 %v4048, %v4136
        %v4138 = vpop.f32.mrf.mxu0
        %v4139 = vadd.f32 %v4050, %v4138
        %4140 = vmatmul.bf16.gmra.mxu0 %v1040
        %v4141 = vpop.f32.mrf.mxu0
        %v4142 = vadd.f32 %v4053, %v4141
        %v4143 = vpop.f32.mrf.mxu0
        %v4144 = vadd.f32 %v4055, %v4143
        %4145 = vmatmul.bf16.gmra.mxu0 %v1046
        %v4146 = vpop.f32.mrf.mxu0
        %v4147 = vadd.f32 %v4058, %v4146
        %v4148 = vpop.f32.mrf.mxu0
        %v4149 = vadd.f32 %v4060, %v4148
        %4150 = vdwg.mxu0
        %4151 = vmatpush.bf16.msra.mxu0 %v1911
        %4152 = vmatpush.bf16.msra.mxu0 %v1907
        %4153 = vmatpush.bf16.msra.mxu0 %v1903
        %4154 = vmatpush.bf16.msra.mxu0 %v1899
        %4155 = vmatpush.bf16.msra.mxu0 %v1895
        %4156 = vmatpush.bf16.msra.mxu0 %v1891
        %4157 = vmatpush.bf16.msra.mxu0 %v1887
        %4158 = vmatpush.bf16.msra.mxu0 %v1883
        %4159 = vmatmul.bf16.gmra.mxu0 %v957
        %v4160 = vpop.f32.mrf.mxu0
        %v4161 = vadd.f32 %v4072, %v4160
        %v4162 = vpop.f32.mrf.mxu0
        %v4163 = vadd.f32 %v4074, %v4162
        %4164 = vmatmul.bf16.gmra.mxu0 %v963
        %v4165 = vpop.f32.mrf.mxu0
        %v4166 = vadd.f32 %v4077, %v4165
        %v4167 = vpop.f32.mrf.mxu0
        %v4168 = vadd.f32 %v4079, %v4167
        %4169 = vmatmul.bf16.gmra.mxu0 %v969
        %v4170 = vpop.f32.mrf.mxu0
        %v4171 = vadd.f32 %v4082, %v4170
        %v4172 = vpop.f32.mrf.mxu0
        %v4173 = vadd.f32 %v4084, %v4172
        %4174 = vmatmul.bf16.gmra.mxu0 %v975
        %v4175 = vpop.f32.mrf.mxu0
        %v4176 = vadd.f32 %v4087, %v4175
        %v4177 = vpop.f32.mrf.mxu0
        %v4178 = vadd.f32 %v4089, %v4177
        %4179 = vmatmul.bf16.gmra.mxu0 %v981
        %v4180 = vpop.f32.mrf.mxu0
        %v4181 = vadd.f32 %v4092, %v4180
        %v4182 = vpop.f32.mrf.mxu0
        %v4183 = vadd.f32 %v4094, %v4182
        %4184 = vmatmul.bf16.gmra.mxu0 %v987
        %v4185 = vpop.f32.mrf.mxu0
        %v4186 = vadd.f32 %v4097, %v4185
        %v4187 = vpop.f32.mrf.mxu0
        %v4188 = vadd.f32 %v4099, %v4187
        %4189 = vmatmul.bf16.gmra.mxu0 %v993
        %v4190 = vpop.f32.mrf.mxu0
        %v4191 = vadd.f32 %v4102, %v4190
        %v4192 = vpop.f32.mrf.mxu0
        %v4193 = vadd.f32 %v4104, %v4192
        %4194 = vmatmul.bf16.gmra.mxu0 %v999
        %v4195 = vpop.f32.mrf.mxu0
        %v4196 = vadd.f32 %v4107, %v4195
        %v4197 = vpop.f32.mrf.mxu0
        %v4198 = vadd.f32 %v4109, %v4197
        %4199 = vmatmul.bf16.gmra.mxu0 %v1005
        %v4200 = vpop.f32.mrf.mxu0
        %v4201 = vadd.f32 %v4112, %v4200
        %v4202 = vpop.f32.mrf.mxu0
        %v4203 = vadd.f32 %v4114, %v4202
        %4204 = vmatmul.bf16.gmra.mxu0 %v1011
        %v4205 = vpop.f32.mrf.mxu0
        %v4206 = vadd.f32 %v4117, %v4205
        %v4207 = vpop.f32.mrf.mxu0
        %v4208 = vadd.f32 %v4119, %v4207
        %4209 = vmatmul.bf16.gmra.mxu0 %v1017
        %v4210 = vpop.f32.mrf.mxu0
        %v4211 = vadd.f32 %v4122, %v4210
        %v4212 = vpop.f32.mrf.mxu0
        %v4213 = vadd.f32 %v4124, %v4212
        %4214 = vmatmul.bf16.gmra.mxu0 %v1023
        %v4215 = vpop.f32.mrf.mxu0
        %v4216 = vadd.f32 %v4127, %v4215
        %v4217 = vpop.f32.mrf.mxu0
        %v4218 = vadd.f32 %v4129, %v4217
        %4219 = vmatmul.bf16.gmra.mxu0 %v1029
        %v4220 = vpop.f32.mrf.mxu0
        %v4221 = vadd.f32 %v4132, %v4220
        %v4222 = vpop.f32.mrf.mxu0
        %v4223 = vadd.f32 %v4134, %v4222
        %4224 = vmatmul.bf16.gmra.mxu0 %v1035
        %v4225 = vpop.f32.mrf.mxu0
        %v4226 = vadd.f32 %v4137, %v4225
        %v4227 = vpop.f32.mrf.mxu0
        %v4228 = vadd.f32 %v4139, %v4227
        %4229 = vmatmul.bf16.gmra.mxu0 %v1041
        %v4230 = vpop.f32.mrf.mxu0
        %v4231 = vadd.f32 %v4142, %v4230
        %v4232 = vpop.f32.mrf.mxu0
        %v4233 = vadd.f32 %v4144, %v4232
        %4234 = vmatmul.bf16.gmra.mxu0 %v1047
        %v4235 = vpop.f32.mrf.mxu0
        %v4236 = vadd.f32 %v4147, %v4235
        %v4237 = vpop.f32.mrf.mxu0
        %v4238 = vadd.f32 %v4149, %v4237
        %4239 = vdwg.mxu0
        %v4240 = vmax.f32 %v2559, 0.0
        %v4241 = vmax.f32 %v3093, 0.0
        %v4242 = vmax.f32 %v3627, 0.0
        %v4243 = vmax.f32 %v4161, 0.0
        %v4244 = vmax.f32 %v2561, 0.0
        %v4245 = vmax.f32 %v3095, 0.0
        %v4246 = vmax.f32 %v3629, 0.0
        %v4247 = vmax.f32 %v4163, 0.0
        %v4248 = vmax.f32 %v2564, 0.0
        %v4249 = vmax.f32 %v3098, 0.0
        %v4250 = vmax.f32 %v3632, 0.0
        %v4251 = vmax.f32 %v4166, 0.0
        %v4252 = vmax.f32 %v2566, 0.0
        %v4253 = vmax.f32 %v3100, 0.0
        %v4254 = vmax.f32 %v3634, 0.0
        %v4255 = vmax.f32 %v4168, 0.0
        %v4256 = vmax.f32 %v2569, 0.0
        %v4257 = vmax.f32 %v3103, 0.0
        %v4258 = vmax.f32 %v3637, 0.0
        %v4259 = vmax.f32 %v4171, 0.0
        %v4260 = vmax.f32 %v2571, 0.0
        %v4261 = vmax.f32 %v3105, 0.0
        %v4262 = vmax.f32 %v3639, 0.0
        %v4263 = vmax.f32 %v4173, 0.0
        %v4264 = vmax.f32 %v2574, 0.0
        %v4265 = vmax.f32 %v3108, 0.0
        %v4266 = vmax.f32 %v3642, 0.0
        %v4267 = vmax.f32 %v4176, 0.0
        %v4268 = vmax.f32 %v2576, 0.0
        %v4269 = vmax.f32 %v3110, 0.0
        %v4270 = vmax.f32 %v3644, 0.0
        %v4271 = vmax.f32 %v4178, 0.0
        %v4272 = vmax.f32 %v2579, 0.0
        %v4273 = vmax.f32 %v3113, 0.0
        %v4274 = vmax.f32 %v3647, 0.0
        %v4275 = vmax.f32 %v4181, 0.0
        %v4276 = vmax.f32 %v2581, 0.0
        %v4277 = vmax.f32 %v3115, 0.0
        %v4278 = vmax.f32 %v3649, 0.0
        %v4279 = vmax.f32 %v4183, 0.0
        %v4280 = vmax.f32 %v2584, 0.0
        %v4281 = vmax.f32 %v3118, 0.0
        %v4282 = vmax.f32 %v3652, 0.0
        %v4283 = vmax.f32 %v4186, 0.0
        %v4284 = vmax.f32 %v2586, 0.0
        %v4285 = vmax.f32 %v3120, 0.0
        %v4286 = vmax.f32 %v3654, 0.0
        %v4287 = vmax.f32 %v4188, 0.0
        %v4288 = vmax.f32 %v2589, 0.0
        %v4289 = vmax.f32 %v3123, 0.0
        %v4290 = vmax.f32 %v3657, 0.0
        %v4291 = vmax.f32 %v4191, 0.0
        %v4292 = vmax.f32 %v2591, 0.0
        %v4293 = vmax.f32 %v3125, 0.0
        %v4294 = vmax.f32 %v3659, 0.0
        %v4295 = vmax.f32 %v4193, 0.0
        %v4296 = vmax.f32 %v2594, 0.0
        %v4297 = vmax.f32 %v3128, 0.0
        %v4298 = vmax.f32 %v3662, 0.0
        %v4299 = vmax.f32 %v4196, 0.0
        %v4300 = vmax.f32 %v2596, 0.0
        %v4301 = vmax.f32 %v3130, 0.0
        %v4302 = vmax.f32 %v3664, 0.0
        %v4303 = vmax.f32 %v4198, 0.0
        %v4304 = vmax.f32 %v2599, 0.0
        %v4305 = vmax.f32 %v3133, 0.0
        %v4306 = vmax.f32 %v3667, 0.0
        %v4307 = vmax.f32 %v4201, 0.0
        %v4308 = vmax.f32 %v2601, 0.0
        %v4309 = vmax.f32 %v3135, 0.0
        %v4310 = vmax.f32 %v3669, 0.0
        %v4311 = vmax.f32 %v4203, 0.0
        %v4312 = vmax.f32 %v2604, 0.0
        %v4313 = vmax.f32 %v3138, 0.0
        %v4314 = vmax.f32 %v3672, 0.0
        %v4315 = vmax.f32 %v4206, 0.0
        %v4316 = vmax.f32 %v2606, 0.0
        %v4317 = vmax.f32 %v3140, 0.0
        %v4318 = vmax.f32 %v3674, 0.0
        %v4319 = vmax.f32 %v4208, 0.0
        %v4320 = vmax.f32 %v2609, 0.0
        %v4321 = vmax.f32 %v3143, 0.0
        %v4322 = vmax.f32 %v3677, 0.0
        %v4323 = vmax.f32 %v4211, 0.0
        %v4324 = vmax.f32 %v2611, 0.0
        %v4325 = vmax.f32 %v3145, 0.0
        %v4326 = vmax.f32 %v3679, 0.0
        %v4327 = vmax.f32 %v4213, 0.0
        %v4328 = vmax.f32 %v2614, 0.0
        %v4329 = vmax.f32 %v3148, 0.0
        %v4330 = vmax.f32 %v3682, 0.0
        %v4331 = vmax.f32 %v4216, 0.0
        %v4332 = vmax.f32 %v2616, 0.0
        %v4333 = vmax.f32 %v3150, 0.0
        %v4334 = vmax.f32 %v3684, 0.0
        %v4335 = vmax.f32 %v4218, 0.0
        %v4336 = vmax.f32 %v2619, 0.0
        %v4337 = vmax.f32 %v3153, 0.0
        %v4338 = vmax.f32 %v3687, 0.0
        %v4339 = vmax.f32 %v4221, 0.0
        %v4340 = vmax.f32 %v2621, 0.0
        %v4341 = vmax.f32 %v3155, 0.0
        %v4342 = vmax.f32 %v3689, 0.0
        %v4343 = vmax.f32 %v4223, 0.0
        %v4344 = vmax.f32 %v2624, 0.0
        %v4345 = vmax.f32 %v3158, 0.0
        %v4346 = vmax.f32 %v3692, 0.0
        %v4347 = vmax.f32 %v4226, 0.0
        %v4348 = vmax.f32 %v2626, 0.0
        %v4349 = vmax.f32 %v3160, 0.0
        %v4350 = vmax.f32 %v3694, 0.0
        %v4351 = vmax.f32 %v4228, 0.0
        %v4352 = vmax.f32 %v2629, 0.0
        %v4353 = vmax.f32 %v3163, 0.0
        %v4354 = vmax.f32 %v3697, 0.0
        %v4355 = vmax.f32 %v4231, 0.0
        %v4356 = vmax.f32 %v2631, 0.0
        %v4357 = vmax.f32 %v3165, 0.0
        %v4358 = vmax.f32 %v3699, 0.0
        %v4359 = vmax.f32 %v4233, 0.0
        %v4360 = vmax.f32 %v2634, 0.0
        %v4361 = vmax.f32 %v3168, 0.0
        %v4362 = vmax.f32 %v3702, 0.0
        %v4363 = vmax.f32 %v4236, 0.0
        %v4364 = vmax.f32 %v2636, 0.0
        %v4365 = vmax.f32 %v3170, 0.0
        %v4366 = vmax.f32 %v3704, 0.0
        %v4367 = vmax.f32 %v4238, 0.0
        %v4368 = vpack.c.bf16 %v4244, %v4240
        %v4369 = vpack.c.bf16 %v4245, %v4241
        %v4370 = vpack.c.bf16 %v4246, %v4242
        %v4371 = vpack.c.bf16 %v4247, %v4243
        %v4372 = vpack.c.bf16 %v4252, %v4248
        %v4373 = vpack.c.bf16 %v4253, %v4249
        %v4374 = vpack.c.bf16 %v4254, %v4250
        %v4375 = vpack.c.bf16 %v4255, %v4251
        %v4376 = vpack.c.bf16 %v4260, %v4256
        %v4377 = vpack.c.bf16 %v4261, %v4257
        %v4378 = vpack.c.bf16 %v4262, %v4258
        %v4379 = vpack.c.bf16 %v4263, %v4259
        %v4380 = vpack.c.bf16 %v4268, %v4264
        %v4381 = vpack.c.bf16 %v4269, %v4265
        %v4382 = vpack.c.bf16 %v4270, %v4266
        %v4383 = vpack.c.bf16 %v4271, %v4267
        %v4384 = vpack.c.bf16 %v4276, %v4272
        %v4385 = vpack.c.bf16 %v4277, %v4273
        %v4386 = vpack.c.bf16 %v4278, %v4274
        %v4387 = vpack.c.bf16 %v4279, %v4275
        %v4388 = vpack.c.bf16 %v4284, %v4280
        %v4389 = vpack.c.bf16 %v4285, %v4281
        %v4390 = vpack.c.bf16 %v4286, %v4282
        %v4391 = vpack.c.bf16 %v4287, %v4283
        %v4392 = vpack.c.bf16 %v4292, %v4288
        %v4393 = vpack.c.bf16 %v4293, %v4289
        %v4394 = vpack.c.bf16 %v4294, %v4290
        %v4395 = vpack.c.bf16 %v4295, %v4291
        %v4396 = vpack.c.bf16 %v4300, %v4296
        %v4397 = vpack.c.bf16 %v4301, %v4297
        %v4398 = vpack.c.bf16 %v4302, %v4298
        %v4399 = vpack.c.bf16 %v4303, %v4299
        %v4400 = vpack.c.bf16 %v4308, %v4304
        %v4401 = vpack.c.bf16 %v4309, %v4305
        %v4402 = vpack.c.bf16 %v4310, %v4306
        %v4403 = vpack.c.bf16 %v4311, %v4307
        %v4404 = vpack.c.bf16 %v4316, %v4312
        %v4405 = vpack.c.bf16 %v4317, %v4313
        %v4406 = vpack.c.bf16 %v4318, %v4314
        %v4407 = vpack.c.bf16 %v4319, %v4315
        %v4408 = vpack.c.bf16 %v4324, %v4320
        %v4409 = vpack.c.bf16 %v4325, %v4321
        %v4410 = vpack.c.bf16 %v4326, %v4322
        %v4411 = vpack.c.bf16 %v4327, %v4323
        %v4412 = vpack.c.bf16 %v4332, %v4328
        %v4413 = vpack.c.bf16 %v4333, %v4329
        %v4414 = vpack.c.bf16 %v4334, %v4330
        %v4415 = vpack.c.bf16 %v4335, %v4331
        %v4416 = vpack.c.bf16 %v4340, %v4336
        %v4417 = vpack.c.bf16 %v4341, %v4337
        %v4418 = vpack.c.bf16 %v4342, %v4338
        %v4419 = vpack.c.bf16 %v4343, %v4339
        %v4420 = vpack.c.bf16 %v4348, %v4344
        %v4421 = vpack.c.bf16 %v4349, %v4345
        %v4422 = vpack.c.bf16 %v4350, %v4346
        %v4423 = vpack.c.bf16 %v4351, %v4347
        %v4424 = vpack.c.bf16 %v4356, %v4352
        %v4425 = vpack.c.bf16 %v4357, %v4353
        %v4426 = vpack.c.bf16 %v4358, %v4354
        %v4427 = vpack.c.bf16 %v4359, %v4355
        %v4428 = vpack.c.bf16 %v4364, %v4360
        %v4429 = vpack.c.bf16 %v4365, %v4361
        %v4430 = vpack.c.bf16 %v4366, %v4362
        %v4431 = vpack.c.bf16 %v4367, %v4363
        %v4432 = vld [vmem:[#allocation8] sm:$0xf]
        %v4433 = vld [vmem:[#allocation8 + $0x4] sm:$0xf]
        %v4434 = vld [vmem:[#allocation8 + $0x8] sm:$0xf]
        %v4435 = vld [vmem:[#allocation8 + $0xc] sm:$0xf]
        %v4436 = vld [vmem:[#allocation8 + $0x10] sm:$0xf]
        %v4437 = vld [vmem:[#allocation8 + $0x14] sm:$0xf]
        %v4438 = vld [vmem:[#allocation8 + $0x18] sm:$0xf]
        %v4439 = vld [vmem:[#allocation8 + $0x1c] sm:$0xf]
        %v4440 = vld [vmem:[#allocation8 + $0x20] sm:$0xf]
        %v4441 = vld [vmem:[#allocation8 + $0x24] sm:$0xf]
        %v4442 = vld [vmem:[#allocation8 + $0x28] sm:$0xf]
        %v4443 = vld [vmem:[#allocation8 + $0x2c] sm:$0xf]
        %v4444 = vld [vmem:[#allocation8 + $0x30] sm:$0xf]
        %v4445 = vld [vmem:[#allocation8 + $0x34] sm:$0xf]
        %v4446 = vld [vmem:[#allocation8 + $0x38] sm:$0xf]
        %v4447 = vld [vmem:[#allocation8 + $0x3c] sm:$0xf]
        %v4448 = vld [vmem:[#allocation8 + $0x40] sm:$0xf]
        %v4449 = vld [vmem:[#allocation8 + $0x44] sm:$0xf]
        %v4450 = vld [vmem:[#allocation8 + $0x48] sm:$0xf]
        %v4451 = vld [vmem:[#allocation8 + $0x4c] sm:$0xf]
        %v4452 = vld [vmem:[#allocation8 + $0x50] sm:$0xf]
        %v4453 = vld [vmem:[#allocation8 + $0x54] sm:$0xf]
        %v4454 = vld [vmem:[#allocation8 + $0x58] sm:$0xf]
        %v4455 = vld [vmem:[#allocation8 + $0x5c] sm:$0xf]
        %v4456 = vld [vmem:[#allocation8 + $0x60] sm:$0xf]
        %v4457 = vld [vmem:[#allocation8 + $0x64] sm:$0xf]
        %v4458 = vld [vmem:[#allocation8 + $0x68] sm:$0xf]
        %v4459 = vld [vmem:[#allocation8 + $0x6c] sm:$0xf]
        %v4460 = vld [vmem:[#allocation8 + $0x70] sm:$0xf]
        %v4461 = vld [vmem:[#allocation8 + $0x74] sm:$0xf]
        %v4462 = vld [vmem:[#allocation8 + $0x78] sm:$0xf]
        %v4463 = vld [vmem:[#allocation8 + $0x7c] sm:$0xf]
        %v4464 = vld [vmem:[#allocation8 + $0x80] sm:$0xf]
        %v4465 = vld [vmem:[#allocation8 + $0x84] sm:$0xf]
        %v4466 = vld [vmem:[#allocation8 + $0x88] sm:$0xf]
        %v4467 = vld [vmem:[#allocation8 + $0x8c] sm:$0xf]
        %v4468 = vld [vmem:[#allocation8 + $0x90] sm:$0xf]
        %v4469 = vld [vmem:[#allocation8 + $0x94] sm:$0xf]
        %v4470 = vld [vmem:[#allocation8 + $0x98] sm:$0xf]
        %v4471 = vld [vmem:[#allocation8 + $0x9c] sm:$0xf]
        %v4472 = vld [vmem:[#allocation8 + $0xa0] sm:$0xf]
        %v4473 = vld [vmem:[#allocation8 + $0xa4] sm:$0xf]
        %v4474 = vld [vmem:[#allocation8 + $0xa8] sm:$0xf]
        %v4475 = vld [vmem:[#allocation8 + $0xac] sm:$0xf]
        %v4476 = vld [vmem:[#allocation8 + $0xb0] sm:$0xf]
        %v4477 = vld [vmem:[#allocation8 + $0xb4] sm:$0xf]
        %v4478 = vld [vmem:[#allocation8 + $0xb8] sm:$0xf]
        %v4479 = vld [vmem:[#allocation8 + $0xbc] sm:$0xf]
        %v4480 = vld [vmem:[#allocation8 + $0xc0] sm:$0xf]
        %v4481 = vld [vmem:[#allocation8 + $0xc4] sm:$0xf]
        %v4482 = vld [vmem:[#allocation8 + $0xc8] sm:$0xf]
        %v4483 = vld [vmem:[#allocation8 + $0xcc] sm:$0xf]
        %v4484 = vld [vmem:[#allocation8 + $0xd0] sm:$0xf]
        %v4485 = vld [vmem:[#allocation8 + $0xd4] sm:$0xf]
        %v4486 = vld [vmem:[#allocation8 + $0xd8] sm:$0xf]
        %v4487 = vld [vmem:[#allocation8 + $0xdc] sm:$0xf]
        %v4488 = vld [vmem:[#allocation8 + $0xe0] sm:$0xf]
        %v4489 = vld [vmem:[#allocation8 + $0xe4] sm:$0xf]
        %v4490 = vld [vmem:[#allocation8 + $0xe8] sm:$0xf]
        %v4491 = vld [vmem:[#allocation8 + $0xec] sm:$0xf]
        %v4492 = vld [vmem:[#allocation8 + $0xf0] sm:$0xf]
        %v4493 = vld [vmem:[#allocation8 + $0xf4] sm:$0xf]
        %v4494 = vld [vmem:[#allocation8 + $0xf8] sm:$0xf]
        %v4495 = vld [vmem:[#allocation8 + $0xfc] sm:$0xf]
        %v4496 = vld [vmem:[%s4] sm:$0x1]
        %v4498 = vperm.slane %v4496, 0
        %v4564 = vunpack.c.l.b16 %v4432
        %v4565 = vunpack.c.l.b16 %v4433
        %v4566 = vunpack.c.l.b16 %v4434
        %v4567 = vunpack.c.l.b16 %v4435
        %v4568 = vunpack.c.l.b16 %v4436
        %v4569 = vunpack.c.l.b16 %v4437
        %v4570 = vunpack.c.l.b16 %v4438
        %v4571 = vunpack.c.l.b16 %v4439
        %v4572 = vunpack.c.l.b16 %v4440
        %v4573 = vunpack.c.l.b16 %v4441
        %v4574 = vunpack.c.l.b16 %v4442
        %v4575 = vunpack.c.l.b16 %v4443
        %v4576 = vunpack.c.l.b16 %v4444
        %v4577 = vunpack.c.l.b16 %v4445
        %v4578 = vunpack.c.l.b16 %v4446
        %v4579 = vunpack.c.l.b16 %v4447
        %v4580 = vunpack.c.l.b16 %v4448
        %v4581 = vunpack.c.l.b16 %v4449
        %v4582 = vunpack.c.l.b16 %v4450
        %v4583 = vunpack.c.l.b16 %v4451
        %v4584 = vunpack.c.l.b16 %v4452
        %v4585 = vunpack.c.l.b16 %v4453
        %v4586 = vunpack.c.l.b16 %v4454
        %v4587 = vunpack.c.l.b16 %v4455
        %v4588 = vunpack.c.l.b16 %v4456
        %v4589 = vunpack.c.l.b16 %v4457
        %v4590 = vunpack.c.l.b16 %v4458
        %v4591 = vunpack.c.l.b16 %v4459
        %v4592 = vunpack.c.l.b16 %v4460
        %v4593 = vunpack.c.l.b16 %v4461
        %v4594 = vunpack.c.l.b16 %v4462
        %v4595 = vunpack.c.l.b16 %v4463
        %v4596 = vunpack.c.l.b16 %v4464
        %v4597 = vunpack.c.l.b16 %v4465
        %v4598 = vunpack.c.l.b16 %v4466
        %v4599 = vunpack.c.l.b16 %v4467
        %v4600 = vunpack.c.l.b16 %v4468
        %v4601 = vunpack.c.l.b16 %v4469
        %v4602 = vunpack.c.l.b16 %v4470
        %v4603 = vunpack.c.l.b16 %v4471
        %v4604 = vunpack.c.l.b16 %v4472
        %v4605 = vunpack.c.l.b16 %v4473
        %v4606 = vunpack.c.l.b16 %v4474
        %v4607 = vunpack.c.l.b16 %v4475
        %v4608 = vunpack.c.l.b16 %v4476
        %v4609 = vunpack.c.l.b16 %v4477
        %v4610 = vunpack.c.l.b16 %v4478
        %v4611 = vunpack.c.l.b16 %v4479
        %v4612 = vunpack.c.l.b16 %v4480
        %v4613 = vunpack.c.l.b16 %v4481
        %v4614 = vunpack.c.l.b16 %v4482
        %v4615 = vunpack.c.l.b16 %v4483
        %v4616 = vunpack.c.l.b16 %v4484
        %v4617 = vunpack.c.l.b16 %v4485
        %v4618 = vunpack.c.l.b16 %v4486
        %v4619 = vunpack.c.l.b16 %v4487
        %v4620 = vunpack.c.l.b16 %v4488
        %v4621 = vunpack.c.l.b16 %v4489
        %v4622 = vunpack.c.l.b16 %v4490
        %v4623 = vunpack.c.l.b16 %v4491
        %v4624 = vunpack.c.l.b16 %v4492
        %v4625 = vunpack.c.l.b16 %v4493
        %v4626 = vunpack.c.l.b16 %v4494
        %v4627 = vunpack.c.l.b16 %v4495
        %v4628 = vpack.c.b16 %v4565, %v4564
        %v4629 = vpack.c.b16 %v4567, %v4566
        %v4630 = vpack.c.b16 %v4569, %v4568
        %v4631 = vpack.c.b16 %v4571, %v4570
        %v4632 = vpack.c.b16 %v4573, %v4572
        %v4633 = vpack.c.b16 %v4575, %v4574
        %v4634 = vpack.c.b16 %v4577, %v4576
        %v4635 = vpack.c.b16 %v4579, %v4578
        %v4636 = vpack.c.b16 %v4581, %v4580
        %v4637 = vpack.c.b16 %v4583, %v4582
        %v4638 = vpack.c.b16 %v4585, %v4584
        %v4639 = vpack.c.b16 %v4587, %v4586
        %v4640 = vpack.c.b16 %v4589, %v4588
        %v4641 = vpack.c.b16 %v4591, %v4590
        %v4642 = vpack.c.b16 %v4593, %v4592
        %v4643 = vpack.c.b16 %v4595, %v4594
        %v4644 = vpack.c.b16 %v4597, %v4596
        %v4645 = vpack.c.b16 %v4599, %v4598
        %v4646 = vpack.c.b16 %v4601, %v4600
        %v4647 = vpack.c.b16 %v4603, %v4602
        %v4648 = vpack.c.b16 %v4605, %v4604
        %v4649 = vpack.c.b16 %v4607, %v4606
        %v4650 = vpack.c.b16 %v4609, %v4608
        %v4651 = vpack.c.b16 %v4611, %v4610
        %v4652 = vpack.c.b16 %v4613, %v4612
        %v4653 = vpack.c.b16 %v4615, %v4614
        %v4654 = vpack.c.b16 %v4617, %v4616
        %v4655 = vpack.c.b16 %v4619, %v4618
        %v4656 = vpack.c.b16 %v4621, %v4620
        %v4657 = vpack.c.b16 %v4623, %v4622
        %v4658 = vpack.c.b16 %v4625, %v4624
        %v4659 = vpack.c.b16 %v4627, %v4626
        %4692 = vmatpush.bf16.msra.mxu0 %v4635
        %4693 = vmatpush.bf16.msra.mxu0 %v4634
        %4694 = vmatpush.bf16.msra.mxu0 %v4633
        %4695 = vmatpush.bf16.msra.mxu0 %v4632
        %4696 = vmatpush.bf16.msra.mxu0 %v4631
        %4697 = vmatpush.bf16.msra.mxu0 %v4630
        %4698 = vmatpush.bf16.msra.mxu0 %v4629
        %4699 = vmatpush.bf16.msra.mxu0 %v4628
        %4700 = vmatmul.bf16.gmra.mxu0 %v4368
        %v4701 = vpop.f32.mrf.mxu0
        %v4702 = vadd.f32 %v4498, %v4701
        %v4703 = vpop.f32.mrf.mxu0
        %v4704 = vadd.f32 %v4498, %v4703
        %4705 = vmatmul.bf16.gmra.mxu0 %v4372
        %v4706 = vpop.f32.mrf.mxu0
        %v4707 = vadd.f32 %v4498, %v4706
        %v4708 = vpop.f32.mrf.mxu0
        %v4709 = vadd.f32 %v4498, %v4708
        %4710 = vmatmul.bf16.gmra.mxu0 %v4376
        %v4711 = vpop.f32.mrf.mxu0
        %v4712 = vadd.f32 %v4498, %v4711
        %v4713 = vpop.f32.mrf.mxu0
        %v4714 = vadd.f32 %v4498, %v4713
        %4715 = vmatmul.bf16.gmra.mxu0 %v4380
        %v4716 = vpop.f32.mrf.mxu0
        %v4717 = vadd.f32 %v4498, %v4716
        %v4718 = vpop.f32.mrf.mxu0
        %v4719 = vadd.f32 %v4498, %v4718
        %4720 = vmatmul.bf16.gmra.mxu0 %v4384
        %v4721 = vpop.f32.mrf.mxu0
        %v4722 = vadd.f32 %v4498, %v4721
        %v4723 = vpop.f32.mrf.mxu0
        %v4724 = vadd.f32 %v4498, %v4723
        %4725 = vmatmul.bf16.gmra.mxu0 %v4388
        %v4726 = vpop.f32.mrf.mxu0
        %v4727 = vadd.f32 %v4498, %v4726
        %v4728 = vpop.f32.mrf.mxu0
        %v4729 = vadd.f32 %v4498, %v4728
        %4730 = vmatmul.bf16.gmra.mxu0 %v4392
        %v4731 = vpop.f32.mrf.mxu0
        %v4732 = vadd.f32 %v4498, %v4731
        %v4733 = vpop.f32.mrf.mxu0
        %v4734 = vadd.f32 %v4498, %v4733
        %4735 = vmatmul.bf16.gmra.mxu0 %v4396
        %v4736 = vpop.f32.mrf.mxu0
        %v4737 = vadd.f32 %v4498, %v4736
        %v4738 = vpop.f32.mrf.mxu0
        %v4739 = vadd.f32 %v4498, %v4738
        %4740 = vmatmul.bf16.gmra.mxu0 %v4400
        %v4741 = vpop.f32.mrf.mxu0
        %v4742 = vadd.f32 %v4498, %v4741
        %v4743 = vpop.f32.mrf.mxu0
        %v4744 = vadd.f32 %v4498, %v4743
        %4745 = vmatmul.bf16.gmra.mxu0 %v4404
        %v4746 = vpop.f32.mrf.mxu0
        %v4747 = vadd.f32 %v4498, %v4746
        %v4748 = vpop.f32.mrf.mxu0
        %v4749 = vadd.f32 %v4498, %v4748
        %4750 = vmatmul.bf16.gmra.mxu0 %v4408
        %v4751 = vpop.f32.mrf.mxu0
        %v4752 = vadd.f32 %v4498, %v4751
        %v4753 = vpop.f32.mrf.mxu0
        %v4754 = vadd.f32 %v4498, %v4753
        %4755 = vmatmul.bf16.gmra.mxu0 %v4412
        %v4756 = vpop.f32.mrf.mxu0
        %v4757 = vadd.f32 %v4498, %v4756
        %v4758 = vpop.f32.mrf.mxu0
        %v4759 = vadd.f32 %v4498, %v4758
        %4760 = vmatmul.bf16.gmra.mxu0 %v4416
        %v4761 = vpop.f32.mrf.mxu0
        %v4762 = vadd.f32 %v4498, %v4761
        %v4763 = vpop.f32.mrf.mxu0
        %v4764 = vadd.f32 %v4498, %v4763
        %4765 = vmatmul.bf16.gmra.mxu0 %v4420
        %v4766 = vpop.f32.mrf.mxu0
        %v4767 = vadd.f32 %v4498, %v4766
        %v4768 = vpop.f32.mrf.mxu0
        %v4769 = vadd.f32 %v4498, %v4768
        %4770 = vmatmul.bf16.gmra.mxu0 %v4424
        %v4771 = vpop.f32.mrf.mxu0
        %v4772 = vadd.f32 %v4498, %v4771
        %v4773 = vpop.f32.mrf.mxu0
        %v4774 = vadd.f32 %v4498, %v4773
        %4775 = vmatmul.bf16.gmra.mxu0 %v4428
        %v4776 = vpop.f32.mrf.mxu0
        %v4777 = vadd.f32 %v4498, %v4776
        %v4778 = vpop.f32.mrf.mxu0
        %v4779 = vadd.f32 %v4498, %v4778
        %4780 = vdwg.mxu0
        %4781 = vmatpush.bf16.msra.mxu0 %v4643
        %4782 = vmatpush.bf16.msra.mxu0 %v4642
        %4783 = vmatpush.bf16.msra.mxu0 %v4641
        %4784 = vmatpush.bf16.msra.mxu0 %v4640
        %4785 = vmatpush.bf16.msra.mxu0 %v4639
        %4786 = vmatpush.bf16.msra.mxu0 %v4638
        %4787 = vmatpush.bf16.msra.mxu0 %v4637
        %4788 = vmatpush.bf16.msra.mxu0 %v4636
        %4789 = vmatmul.bf16.gmra.mxu0 %v4369
        %v4790 = vpop.f32.mrf.mxu0
        %v4791 = vadd.f32 %v4702, %v4790
        %v4792 = vpop.f32.mrf.mxu0
        %v4793 = vadd.f32 %v4704, %v4792
        %4794 = vmatmul.bf16.gmra.mxu0 %v4373
        %v4795 = vpop.f32.mrf.mxu0
        %v4796 = vadd.f32 %v4707, %v4795
        %v4797 = vpop.f32.mrf.mxu0
        %v4798 = vadd.f32 %v4709, %v4797
        %4799 = vmatmul.bf16.gmra.mxu0 %v4377
        %v4800 = vpop.f32.mrf.mxu0
        %v4801 = vadd.f32 %v4712, %v4800
        %v4802 = vpop.f32.mrf.mxu0
        %v4803 = vadd.f32 %v4714, %v4802
        %4804 = vmatmul.bf16.gmra.mxu0 %v4381
        %v4805 = vpop.f32.mrf.mxu0
        %v4806 = vadd.f32 %v4717, %v4805
        %v4807 = vpop.f32.mrf.mxu0
        %v4808 = vadd.f32 %v4719, %v4807
        %4809 = vmatmul.bf16.gmra.mxu0 %v4385
        %v4810 = vpop.f32.mrf.mxu0
        %v4811 = vadd.f32 %v4722, %v4810
        %v4812 = vpop.f32.mrf.mxu0
        %v4813 = vadd.f32 %v4724, %v4812
        %4814 = vmatmul.bf16.gmra.mxu0 %v4389
        %v4815 = vpop.f32.mrf.mxu0
        %v4816 = vadd.f32 %v4727, %v4815
        %v4817 = vpop.f32.mrf.mxu0
        %v4818 = vadd.f32 %v4729, %v4817
        %4819 = vmatmul.bf16.gmra.mxu0 %v4393
        %v4820 = vpop.f32.mrf.mxu0
        %v4821 = vadd.f32 %v4732, %v4820
        %v4822 = vpop.f32.mrf.mxu0
        %v4823 = vadd.f32 %v4734, %v4822
        %4824 = vmatmul.bf16.gmra.mxu0 %v4397
        %v4825 = vpop.f32.mrf.mxu0
        %v4826 = vadd.f32 %v4737, %v4825
        %v4827 = vpop.f32.mrf.mxu0
        %v4828 = vadd.f32 %v4739, %v4827
        %4829 = vmatmul.bf16.gmra.mxu0 %v4401
        %v4830 = vpop.f32.mrf.mxu0
        %v4831 = vadd.f32 %v4742, %v4830
        %v4832 = vpop.f32.mrf.mxu0
        %v4833 = vadd.f32 %v4744, %v4832
        %4834 = vmatmul.bf16.gmra.mxu0 %v4405
        %v4835 = vpop.f32.mrf.mxu0
        %v4836 = vadd.f32 %v4747, %v4835
        %v4837 = vpop.f32.mrf.mxu0
        %v4838 = vadd.f32 %v4749, %v4837
        %4839 = vmatmul.bf16.gmra.mxu0 %v4409
        %v4840 = vpop.f32.mrf.mxu0
        %v4841 = vadd.f32 %v4752, %v4840
        %v4842 = vpop.f32.mrf.mxu0
        %v4843 = vadd.f32 %v4754, %v4842
        %4844 = vmatmul.bf16.gmra.mxu0 %v4413
        %v4845 = vpop.f32.mrf.mxu0
        %v4846 = vadd.f32 %v4757, %v4845
        %v4847 = vpop.f32.mrf.mxu0
        %v4848 = vadd.f32 %v4759, %v4847
        %4849 = vmatmul.bf16.gmra.mxu0 %v4417
        %v4850 = vpop.f32.mrf.mxu0
        %v4851 = vadd.f32 %v4762, %v4850
        %v4852 = vpop.f32.mrf.mxu0
        %v4853 = vadd.f32 %v4764, %v4852
        %4854 = vmatmul.bf16.gmra.mxu0 %v4421
        %v4855 = vpop.f32.mrf.mxu0
        %v4856 = vadd.f32 %v4767, %v4855
        %v4857 = vpop.f32.mrf.mxu0
        %v4858 = vadd.f32 %v4769, %v4857
        %4859 = vmatmul.bf16.gmra.mxu0 %v4425
        %v4860 = vpop.f32.mrf.mxu0
        %v4861 = vadd.f32 %v4772, %v4860
        %v4862 = vpop.f32.mrf.mxu0
        %v4863 = vadd.f32 %v4774, %v4862
        %4864 = vmatmul.bf16.gmra.mxu0 %v4429
        %v4865 = vpop.f32.mrf.mxu0
        %v4866 = vadd.f32 %v4777, %v4865
        %v4867 = vpop.f32.mrf.mxu0
        %v4868 = vadd.f32 %v4779, %v4867
        %4869 = vdwg.mxu0
        %4870 = vmatpush.bf16.msra.mxu0 %v4651
        %4871 = vmatpush.bf16.msra.mxu0 %v4650
        %4872 = vmatpush.bf16.msra.mxu0 %v4649
        %4873 = vmatpush.bf16.msra.mxu0 %v4648
        %4874 = vmatpush.bf16.msra.mxu0 %v4647
        %4875 = vmatpush.bf16.msra.mxu0 %v4646
        %4876 = vmatpush.bf16.msra.mxu0 %v4645
        %4877 = vmatpush.bf16.msra.mxu0 %v4644
        %4878 = vmatmul.bf16.gmra.mxu0 %v4370
        %v4879 = vpop.f32.mrf.mxu0
        %v4880 = vadd.f32 %v4791, %v4879
        %v4881 = vpop.f32.mrf.mxu0
        %v4882 = vadd.f32 %v4793, %v4881
        %4883 = vmatmul.bf16.gmra.mxu0 %v4374
        %v4884 = vpop.f32.mrf.mxu0
        %v4885 = vadd.f32 %v4796, %v4884
        %v4886 = vpop.f32.mrf.mxu0
        %v4887 = vadd.f32 %v4798, %v4886
        %4888 = vmatmul.bf16.gmra.mxu0 %v4378
        %v4889 = vpop.f32.mrf.mxu0
        %v4890 = vadd.f32 %v4801, %v4889
        %v4891 = vpop.f32.mrf.mxu0
        %v4892 = vadd.f32 %v4803, %v4891
        %4893 = vmatmul.bf16.gmra.mxu0 %v4382
        %v4894 = vpop.f32.mrf.mxu0
        %v4895 = vadd.f32 %v4806, %v4894
        %v4896 = vpop.f32.mrf.mxu0
        %v4897 = vadd.f32 %v4808, %v4896
        %4898 = vmatmul.bf16.gmra.mxu0 %v4386
        %v4899 = vpop.f32.mrf.mxu0
        %v4900 = vadd.f32 %v4811, %v4899
        %v4901 = vpop.f32.mrf.mxu0
        %v4902 = vadd.f32 %v4813, %v4901
        %4903 = vmatmul.bf16.gmra.mxu0 %v4390
        %v4904 = vpop.f32.mrf.mxu0
        %v4905 = vadd.f32 %v4816, %v4904
        %v4906 = vpop.f32.mrf.mxu0
        %v4907 = vadd.f32 %v4818, %v4906
        %4908 = vmatmul.bf16.gmra.mxu0 %v4394
        %v4909 = vpop.f32.mrf.mxu0
        %v4910 = vadd.f32 %v4821, %v4909
        %v4911 = vpop.f32.mrf.mxu0
        %v4912 = vadd.f32 %v4823, %v4911
        %4913 = vmatmul.bf16.gmra.mxu0 %v4398
        %v4914 = vpop.f32.mrf.mxu0
        %v4915 = vadd.f32 %v4826, %v4914
        %v4916 = vpop.f32.mrf.mxu0
        %v4917 = vadd.f32 %v4828, %v4916
        %4918 = vmatmul.bf16.gmra.mxu0 %v4402
        %v4919 = vpop.f32.mrf.mxu0
        %v4920 = vadd.f32 %v4831, %v4919
        %v4921 = vpop.f32.mrf.mxu0
        %v4922 = vadd.f32 %v4833, %v4921
        %4923 = vmatmul.bf16.gmra.mxu0 %v4406
        %v4924 = vpop.f32.mrf.mxu0
        %v4925 = vadd.f32 %v4836, %v4924
        %v4926 = vpop.f32.mrf.mxu0
        %v4927 = vadd.f32 %v4838, %v4926
        %4928 = vmatmul.bf16.gmra.mxu0 %v4410
        %v4929 = vpop.f32.mrf.mxu0
        %v4930 = vadd.f32 %v4841, %v4929
        %v4931 = vpop.f32.mrf.mxu0
        %v4932 = vadd.f32 %v4843, %v4931
        %4933 = vmatmul.bf16.gmra.mxu0 %v4414
        %v4934 = vpop.f32.mrf.mxu0
        %v4935 = vadd.f32 %v4846, %v4934
        %v4936 = vpop.f32.mrf.mxu0
        %v4937 = vadd.f32 %v4848, %v4936
        %4938 = vmatmul.bf16.gmra.mxu0 %v4418
        %v4939 = vpop.f32.mrf.mxu0
        %v4940 = vadd.f32 %v4851, %v4939
        %v4941 = vpop.f32.mrf.mxu0
        %v4942 = vadd.f32 %v4853, %v4941
        %4943 = vmatmul.bf16.gmra.mxu0 %v4422
        %v4944 = vpop.f32.mrf.mxu0
        %v4945 = vadd.f32 %v4856, %v4944
        %v4946 = vpop.f32.mrf.mxu0
        %v4947 = vadd.f32 %v4858, %v4946
        %4948 = vmatmul.bf16.gmra.mxu0 %v4426
        %v4949 = vpop.f32.mrf.mxu0
        %v4950 = vadd.f32 %v4861, %v4949
        %v4951 = vpop.f32.mrf.mxu0
        %v4952 = vadd.f32 %v4863, %v4951
        %4953 = vmatmul.bf16.gmra.mxu0 %v4430
        %v4954 = vpop.f32.mrf.mxu0
        %v4955 = vadd.f32 %v4866, %v4954
        %v4956 = vpop.f32.mrf.mxu0
        %v4957 = vadd.f32 %v4868, %v4956
        %4958 = vdwg.mxu0
        %4959 = vmatpush.bf16.msra.mxu0 %v4659
        %4960 = vmatpush.bf16.msra.mxu0 %v4658
        %4961 = vmatpush.bf16.msra.mxu0 %v4657
        %4962 = vmatpush.bf16.msra.mxu0 %v4656
        %4963 = vmatpush.bf16.msra.mxu0 %v4655
        %4964 = vmatpush.bf16.msra.mxu0 %v4654
        %4965 = vmatpush.bf16.msra.mxu0 %v4653
        %4966 = vmatpush.bf16.msra.mxu0 %v4652
        %4967 = vmatmul.bf16.gmra.mxu0 %v4371
        %v4968 = vpop.f32.mrf.mxu0
        %v4969 = vadd.f32 %v4880, %v4968
        %v4970 = vpop.f32.mrf.mxu0
        %v4971 = vadd.f32 %v4882, %v4970
        %4972 = vmatmul.bf16.gmra.mxu0 %v4375
        %v4973 = vpop.f32.mrf.mxu0
        %v4974 = vadd.f32 %v4885, %v4973
        %v4975 = vpop.f32.mrf.mxu0
        %v4976 = vadd.f32 %v4887, %v4975
        %4977 = vmatmul.bf16.gmra.mxu0 %v4379
        %v4978 = vpop.f32.mrf.mxu0
        %v4979 = vadd.f32 %v4890, %v4978
        %v4980 = vpop.f32.mrf.mxu0
        %v4981 = vadd.f32 %v4892, %v4980
        %4982 = vmatmul.bf16.gmra.mxu0 %v4383
        %v4983 = vpop.f32.mrf.mxu0
        %v4984 = vadd.f32 %v4895, %v4983
        %v4985 = vpop.f32.mrf.mxu0
        %v4986 = vadd.f32 %v4897, %v4985
        %4987 = vmatmul.bf16.gmra.mxu0 %v4387
        %v4988 = vpop.f32.mrf.mxu0
        %v4989 = vadd.f32 %v4900, %v4988
        %v4990 = vpop.f32.mrf.mxu0
        %v4991 = vadd.f32 %v4902, %v4990
        %4992 = vmatmul.bf16.gmra.mxu0 %v4391
        %v4993 = vpop.f32.mrf.mxu0
        %v4994 = vadd.f32 %v4905, %v4993
        %v4995 = vpop.f32.mrf.mxu0
        %v4996 = vadd.f32 %v4907, %v4995
        %4997 = vmatmul.bf16.gmra.mxu0 %v4395
        %v4998 = vpop.f32.mrf.mxu0
        %v4999 = vadd.f32 %v4910, %v4998
        %v5000 = vpop.f32.mrf.mxu0
        %v5001 = vadd.f32 %v4912, %v5000
        %5002 = vmatmul.bf16.gmra.mxu0 %v4399
        %v5003 = vpop.f32.mrf.mxu0
        %v5004 = vadd.f32 %v4915, %v5003
        %v5005 = vpop.f32.mrf.mxu0
        %v5006 = vadd.f32 %v4917, %v5005
        %5007 = vmatmul.bf16.gmra.mxu0 %v4403
        %v5008 = vpop.f32.mrf.mxu0
        %v5009 = vadd.f32 %v4920, %v5008
        %v5010 = vpop.f32.mrf.mxu0
        %v5011 = vadd.f32 %v4922, %v5010
        %5012 = vmatmul.bf16.gmra.mxu0 %v4407
        %v5013 = vpop.f32.mrf.mxu0
        %v5014 = vadd.f32 %v4925, %v5013
        %v5015 = vpop.f32.mrf.mxu0
        %v5016 = vadd.f32 %v4927, %v5015
        %5017 = vmatmul.bf16.gmra.mxu0 %v4411
        %v5018 = vpop.f32.mrf.mxu0
        %v5019 = vadd.f32 %v4930, %v5018
        %v5020 = vpop.f32.mrf.mxu0
        %v5021 = vadd.f32 %v4932, %v5020
        %5022 = vmatmul.bf16.gmra.mxu0 %v4415
        %v5023 = vpop.f32.mrf.mxu0
        %v5024 = vadd.f32 %v4935, %v5023
        %v5025 = vpop.f32.mrf.mxu0
        %v5026 = vadd.f32 %v4937, %v5025
        %5027 = vmatmul.bf16.gmra.mxu0 %v4419
        %v5028 = vpop.f32.mrf.mxu0
        %v5029 = vadd.f32 %v4940, %v5028
        %v5030 = vpop.f32.mrf.mxu0
        %v5031 = vadd.f32 %v4942, %v5030
        %5032 = vmatmul.bf16.gmra.mxu0 %v4423
        %v5033 = vpop.f32.mrf.mxu0
        %v5034 = vadd.f32 %v4945, %v5033
        %v5035 = vpop.f32.mrf.mxu0
        %v5036 = vadd.f32 %v4947, %v5035
        %5037 = vmatmul.bf16.gmra.mxu0 %v4427
        %v5038 = vpop.f32.mrf.mxu0
        %v5039 = vadd.f32 %v4950, %v5038
        %v5040 = vpop.f32.mrf.mxu0
        %v5041 = vadd.f32 %v4952, %v5040
        %5042 = vmatmul.bf16.gmra.mxu0 %v4431
        %v5043 = vpop.f32.mrf.mxu0
        %v5044 = vadd.f32 %v4955, %v5043
        %v5045 = vpop.f32.mrf.mxu0
        %v5046 = vadd.f32 %v4957, %v5045
        %5047 = vdwg.mxu0
        %v5048 = vmax.f32 %v4969, 0.0
        %v5049 = vmax.f32 %v4971, 0.0
        %v5050 = vmax.f32 %v4974, 0.0
        %v5051 = vmax.f32 %v4976, 0.0
        %v5052 = vmax.f32 %v4979, 0.0
        %v5053 = vmax.f32 %v4981, 0.0
        %v5054 = vmax.f32 %v4984, 0.0
        %v5055 = vmax.f32 %v4986, 0.0
        %v5056 = vmax.f32 %v4989, 0.0
        %v5057 = vmax.f32 %v4991, 0.0
        %v5058 = vmax.f32 %v4994, 0.0
        %v5059 = vmax.f32 %v4996, 0.0
        %v5060 = vmax.f32 %v4999, 0.0
        %v5061 = vmax.f32 %v5001, 0.0
        %v5062 = vmax.f32 %v5004, 0.0
        %v5063 = vmax.f32 %v5006, 0.0
        %v5064 = vmax.f32 %v5009, 0.0
        %v5065 = vmax.f32 %v5011, 0.0
        %v5066 = vmax.f32 %v5014, 0.0
        %v5067 = vmax.f32 %v5016, 0.0
        %v5068 = vmax.f32 %v5019, 0.0
        %v5069 = vmax.f32 %v5021, 0.0
        %v5070 = vmax.f32 %v5024, 0.0
        %v5071 = vmax.f32 %v5026, 0.0
        %v5072 = vmax.f32 %v5029, 0.0
        %v5073 = vmax.f32 %v5031, 0.0
        %v5074 = vmax.f32 %v5034, 0.0
        %v5075 = vmax.f32 %v5036, 0.0
        %v5076 = vmax.f32 %v5039, 0.0
        %v5077 = vmax.f32 %v5041, 0.0
        %v5078 = vmax.f32 %v5044, 0.0
        %v5079 = vmax.f32 %v5046, 0.0
        %v5080 = vpack.c.bf16 %v5049, %v5048
        %v5081 = vpack.c.bf16 %v5051, %v5050
        %v5082 = vpack.c.bf16 %v5053, %v5052
        %v5083 = vpack.c.bf16 %v5055, %v5054
        %v5084 = vpack.c.bf16 %v5057, %v5056
        %v5085 = vpack.c.bf16 %v5059, %v5058
        %v5086 = vpack.c.bf16 %v5061, %v5060
        %v5087 = vpack.c.bf16 %v5063, %v5062
        %v5088 = vpack.c.bf16 %v5065, %v5064
        %v5089 = vpack.c.bf16 %v5067, %v5066
        %v5090 = vpack.c.bf16 %v5069, %v5068
        %v5091 = vpack.c.bf16 %v5071, %v5070
        %v5092 = vpack.c.bf16 %v5073, %v5072
        %v5093 = vpack.c.bf16 %v5075, %v5074
        %v5094 = vpack.c.bf16 %v5077, %v5076
        %v5095 = vpack.c.bf16 %v5079, %v5078
        %v5096 = vld [vmem:[#allocation10] sm:$0xf]
        %v5097 = vld [vmem:[#allocation10 + $0x4] sm:$0xf]
        %v5098 = vld [vmem:[#allocation10 + $0x8] sm:$0xf]
        %v5099 = vld [vmem:[#allocation10 + $0xc] sm:$0xf]
        %v5100 = vld [vmem:[#allocation10 + $0x10] sm:$0xf]
        %v5101 = vld [vmem:[#allocation10 + $0x14] sm:$0xf]
        %v5102 = vld [vmem:[#allocation10 + $0x18] sm:$0xf]
        %v5103 = vld [vmem:[#allocation10 + $0x1c] sm:$0xf]
        %v5104 = vld [vmem:[#allocation10 + $0x20] sm:$0xf]
        %v5105 = vld [vmem:[#allocation10 + $0x24] sm:$0xf]
        %v5106 = vld [vmem:[#allocation10 + $0x28] sm:$0xf]
        %v5107 = vld [vmem:[#allocation10 + $0x2c] sm:$0xf]
        %v5108 = vld [vmem:[#allocation10 + $0x30] sm:$0xf]
        %v5109 = vld [vmem:[#allocation10 + $0x34] sm:$0xf]
        %v5110 = vld [vmem:[#allocation10 + $0x38] sm:$0xf]
        %v5111 = vld [vmem:[#allocation10 + $0x3c] sm:$0xf]
        %v5112 = vld [vmem:[%s6] sm:$0x1]
        %v5114 = vperm.slane %v5112, 0
        %v5132 = vunpack.c.l.b16 %v5096
        %v5133 = vunpack.c.l.b16 %v5097
        %v5134 = vunpack.c.l.b16 %v5098
        %v5135 = vunpack.c.l.b16 %v5099
        %v5136 = vunpack.c.l.b16 %v5100
        %v5137 = vunpack.c.l.b16 %v5101
        %v5138 = vunpack.c.l.b16 %v5102
        %v5139 = vunpack.c.l.b16 %v5103
        %v5140 = vunpack.c.l.b16 %v5104
        %v5141 = vunpack.c.l.b16 %v5105
        %v5142 = vunpack.c.l.b16 %v5106
        %v5143 = vunpack.c.l.b16 %v5107
        %v5144 = vunpack.c.l.b16 %v5108
        %v5145 = vunpack.c.l.b16 %v5109
        %v5146 = vunpack.c.l.b16 %v5110
        %v5147 = vunpack.c.l.b16 %v5111
        %v5148 = vpack.c.b16 %v5133, %v5132
        %v5149 = vpack.c.b16 %v5135, %v5134
        %v5150 = vpack.c.b16 %v5137, %v5136
        %v5151 = vpack.c.b16 %v5139, %v5138
        %v5152 = vpack.c.b16 %v5141, %v5140
        %v5153 = vpack.c.b16 %v5143, %v5142
        %v5154 = vpack.c.b16 %v5145, %v5144
        %v5155 = vpack.c.b16 %v5147, %v5146
        %5164 = vmatpush.bf16.msra.mxu0 %v5155
        %5165 = vmatpush.bf16.msra.mxu0 %v5154
        %5166 = vmatpush.bf16.msra.mxu0 %v5153
        %5167 = vmatpush.bf16.msra.mxu0 %v5152
        %5168 = vmatpush.bf16.msra.mxu0 %v5151
        %5169 = vmatpush.bf16.msra.mxu0 %v5150
        %5170 = vmatpush.bf16.msra.mxu0 %v5149
        %5171 = vmatpush.bf16.msra.mxu0 %v5148
        %5172 = vmatmul.bf16.gmra.mxu0 %v5080
        %v5173 = vpop.f32.mrf.mxu0
        %v5174 = vadd.f32 %v5114, %v5173
        %v5175 = vpop.f32.mrf.mxu0
        %v5176 = vadd.f32 %v5114, %v5175
        %5177 = vmatmul.bf16.gmra.mxu0 %v5081
        %v5178 = vpop.f32.mrf.mxu0
        %v5179 = vadd.f32 %v5114, %v5178
        %v5180 = vpop.f32.mrf.mxu0
        %v5181 = vadd.f32 %v5114, %v5180
        %5182 = vmatmul.bf16.gmra.mxu0 %v5082
        %v5183 = vpop.f32.mrf.mxu0
        %v5184 = vadd.f32 %v5114, %v5183
        %v5185 = vpop.f32.mrf.mxu0
        %v5186 = vadd.f32 %v5114, %v5185
        %5187 = vmatmul.bf16.gmra.mxu0 %v5083
        %v5188 = vpop.f32.mrf.mxu0
        %v5189 = vadd.f32 %v5114, %v5188
        %v5190 = vpop.f32.mrf.mxu0
        %v5191 = vadd.f32 %v5114, %v5190
        %5192 = vmatmul.bf16.gmra.mxu0 %v5084
        %v5193 = vpop.f32.mrf.mxu0
        %v5194 = vadd.f32 %v5114, %v5193
        %v5195 = vpop.f32.mrf.mxu0
        %v5196 = vadd.f32 %v5114, %v5195
        %5197 = vmatmul.bf16.gmra.mxu0 %v5085
        %v5198 = vpop.f32.mrf.mxu0
        %v5199 = vadd.f32 %v5114, %v5198
        %v5200 = vpop.f32.mrf.mxu0
        %v5201 = vadd.f32 %v5114, %v5200
        %5202 = vmatmul.bf16.gmra.mxu0 %v5086
        %v5203 = vpop.f32.mrf.mxu0
        %v5204 = vadd.f32 %v5114, %v5203
        %v5205 = vpop.f32.mrf.mxu0
        %v5206 = vadd.f32 %v5114, %v5205
        %5207 = vmatmul.bf16.gmra.mxu0 %v5087
        %v5208 = vpop.f32.mrf.mxu0
        %v5209 = vadd.f32 %v5114, %v5208
        %v5210 = vpop.f32.mrf.mxu0
        %v5211 = vadd.f32 %v5114, %v5210
        %5212 = vmatmul.bf16.gmra.mxu0 %v5088
        %v5213 = vpop.f32.mrf.mxu0
        %v5214 = vadd.f32 %v5114, %v5213
        %v5215 = vpop.f32.mrf.mxu0
        %v5216 = vadd.f32 %v5114, %v5215
        %5217 = vmatmul.bf16.gmra.mxu0 %v5089
        %v5218 = vpop.f32.mrf.mxu0
        %v5219 = vadd.f32 %v5114, %v5218
        %v5220 = vpop.f32.mrf.mxu0
        %v5221 = vadd.f32 %v5114, %v5220
        %5222 = vmatmul.bf16.gmra.mxu0 %v5090
        %v5223 = vpop.f32.mrf.mxu0
        %v5224 = vadd.f32 %v5114, %v5223
        %v5225 = vpop.f32.mrf.mxu0
        %v5226 = vadd.f32 %v5114, %v5225
        %5227 = vmatmul.bf16.gmra.mxu0 %v5091
        %v5228 = vpop.f32.mrf.mxu0
        %v5229 = vadd.f32 %v5114, %v5228
        %v5230 = vpop.f32.mrf.mxu0
        %v5231 = vadd.f32 %v5114, %v5230
        %5232 = vmatmul.bf16.gmra.mxu0 %v5092
        %v5233 = vpop.f32.mrf.mxu0
        %v5234 = vadd.f32 %v5114, %v5233
        %v5235 = vpop.f32.mrf.mxu0
        %v5236 = vadd.f32 %v5114, %v5235
        %5237 = vmatmul.bf16.gmra.mxu0 %v5093
        %v5238 = vpop.f32.mrf.mxu0
        %v5239 = vadd.f32 %v5114, %v5238
        %v5240 = vpop.f32.mrf.mxu0
        %v5241 = vadd.f32 %v5114, %v5240
        %5242 = vmatmul.bf16.gmra.mxu0 %v5094
        %v5243 = vpop.f32.mrf.mxu0
        %v5244 = vadd.f32 %v5114, %v5243
        %v5245 = vpop.f32.mrf.mxu0
        %v5246 = vadd.f32 %v5114, %v5245
        %5247 = vmatmul.bf16.gmra.mxu0 %v5095
        %v5248 = vpop.f32.mrf.mxu0
        %v5249 = vadd.f32 %v5114, %v5248
        %v5250 = vpop.f32.mrf.mxu0
        %v5251 = vadd.f32 %v5114, %v5250
        %5252 = vdwg.mxu0
        %5253 = vst [vmem:[%s363] sm:$0xff] %v5174
        %5254 = vst [vmem:[%s363 + $0x8] sm:$0xff] %v5176
        %5255 = vst [vmem:[%s363 + $0x10] sm:$0xff] %v5179
        %5256 = vst [vmem:[%s363 + $0x18] sm:$0xff] %v5181
        %5257 = vst [vmem:[%s363 + $0x20] sm:$0xff] %v5184
        %5258 = vst [vmem:[%s363 + $0x28] sm:$0xff] %v5186
        %5259 = vst [vmem:[%s363 + $0x30] sm:$0xff] %v5189
        %5260 = vst [vmem:[%s363 + $0x38] sm:$0xff] %v5191
        %5261 = vst [vmem:[%s363 + $0x40] sm:$0xff] %v5194
        %5262 = vst [vmem:[%s363 + $0x48] sm:$0xff] %v5196
        %5263 = vst [vmem:[%s363 + $0x50] sm:$0xff] %v5199
        %5264 = vst [vmem:[%s363 + $0x58] sm:$0xff] %v5201
        %5265 = vst [vmem:[%s363 + $0x60] sm:$0xff] %v5204
        %5266 = vst [vmem:[%s363 + $0x68] sm:$0xff] %v5206
        %5267 = vst [vmem:[%s363 + $0x70] sm:$0xff] %v5209
        %5268 = vst [vmem:[%s363 + $0x78] sm:$0xff] %v5211
        %5269 = vst [vmem:[%s363 + $0x80] sm:$0xff] %v5214
        %5270 = vst [vmem:[%s363 + $0x88] sm:$0xff] %v5216
        %5271 = vst [vmem:[%s363 + $0x90] sm:$0xff] %v5219
        %5272 = vst [vmem:[%s363 + $0x98] sm:$0xff] %v5221
        %5273 = vst [vmem:[%s363 + $0xa0] sm:$0xff] %v5224
        %5274 = vst [vmem:[%s363 + $0xa8] sm:$0xff] %v5226
        %5275 = vst [vmem:[%s363 + $0xb0] sm:$0xff] %v5229
        %5276 = vst [vmem:[%s363 + $0xb8] sm:$0xff] %v5231
        %5277 = vst [vmem:[%s363 + $0xc0] sm:$0xff] %v5234
        %5278 = vst [vmem:[%s363 + $0xc8] sm:$0xff] %v5236
        %5279 = vst [vmem:[%s363 + $0xd0] sm:$0xff] %v5239
        %5280 = vst [vmem:[%s363 + $0xd8] sm:$0xff] %v5241
        %5281 = vst [vmem:[%s363 + $0xe0] sm:$0xff] %v5244
        %5282 = vst [vmem:[%s363 + $0xe8] sm:$0xff] %v5246
        %5283 = vst [vmem:[%s363 + $0xf0] sm:$0xff] %v5249
        %5284 = vst [vmem:[%s363 + $0xf8] sm:$0xff] %v5251
        %s5285 = sand.u32 %s186, 1
        %s5286 = scalar_lea.sflag [#allocation4], %s5285
        %s5287 = sand.u32 %s186, 1
        %s5288 = smul.addr %s5287, 256
        %s5289 = scalar_lea.vmem [#allocation11], %s5288
        // Predicated region
        $region69: #{tpu_custom_call.1} parent=47 // pred_check
          %p5290 = pneg %p196
        $region70: #{tpu_custom_call.1} parent=47 // pred_check_branch
          %5292 = sbr.rel (%p5290) target = $region72
        $region71: #{tpu_custom_call.1} parent=47 // pred_region
          %s5293 = smul.u32 32, %s26
          %5295 = vsyncadd %s5286, 0
          %s5296 = smul.addr %s5293, 8
          %s5297 = scalar_lea.hbm %s7, %s5296
          %s5298 = sshll.u32 %s5289, 4
          %s5299 = int_to_ptr.vmem [resolvable:$true] %s5298
          %s5300 = sshll.u32 %s5297, 4
          %s5301 = int_to_ptr.hbm [resolvable:$true] %s5300
          %5306 = dma.vmem_to_hbm [thread:$0]  %s5299, 4096, %s5301, %s5286, 128, 128, 8
        $region72: #{tpu_custom_call.1} parent=47 // pred_fallthru
          _
      $region48: #{tpu_custom_call.1} parent=5 // pred_fallthru
        _
      %p5307 = scmp.le.s32.totalorder 2, %s21
      // Predicated region
      $region73: #{tpu_custom_call.1} parent=5 // pred_check
        %p5308 = pneg %p5307
      $region74: #{tpu_custom_call.1} parent=5 // pred_check_branch
        %5310 = sbr.rel (%p5308) target = $region76
      $region75: #{tpu_custom_call.1} parent=5 // pred_region
        %s5311 = ssub.s32 %s21, 2
        // Predicated region
        $region77: #{tpu_custom_call.1} parent=75 // pred_check
          %p5312 = pneg %p202
        $region78: #{tpu_custom_call.1} parent=75 // pred_check_branch
          %5314 = sbr.rel (%p5312) target = $region80
        $region79: #{tpu_custom_call.1} parent=75 // pred_region
          %s5315 = sand.u32 %s187, 1
          %s5316 = scalar_lea.sflag [#allocation4], %s5315
          %s5317 = sand.u32 %s187, 1
          %s5318 = smul.addr %s5317, 256
          %s5319 = scalar_lea.vmem [#allocation11], %s5318
          %5321 = dma.done %s5316, 4096
        $region80: #{tpu_custom_call.1} parent=75 // pred_fallthru
          _
      $region76: #{tpu_custom_call.1} parent=5 // pred_fallthru
        _
    $region6: #{tpu_custom_call.1} parent=1 // loop_footer
      %s25 = sadd.s32 1, %s21
    $region7: #{tpu_custom_call.1} parent=1 // loop_footer_branch
      %20 = sbr.rel target = $region3
    $region8: #{tpu_custom_call.1} parent=1 // loop_exit
      _
    %5322 = vsyncpa [#allocation3], 1
    %s5323 = scalar_lea.sflag [#allocation3], 1
    %5324 = vsyncpa %s5323, 1
    %5325 = vsyncpa [#allocation6], 1
    %5326 = vsyncpa [#allocation9], 1
    %5327 = vsyncpa [#allocation4], 1
    %s5328 = scalar_lea.sflag [#allocation4], 1
    %5329 = vsyncpa %s5328, 1

</llo_original>
